<compile_context>
chip_gen: v5e
topology: v5e:2x2
jax: 0.10.0
libtpu: 0.0.40
codegen_flags: <defaults>
</compile_context>

<pallas_src>
import functools

import jax
import jax.numpy as jnp
from jax.experimental import pallas as pl
from jax.experimental.pallas import tpu as pltpu


# ----------------------------------------------------------------------------
# In-kernel helpers
# ----------------------------------------------------------------------------
def _rotate_lanes(x, shift):
    """result[:, p] = x[:, (p + shift) % n]  -- cyclic lane rotation (XLU)."""
    n = x.shape[-1]
    s = shift % n
    if s == 0:
        return x
    return jnp.concatenate([x[:, s:], x[:, :s]], axis=-1)


def _conv3x3_taps(x, w_ref, masks_ref, w_img):
    """3x3 conv (padding=1) on a flat (C, H*W) image via 9 per-tap K=C dots.

    x:        (C, H*W) row-major flat image (pixels on lanes)
    w_ref:    (9, Cout, C) per-tap weights, k = (dh+1)*3 + (dw+1)
    masks_ref:(9, 1, H*W) 0/1 boundary masks (precomputed host-side)
    returns   (Cout, H*W) f32
    """
    acc = None
    k = 0
    for dh in (-1, 0, 1):
        for dw in (-1, 0, 1):
            d = dh * w_img + dw
            sh = _rotate_lanes(x, d)
            if d != 0:
                sh = sh * masks_ref[k]        # zero out-of-image neighbours
            contrib = jnp.dot(w_ref[k], sh, preferred_element_type=jnp.float32)
            acc = contrib if acc is None else acc + contrib
            k += 1
    return acc


# ----------------------------------------------------------------------------
# Fully fused Up.forward kernel (one grid step == one batch element).
# ----------------------------------------------------------------------------
def _up_fused_kernel(x1_ref, x2_ref, wup_ref, scat_ref, ub_ref, m_ref,
                     w1a_ref, w1b_ref, b1_ref, w2_ref, b2_ref,
                     o_ref, *, w_img, c_mid):
    x1f = x1_ref[0].astype(jnp.float32)       # (Cin,  H*W)   pixels on lanes
    x2f = x2_ref[0].astype(jnp.float32)       # (C2,   H2*W2)

    # ---- ConvTranspose2d(k=2, s=2): stride == kernel -> one dot whose rows
    #      are the 4 (a, b) taps (ordered (a, b, co)).
    t = jnp.dot(wup_ref[...], x1f, preferred_element_type=jnp.float32)  # (4*Cmid, H*W)

    # ---- place the taps (+ the F.pad offset) into the flat (Cmid, H2*W2) map
    #      with four one-hot scatter matmuls; ub_ref is the bias plane that is
    #      already zero inside the F.pad band.
    up = ub_ref[...]                                                    # (Cmid, H2*W2)
    for k in range(4):
        up = up + jnp.dot(t[k * c_mid:(k + 1) * c_mid, :], scat_ref[k],
                          preferred_element_type=jnp.float32)

    # ---- conv1: split-K over [x2 | x1_up] (concat never materialized),
    #      eval-BN scale folded into the weights, shift in b1.
    acc1 = (_conv3x3_taps(x2f, w1a_ref, m_ref, w_img) +
            _conv3x3_taps(up, w1b_ref, m_ref, w_img))
    y1 = jnp.maximum(acc1 + b1_ref[...], 0.0)                           # (Cout, H2*W2)

    # ---- conv2 + folded BN + ReLU.
    y2 = jnp.maximum(_conv3x3_taps(y1, w2_ref, m_ref, w_img) + b2_ref[...], 0.0)

    # lane-dense store: last dim of the output block is the full flat image.
    o_ref[...] = y2[None].astype(o_ref.dtype)


# ----------------------------------------------------------------------------
# Parameter construction / BN folding helpers
# ----------------------------------------------------------------------------
def make_params(in_channels, out_channels, key):
    ks = jax.random.split(key, 12)
    cm = in_channels // 2                       # ConvTranspose out channels
    cc = cm + out_channels                      # channels after concat
    p = {}
    p["up_w"] = 0.1 * jax.random.normal(ks[0], (in_channels, cm, 2, 2), jnp.float32)
    p["up_b"] = 0.1 * jax.random.normal(ks[1], (cm,), jnp.float32)
    p["c1_w"] = 0.1 * jax.random.normal(ks[2], (out_channels, cc, 3, 3), jnp.float32)
    p["c1_b"] = 0.1 * jax.random.normal(ks[3], (out_channels,), jnp.float32)
    p["bn1_g"] = 1.0 + 0.1 * jax.random.normal(ks[4], (out_channels,), jnp.float32)
    p["bn1_b"] = 0.1 * jax.random.normal(ks[5], (out_channels,), jnp.float32)
    p["bn1_m"] = 0.1 * jax.random.normal(ks[6], (out_channels,), jnp.float32)
    p["bn1_v"] = 1.0 + 0.1 * jnp.abs(jax.random.normal(ks[7], (out_channels,), jnp.float32))
    p["c2_w"] = 0.1 * jax.random.normal(ks[8], (out_channels, out_channels, 3, 3), jnp.float32)
    p["c2_b"] = 0.1 * jax.random.normal(ks[9], (out_channels,), jnp.float32)
    p["bn2_g"] = 1.0 + 0.1 * jax.random.normal(ks[10], (out_channels,), jnp.float32)
    p["bn2_b"] = 0.1 * jax.random.normal(ks[11], (out_channels,), jnp.float32)
    p["bn2_m"] = jnp.zeros((out_channels,), jnp.float32)
    p["bn2_v"] = jnp.ones((out_channels,), jnp.float32)
    return p


def fold_bn(conv_bias, gamma, beta, mean, var, eps=1e-5):
    scale = gamma / jnp.sqrt(var + eps)
    shift = (conv_bias - mean) * scale + beta
    return scale, shift


def _conv3x3_taps_weights(w_oihw, scale):
    # (Cout, Cin, 3, 3) -> (9, Cout, Cin), row k = kh*3 + kw; BN scale folded in.
    cout, cin = w_oihw.shape[0], w_oihw.shape[1]
    w = jnp.transpose(w_oihw, (2, 3, 0, 1)).reshape(9, cout, cin)
    return (w * scale.reshape(1, cout, 1)).astype(jnp.float32)


# ----------------------------------------------------------------------------
# Up.forward — one fused pallas_call (NCHW in, NCHW out; no transposes)
# ----------------------------------------------------------------------------
def up_forward(x1_nchw, x2_nchw, params):
    N, Cin, H, W = x1_nchw.shape
    _, C2, H2, W2 = x2_nchw.shape
    Cmid = params["up_w"].shape[1]
    Cout = params["c1_w"].shape[0]
    HW = H * W
    NP = H2 * W2
    f32 = jnp.float32

    diffY = H2 - 2 * H
    diffX = W2 - 2 * W
    if diffY < 0 or diffX < 0:
        # TODO(synk): negative F.pad (crop) semantics not implemented.
        raise NotImplementedError("upsampled x1 larger than x2 is unsupported")
    py0, px0 = diffY // 2, diffX // 2

    # ConvTranspose2d weight (Cin, Cmid, 2, 2) -> (4*Cmid, Cin), rows = (a, b, co)
    wup = jnp.transpose(params["up_w"], (2, 3, 1, 0)).reshape(4 * Cmid, Cin).astype(f32)

    # One-hot scatter matrices: tap (a, b) of input pixel (h, w) lands at flat
    # output pixel (2h + a + py0) * W2 + (2w + b + px0).
    hh = jnp.arange(H)
    ww = jnp.arange(W)
    scat = []
    for a in (0, 1):
        for b in (0, 1):
            q = ((2 * hh[:, None] + a + py0) * W2
                 + (2 * ww[None, :] + b + px0)).reshape(HW)
            scat.append(jax.nn.one_hot(q, NP, dtype=f32))
    scat = jnp.stack(scat, axis=0)                               # (4, HW, NP)

    # ConvTranspose bias plane: bias inside the upsampled region, 0 in F.pad band.
    yq = jnp.arange(NP) // W2
    xq = jnp.arange(NP) % W2
    inside = ((yq >= py0) & (yq < py0 + 2 * H) &
              (xq >= px0) & (xq < px0 + 2 * W)).astype(f32)
    ubias = params["up_b"].astype(f32).reshape(Cmid, 1) * inside.reshape(1, NP)

    # 3x3-conv boundary masks for the 9 (dh, dw) taps (shared by both convs).
    masks = []
    for dh in (-1, 0, 1):
        for dw in (-1, 0, 1):
            m = ((yq + dh >= 0) & (yq + dh < H2) &
                 (xq + dw >= 0) & (xq + dw < W2)).astype(f32)
            masks.append(m.reshape(1, NP))
    masks = jnp.stack(masks, axis=0)                             # (9, 1, NP)

    # Fold eval-mode BatchNorm: scale into the conv weights, shift into the bias.
    s1, sh1 = fold_bn(params["c1_b"], params["bn1_g"], params["bn1_b"],
                      params["bn1_m"], params["bn1_v"])
    s2, sh2 = fold_bn(params["c2_b"], params["bn2_g"], params["bn2_b"],
                      params["bn2_m"], params["bn2_v"])
    w1a = _conv3x3_taps_weights(params["c1_w"][:, :C2], s1)      # x2 part
    w1b = _conv3x3_taps_weights(params["c1_w"][:, C2:], s1)      # x1_up part
    w2 = _conv3x3_taps_weights(params["c2_w"], s2)
    b1 = sh1.reshape(Cout, 1).astype(f32)
    b2 = sh2.reshape(Cout, 1).astype(f32)

    # NCHW stays NCHW: collapsing H*W is a pure reshape, no transposes.
    x1_ld = x1_nchw.reshape(N, Cin, HW)
    x2_ld = x2_nchw.reshape(N, C2, NP)

    kernel = functools.partial(_up_fused_kernel, w_img=W2, c_mid=Cmid)

    out_flat = pl.pallas_call(
        kernel,
        out_shape=jax.ShapeDtypeStruct((N, Cout, NP), x2_nchw.dtype),
        grid=(N,),
        in_specs=[
            pl.BlockSpec((1, Cin, HW), lambda n: (n, 0, 0)),
            pl.BlockSpec((1, C2, NP), lambda n: (n, 0, 0)),
            pl.BlockSpec((4 * Cmid, Cin), lambda n: (0, 0)),          # resident
            pl.BlockSpec((4, HW, NP), lambda n: (0, 0, 0)),           # resident
            pl.BlockSpec((Cmid, NP), lambda n: (0, 0)),               # resident
            pl.BlockSpec((9, 1, NP), lambda n: (0, 0, 0)),            # resident
            pl.BlockSpec((9, Cout, C2), lambda n: (0, 0, 0)),         # resident
            pl.BlockSpec((9, Cout, Cmid), lambda n: (0, 0, 0)),       # resident
            pl.BlockSpec((Cout, 1), lambda n: (0, 0)),                # resident
            pl.BlockSpec((9, Cout, Cout), lambda n: (0, 0, 0)),       # resident
            pl.BlockSpec((Cout, 1), lambda n: (0, 0)),                # resident
        ],
        out_specs=pl.BlockSpec((1, Cout, NP), lambda n: (n, 0, 0)),
        compiler_params=pltpu.CompilerParams(
            dimension_semantics=("parallel",),
            vmem_limit_bytes=32 * 1024 * 1024),
    )(x1_ld, x2_ld, wup, scat, ubias, masks, w1a, w1b, b1, w2, b2)

    return out_flat.reshape(N, Cout, H2, W2)


# ----------------------------------------------------------------------------
# Pure-JAX (XLA) reference for numerical validation
# ----------------------------------------------------------------------------
def _conv3x3_ref(x_nhwc, w_oihw):
    n, hh, ww, _ = x_nhwc.shape
    xp = jnp.pad(x_nhwc, ((0, 0), (1, 1), (1, 1), (0, 0)))
    out = 0.0
    for kh in range(3):
        for kw in range(3):
            out = out + jnp.einsum('nhwc,oc->nhwo',
                                   xp[:, kh:kh + hh, kw:kw + ww, :],
                                   w_oihw[:, :, kh, kw])
    return out


def up_forward_reference(x1_nchw, x2_nchw, params, eps=1e-5):
    x1 = jnp.transpose(x1_nchw, (0, 2, 3, 1))
    x2 = jnp.transpose(x2_nchw, (0, 2, 3, 1))
    n, h, w, _ = x1.shape
    _, h2, w2, _ = x2.shape
    cmid = params["up_w"].shape[1]
    up = jnp.einsum('nhwi,ioab->nhawbo', x1, params["up_w"])
    up = up.reshape(n, 2 * h, 2 * w, cmid) + params["up_b"]
    dy, dx = h2 - 2 * h, w2 - 2 * w
    up = jnp.pad(up, ((0, 0), (dy // 2, dy - dy // 2), (dx // 2, dx - dx // 2), (0, 0)))
    x = jnp.concatenate([x2, up], axis=-1)
    x = _conv3x3_ref(x, params["c1_w"]) + params["c1_b"]
    x = (x - params["bn1_m"]) / jnp.sqrt(params["bn1_v"] + eps) * params["bn1_g"] + params["bn1_b"]
    x = jnp.maximum(x, 0.0)
    x = _conv3x3_ref(x, params["c2_w"]) + params["c2_b"]
    x = (x - params["bn2_m"]) / jnp.sqrt(params["bn2_v"] + eps) * params["bn2_g"] + params["bn2_b"]
    x = jnp.maximum(x, 0.0)
    return jnp.transpose(x, (0, 3, 1, 2))


if __name__ == "__main__":
    key = jax.random.PRNGKey(0)
    k_x1, k_x2, k_p = jax.random.split(key, 3)

    in_channels, out_channels = 8, 4
    N, H, W = 2, 8, 8                      # x1 is the coarse feature map
    x1 = jax.random.normal(k_x1, (N, in_channels, H, W), jnp.float32)
    x2 = jax.random.normal(k_x2, (N, out_channels, 2 * H, 2 * W), jnp.float32)

    params = make_params(in_channels, out_channels, k_p)

    out = jax.block_until_ready(up_forward(x1, x2, params))
    ref = jax.block_until_ready(up_forward_reference(x1, x2, params))

    assert out.shape == (N, out_channels, 2 * H, 2 * W), out.shape
    assert bool(jnp.all(jnp.isfinite(out)))
    assert bool(jnp.all(out >= 0.0))       # final op is ReLU
    max_err = float(jnp.max(jnp.abs(out - ref)))
    assert max_err < 1e-3, f"mismatch vs reference: {max_err}"

    print("KERNEL_OK")
</pallas_src>

<mosaic_0001>
module attributes {stable_mosaic.version = 11 : i64} {
  func.func @_up_fused_kernel(%arg0: i32, %arg1: memref<1x8x64xf32, #tpu.memory_space<vmem>>, %arg2: memref<1x4x256xf32, #tpu.memory_space<vmem>>, %arg3: memref<16x8xf32, #tpu.memory_space<vmem>>, %arg4: memref<4x64x256xf32, #tpu.memory_space<vmem>>, %arg5: memref<4x256xf32, #tpu.memory_space<vmem>>, %arg6: memref<9x1x256xf32, #tpu.memory_space<vmem>>, %arg7: memref<9x4x4xf32, #tpu.memory_space<vmem>>, %arg8: memref<9x4x4xf32, #tpu.memory_space<vmem>>, %arg9: memref<4x1xf32, #tpu.memory_space<vmem>>, %arg10: memref<9x4x4xf32, #tpu.memory_space<vmem>>, %arg11: memref<4x1xf32, #tpu.memory_space<vmem>>, %arg12: memref<1x4x256xf32, #tpu.memory_space<vmem>>) attributes {dimension_semantics = [#tpu.dimension_semantics<parallel>], iteration_bounds = array<i64: 2>, scalar_prefetch = 0 : i64, scratch_operands = 0 : i64, tpu.core_type = #tpu.core_type<tc>, window_params = [{transform_indices = @transform_0, window_bounds = array<i64: 1, 8, 64>}, {transform_indices = @transform_1, window_bounds = array<i64: 1, 4, 256>}, {pipeline_mode = #tpu.pipeline_mode<synchronous>, transform_indices = @transform_2, window_bounds = array<i64: 16, 8>}, {pipeline_mode = #tpu.pipeline_mode<synchronous>, transform_indices = @transform_3, window_bounds = array<i64: 4, 64, 256>}, {pipeline_mode = #tpu.pipeline_mode<synchronous>, transform_indices = @transform_4, window_bounds = array<i64: 4, 256>}, {pipeline_mode = #tpu.pipeline_mode<synchronous>, transform_indices = @transform_5, window_bounds = array<i64: 9, 1, 256>}, {pipeline_mode = #tpu.pipeline_mode<synchronous>, transform_indices = @transform_6, window_bounds = array<i64: 9, 4, 4>}, {pipeline_mode = #tpu.pipeline_mode<synchronous>, transform_indices = @transform_7, window_bounds = array<i64: 9, 4, 4>}, {pipeline_mode = #tpu.pipeline_mode<synchronous>, transform_indices = @transform_8, window_bounds = array<i64: 4, 1>}, {pipeline_mode = #tpu.pipeline_mode<synchronous>, transform_indices = @transform_9, window_bounds = array<i64: 9, 4, 4>}, {pipeline_mode = #tpu.pipeline_mode<synchronous>, transform_indices = @transform_10, window_bounds = array<i64: 4, 1>}, {transform_indices = @transform_11, window_bounds = array<i64: 1, 4, 256>}]} {
    %c0 = arith.constant 0 : index
    %c0_0 = arith.constant 0 : index
    %c0_1 = arith.constant 0 : index
    %0 = vector.load %arg1[%c0, %c0_0, %c0_1] : memref<1x8x64xf32, #tpu.memory_space<vmem>>, vector<1x8x64xf32>
    %1 = vector.shape_cast %0 : vector<1x8x64xf32> to vector<8x64xf32>
    %c0_2 = arith.constant 0 : index
    %c0_3 = arith.constant 0 : index
    %c0_4 = arith.constant 0 : index
    %2 = vector.load %arg2[%c0_2, %c0_3, %c0_4] : memref<1x4x256xf32, #tpu.memory_space<vmem>>, vector<1x4x256xf32>
    %3 = vector.shape_cast %2 : vector<1x4x256xf32> to vector<4x256xf32>
    %c0_5 = arith.constant 0 : index
    %c0_6 = arith.constant 0 : index
    %4 = vector.load %arg3[%c0_5, %c0_6] : memref<16x8xf32, #tpu.memory_space<vmem>>, vector<16x8xf32>
    %cst = arith.constant dense<0.000000e+00> : vector<16x64xf32>
    %5 = tpu.matmul %4, %1, %cst {dimension_numbers = #tpu.dot_dimension_numbers<[1], [0], [0], [1], [0, 0, 1, 1], [], []>} : vector<16x8xf32>, vector<8x64xf32>, vector<16x64xf32> -> vector<16x64xf32>
    %c0_7 = arith.constant 0 : index
    %c0_8 = arith.constant 0 : index
    %6 = vector.load %arg5[%c0_7, %c0_8] : memref<4x256xf32, #tpu.memory_space<vmem>>, vector<4x256xf32>
    %7 = vector.extract_strided_slice %5 {offsets = [0, 0], sizes = [4, 64], strides = [1, 1]} : vector<16x64xf32> to vector<4x64xf32>
    %c0_9 = arith.constant 0 : index
    %c0_10 = arith.constant 0 : index
    %c0_11 = arith.constant 0 : index
    %8 = vector.load %arg4[%c0_9, %c0_10, %c0_11] : memref<4x64x256xf32, #tpu.memory_space<vmem>>, vector<1x64x256xf32>
    %9 = vector.shape_cast %8 : vector<1x64x256xf32> to vector<64x256xf32>
    %cst_12 = arith.constant dense<0.000000e+00> : vector<4x256xf32>
    %10 = tpu.matmul %7, %9, %cst_12 {dimension_numbers = #tpu.dot_dimension_numbers<[1], [0], [0], [1], [0, 0, 1, 1], [], []>} : vector<4x64xf32>, vector<64x256xf32>, vector<4x256xf32> -> vector<4x256xf32>
    %11 = arith.addf %6, %10 : vector<4x256xf32>
    %12 = vector.extract_strided_slice %5 {offsets = [4, 0], sizes = [4, 64], strides = [1, 1]} : vector<16x64xf32> to vector<4x64xf32>
    %c1 = arith.constant 1 : index
    %c0_13 = arith.constant 0 : index
    %c0_14 = arith.constant 0 : index
    %13 = vector.load %arg4[%c1, %c0_13, %c0_14] : memref<4x64x256xf32, #tpu.memory_space<vmem>>, vector<1x64x256xf32>
    %14 = vector.shape_cast %13 : vector<1x64x256xf32> to vector<64x256xf32>
    %cst_15 = arith.constant dense<0.000000e+00> : vector<4x256xf32>
    %15 = tpu.matmul %12, %14, %cst_15 {dimension_numbers = #tpu.dot_dimension_numbers<[1], [0], [0], [1], [0, 0, 1, 1], [], []>} : vector<4x64xf32>, vector<64x256xf32>, vector<4x256xf32> -> vector<4x256xf32>
    %16 = arith.addf %11, %15 : vector<4x256xf32>
    %17 = vector.extract_strided_slice %5 {offsets = [8, 0], sizes = [4, 64], strides = [1, 1]} : vector<16x64xf32> to vector<4x64xf32>
    %c2 = arith.constant 2 : index
    %c0_16 = arith.constant 0 : index
    %c0_17 = arith.constant 0 : index
    %18 = vector.load %arg4[%c2, %c0_16, %c0_17] : memref<4x64x256xf32, #tpu.memory_space<vmem>>, vector<1x64x256xf32>
    %19 = vector.shape_cast %18 : vector<1x64x256xf32> to vector<64x256xf32>
    %cst_18 = arith.constant dense<0.000000e+00> : vector<4x256xf32>
    %20 = tpu.matmul %17, %19, %cst_18 {dimension_numbers = #tpu.dot_dimension_numbers<[1], [0], [0], [1], [0, 0, 1, 1], [], []>} : vector<4x64xf32>, vector<64x256xf32>, vector<4x256xf32> -> vector<4x256xf32>
    %21 = arith.addf %16, %20 : vector<4x256xf32>
    %22 = vector.extract_strided_slice %5 {offsets = [12, 0], sizes = [4, 64], strides = [1, 1]} : vector<16x64xf32> to vector<4x64xf32>
    %c3 = arith.constant 3 : index
    %c0_19 = arith.constant 0 : index
    %c0_20 = arith.constant 0 : index
    %23 = vector.load %arg4[%c3, %c0_19, %c0_20] : memref<4x64x256xf32, #tpu.memory_space<vmem>>, vector<1x64x256xf32>
    %24 = vector.shape_cast %23 : vector<1x64x256xf32> to vector<64x256xf32>
    %cst_21 = arith.constant dense<0.000000e+00> : vector<4x256xf32>
    %25 = tpu.matmul %22, %24, %cst_21 {dimension_numbers = #tpu.dot_dimension_numbers<[1], [0], [0], [1], [0, 0, 1, 1], [], []>} : vector<4x64xf32>, vector<64x256xf32>, vector<4x256xf32> -> vector<4x256xf32>
    %26 = arith.addf %21, %25 : vector<4x256xf32>
    %27 = vector.extract_strided_slice %3 {offsets = [0, 239], sizes = [4, 17], strides = [1, 1]} : vector<4x256xf32> to vector<4x17xf32>
    %28 = vector.extract_strided_slice %3 {offsets = [0, 0], sizes = [4, 239], strides = [1, 1]} : vector<4x256xf32> to vector<4x239xf32>
    %29 = tpu.concatenate %27, %28 in 1 : vector<4x17xf32>, vector<4x239xf32> -> vector<4x256xf32>
    %c0_22 = arith.constant 0 : index
    %c0_23 = arith.constant 0 : index
    %c0_24 = arith.constant 0 : index
    %30 = vector.load %arg6[%c0_22, %c0_23, %c0_24] : memref<9x1x256xf32, #tpu.memory_space<vmem>>, vector<1x1x256xf32>
    %31 = vector.shape_cast %30 : vector<1x1x256xf32> to vector<1x256xf32>
    %32 = vector.broadcast %31 : vector<1x256xf32> to vector<4x256xf32>
    %33 = arith.mulf %29, %32 : vector<4x256xf32>
    %c0_25 = arith.constant 0 : index
    %c0_26 = arith.constant 0 : index
    %c0_27 = arith.constant 0 : index
    %34 = vector.load %arg7[%c0_25, %c0_26, %c0_27] : memref<9x4x4xf32, #tpu.memory_space<vmem>>, vector<1x4x4xf32>
    %35 = vector.shape_cast %34 : vector<1x4x4xf32> to vector<4x4xf32>
    %cst_28 = arith.constant dense<0.000000e+00> : vector<4x256xf32>
    %36 = tpu.matmul %35, %33, %cst_28 {dimension_numbers = #tpu.dot_dimension_numbers<[1], [0], [0], [1], [0, 0, 1, 1], [], []>} : vector<4x4xf32>, vector<4x256xf32>, vector<4x256xf32> -> vector<4x256xf32>
    %37 = vector.extract_strided_slice %3 {offsets = [0, 240], sizes = [4, 16], strides = [1, 1]} : vector<4x256xf32> to vector<4x16xf32>
    %38 = vector.extract_strided_slice %3 {offsets = [0, 0], sizes = [4, 240], strides = [1, 1]} : vector<4x256xf32> to vector<4x240xf32>
    %39 = tpu.concatenate %37, %38 in 1 : vector<4x16xf32>, vector<4x240xf32> -> vector<4x256xf32>
    %c1_29 = arith.constant 1 : index
    %c0_30 = arith.constant 0 : index
    %c0_31 = arith.constant 0 : index
    %40 = vector.load %arg6[%c1_29, %c0_30, %c0_31] : memref<9x1x256xf32, #tpu.memory_space<vmem>>, vector<1x1x256xf32>
    %41 = vector.shape_cast %40 : vector<1x1x256xf32> to vector<1x256xf32>
    %42 = vector.broadcast %41 : vector<1x256xf32> to vector<4x256xf32>
    %43 = arith.mulf %39, %42 : vector<4x256xf32>
    %c1_32 = arith.constant 1 : index
    %c0_33 = arith.constant 0 : index
    %c0_34 = arith.constant 0 : index
    %44 = vector.load %arg7[%c1_32, %c0_33, %c0_34] : memref<9x4x4xf32, #tpu.memory_space<vmem>>, vector<1x4x4xf32>
    %45 = vector.shape_cast %44 : vector<1x4x4xf32> to vector<4x4xf32>
    %cst_35 = arith.constant dense<0.000000e+00> : vector<4x256xf32>
    %46 = tpu.matmul %45, %43, %cst_35 {dimension_numbers = #tpu.dot_dimension_numbers<[1], [0], [0], [1], [0, 0, 1, 1], [], []>} : vector<4x4xf32>, vector<4x256xf32>, vector<4x256xf32> -> vector<4x256xf32>
    %47 = arith.addf %36, %46 : vector<4x256xf32>
    %48 = vector.extract_strided_slice %3 {offsets = [0, 241], sizes = [4, 15], strides = [1, 1]} : vector<4x256xf32> to vector<4x15xf32>
    %49 = vector.extract_strided_slice %3 {offsets = [0, 0], sizes = [4, 241], strides = [1, 1]} : vector<4x256xf32> to vector<4x241xf32>
    %50 = tpu.concatenate %48, %49 in 1 : vector<4x15xf32>, vector<4x241xf32> -> vector<4x256xf32>
    %c2_36 = arith.constant 2 : index
    %c0_37 = arith.constant 0 : index
    %c0_38 = arith.constant 0 : index
    %51 = vector.load %arg6[%c2_36, %c0_37, %c0_38] : memref<9x1x256xf32, #tpu.memory_space<vmem>>, vector<1x1x256xf32>
    %52 = vector.shape_cast %51 : vector<1x1x256xf32> to vector<1x256xf32>
    %53 = vector.broadcast %52 : vector<1x256xf32> to vector<4x256xf32>
    %54 = arith.mulf %50, %53 : vector<4x256xf32>
    %c2_39 = arith.constant 2 : index
    %c0_40 = arith.constant 0 : index
    %c0_41 = arith.constant 0 : index
    %55 = vector.load %arg7[%c2_39, %c0_40, %c0_41] : memref<9x4x4xf32, #tpu.memory_space<vmem>>, vector<1x4x4xf32>
    %56 = vector.shape_cast %55 : vector<1x4x4xf32> to vector<4x4xf32>
    %cst_42 = arith.constant dense<0.000000e+00> : vector<4x256xf32>
    %57 = tpu.matmul %56, %54, %cst_42 {dimension_numbers = #tpu.dot_dimension_numbers<[1], [0], [0], [1], [0, 0, 1, 1], [], []>} : vector<4x4xf32>, vector<4x256xf32>, vector<4x256xf32> -> vector<4x256xf32>
    %58 = arith.addf %47, %57 : vector<4x256xf32>
    %59 = vector.extract_strided_slice %3 {offsets = [0, 255], sizes = [4, 1], strides = [1, 1]} : vector<4x256xf32> to vector<4x1xf32>
    %60 = vector.extract_strided_slice %3 {offsets = [0, 0], sizes = [4, 255], strides = [1, 1]} : vector<4x256xf32> to vector<4x255xf32>
    %61 = tpu.concatenate %59, %60 in 1 : vector<4x1xf32>, vector<4x255xf32> -> vector<4x256xf32>
    %c3_43 = arith.constant 3 : index
    %c0_44 = arith.constant 0 : index
    %c0_45 = arith.constant 0 : index
    %62 = vector.load %arg6[%c3_43, %c0_44, %c0_45] : memref<9x1x256xf32, #tpu.memory_space<vmem>>, vector<1x1x256xf32>
    %63 = vector.shape_cast %62 : vector<1x1x256xf32> to vector<1x256xf32>
    %64 = vector.broadcast %63 : vector<1x256xf32> to vector<4x256xf32>
    %65 = arith.mulf %61, %64 : vector<4x256xf32>
    %c3_46 = arith.constant 3 : index
    %c0_47 = arith.constant 0 : index
    %c0_48 = arith.constant 0 : index
    %66 = vector.load %arg7[%c3_46, %c0_47, %c0_48] : memref<9x4x4xf32, #tpu.memory_space<vmem>>, vector<1x4x4xf32>
    %67 = vector.shape_cast %66 : vector<1x4x4xf32> to vector<4x4xf32>
    %cst_49 = arith.constant dense<0.000000e+00> : vector<4x256xf32>
    %68 = tpu.matmul %67, %65, %cst_49 {dimension_numbers = #tpu.dot_dimension_numbers<[1], [0], [0], [1], [0, 0, 1, 1], [], []>} : vector<4x4xf32>, vector<4x256xf32>, vector<4x256xf32> -> vector<4x256xf32>
    %69 = arith.addf %58, %68 : vector<4x256xf32>
    %c4 = arith.constant 4 : index
    %c0_50 = arith.constant 0 : index
    %c0_51 = arith.constant 0 : index
    %70 = vector.load %arg7[%c4, %c0_50, %c0_51] : memref<9x4x4xf32, #tpu.memory_space<vmem>>, vector<1x4x4xf32>
    %71 = vector.shape_cast %70 : vector<1x4x4xf32> to vector<4x4xf32>
    %cst_52 = arith.constant dense<0.000000e+00> : vector<4x256xf32>
    %72 = tpu.matmul %71, %3, %cst_52 {dimension_numbers = #tpu.dot_dimension_numbers<[1], [0], [0], [1], [0, 0, 1, 1], [], []>} : vector<4x4xf32>, vector<4x256xf32>, vector<4x256xf32> -> vector<4x256xf32>
    %73 = arith.addf %69, %72 : vector<4x256xf32>
    %74 = vector.extract_strided_slice %3 {offsets = [0, 1], sizes = [4, 255], strides = [1, 1]} : vector<4x256xf32> to vector<4x255xf32>
    %75 = vector.extract_strided_slice %3 {offsets = [0, 0], sizes = [4, 1], strides = [1, 1]} : vector<4x256xf32> to vector<4x1xf32>
    %76 = tpu.concatenate %74, %75 in 1 : vector<4x255xf32>, vector<4x1xf32> -> vector<4x256xf32>
    %c5 = arith.constant 5 : index
    %c0_53 = arith.constant 0 : index
    %c0_54 = arith.constant 0 : index
    %77 = vector.load %arg6[%c5, %c0_53, %c0_54] : memref<9x1x256xf32, #tpu.memory_space<vmem>>, vector<1x1x256xf32>
    %78 = vector.shape_cast %77 : vector<1x1x256xf32> to vector<1x256xf32>
    %79 = vector.broadcast %78 : vector<1x256xf32> to vector<4x256xf32>
    %80 = arith.mulf %76, %79 : vector<4x256xf32>
    %c5_55 = arith.constant 5 : index
    %c0_56 = arith.constant 0 : index
    %c0_57 = arith.constant 0 : index
    %81 = vector.load %arg7[%c5_55, %c0_56, %c0_57] : memref<9x4x4xf32, #tpu.memory_space<vmem>>, vector<1x4x4xf32>
    %82 = vector.shape_cast %81 : vector<1x4x4xf32> to vector<4x4xf32>
    %cst_58 = arith.constant dense<0.000000e+00> : vector<4x256xf32>
    %83 = tpu.matmul %82, %80, %cst_58 {dimension_numbers = #tpu.dot_dimension_numbers<[1], [0], [0], [1], [0, 0, 1, 1], [], []>} : vector<4x4xf32>, vector<4x256xf32>, vector<4x256xf32> -> vector<4x256xf32>
    %84 = arith.addf %73, %83 : vector<4x256xf32>
    %85 = vector.extract_strided_slice %3 {offsets = [0, 15], sizes = [4, 241], strides = [1, 1]} : vector<4x256xf32> to vector<4x241xf32>
    %86 = vector.extract_strided_slice %3 {offsets = [0, 0], sizes = [4, 15], strides = [1, 1]} : vector<4x256xf32> to vector<4x15xf32>
    %87 = tpu.concatenate %85, %86 in 1 : vector<4x241xf32>, vector<4x15xf32> -> vector<4x256xf32>
    %c6 = arith.constant 6 : index
    %c0_59 = arith.constant 0 : index
    %c0_60 = arith.constant 0 : index
    %88 = vector.load %arg6[%c6, %c0_59, %c0_60] : memref<9x1x256xf32, #tpu.memory_space<vmem>>, vector<1x1x256xf32>
    %89 = vector.shape_cast %88 : vector<1x1x256xf32> to vector<1x256xf32>
    %90 = vector.broadcast %89 : vector<1x256xf32> to vector<4x256xf32>
    %91 = arith.mulf %87, %90 : vector<4x256xf32>
    %c6_61 = arith.constant 6 : index
    %c0_62 = arith.constant 0 : index
    %c0_63 = arith.constant 0 : index
    %92 = vector.load %arg7[%c6_61, %c0_62, %c0_63] : memref<9x4x4xf32, #tpu.memory_space<vmem>>, vector<1x4x4xf32>
    %93 = vector.shape_cast %92 : vector<1x4x4xf32> to vector<4x4xf32>
    %cst_64 = arith.constant dense<0.000000e+00> : vector<4x256xf32>
    %94 = tpu.matmul %93, %91, %cst_64 {dimension_numbers = #tpu.dot_dimension_numbers<[1], [0], [0], [1], [0, 0, 1, 1], [], []>} : vector<4x4xf32>, vector<4x256xf32>, vector<4x256xf32> -> vector<4x256xf32>
    %95 = arith.addf %84, %94 : vector<4x256xf32>
    %96 = vector.extract_strided_slice %3 {offsets = [0, 16], sizes = [4, 240], strides = [1, 1]} : vector<4x256xf32> to vector<4x240xf32>
    %97 = vector.extract_strided_slice %3 {offsets = [0, 0], sizes = [4, 16], strides = [1, 1]} : vector<4x256xf32> to vector<4x16xf32>
    %98 = tpu.concatenate %96, %97 in 1 : vector<4x240xf32>, vector<4x16xf32> -> vector<4x256xf32>
    %c7 = arith.constant 7 : index
    %c0_65 = arith.constant 0 : index
    %c0_66 = arith.constant 0 : index
    %99 = vector.load %arg6[%c7, %c0_65, %c0_66] : memref<9x1x256xf32, #tpu.memory_space<vmem>>, vector<1x1x256xf32>
    %100 = vector.shape_cast %99 : vector<1x1x256xf32> to vector<1x256xf32>
    %101 = vector.broadcast %100 : vector<1x256xf32> to vector<4x256xf32>
    %102 = arith.mulf %98, %101 : vector<4x256xf32>
    %c7_67 = arith.constant 7 : index
    %c0_68 = arith.constant 0 : index
    %c0_69 = arith.constant 0 : index
    %103 = vector.load %arg7[%c7_67, %c0_68, %c0_69] : memref<9x4x4xf32, #tpu.memory_space<vmem>>, vector<1x4x4xf32>
    %104 = vector.shape_cast %103 : vector<1x4x4xf32> to vector<4x4xf32>
    %cst_70 = arith.constant dense<0.000000e+00> : vector<4x256xf32>
    %105 = tpu.matmul %104, %102, %cst_70 {dimension_numbers = #tpu.dot_dimension_numbers<[1], [0], [0], [1], [0, 0, 1, 1], [], []>} : vector<4x4xf32>, vector<4x256xf32>, vector<4x256xf32> -> vector<4x256xf32>
    %106 = arith.addf %95, %105 : vector<4x256xf32>
    %107 = vector.extract_strided_slice %3 {offsets = [0, 17], sizes = [4, 239], strides = [1, 1]} : vector<4x256xf32> to vector<4x239xf32>
    %108 = vector.extract_strided_slice %3 {offsets = [0, 0], sizes = [4, 17], strides = [1, 1]} : vector<4x256xf32> to vector<4x17xf32>
    %109 = tpu.concatenate %107, %108 in 1 : vector<4x239xf32>, vector<4x17xf32> -> vector<4x256xf32>
    %c8 = arith.constant 8 : index
    %c0_71 = arith.constant 0 : index
    %c0_72 = arith.constant 0 : index
    %110 = vector.load %arg6[%c8, %c0_71, %c0_72] : memref<9x1x256xf32, #tpu.memory_space<vmem>>, vector<1x1x256xf32>
    %111 = vector.shape_cast %110 : vector<1x1x256xf32> to vector<1x256xf32>
    %112 = vector.broadcast %111 : vector<1x256xf32> to vector<4x256xf32>
    %113 = arith.mulf %109, %112 : vector<4x256xf32>
    %c8_73 = arith.constant 8 : index
    %c0_74 = arith.constant 0 : index
    %c0_75 = arith.constant 0 : index
    %114 = vector.load %arg7[%c8_73, %c0_74, %c0_75] : memref<9x4x4xf32, #tpu.memory_space<vmem>>, vector<1x4x4xf32>
    %115 = vector.shape_cast %114 : vector<1x4x4xf32> to vector<4x4xf32>
    %cst_76 = arith.constant dense<0.000000e+00> : vector<4x256xf32>
    %116 = tpu.matmul %115, %113, %cst_76 {dimension_numbers = #tpu.dot_dimension_numbers<[1], [0], [0], [1], [0, 0, 1, 1], [], []>} : vector<4x4xf32>, vector<4x256xf32>, vector<4x256xf32> -> vector<4x256xf32>
    %117 = arith.addf %106, %116 : vector<4x256xf32>
    %118 = vector.extract_strided_slice %26 {offsets = [0, 239], sizes = [4, 17], strides = [1, 1]} : vector<4x256xf32> to vector<4x17xf32>
    %119 = vector.extract_strided_slice %26 {offsets = [0, 0], sizes = [4, 239], strides = [1, 1]} : vector<4x256xf32> to vector<4x239xf32>
    %120 = tpu.concatenate %118, %119 in 1 : vector<4x17xf32>, vector<4x239xf32> -> vector<4x256xf32>
    %c0_77 = arith.constant 0 : index
    %c0_78 = arith.constant 0 : index
    %c0_79 = arith.constant 0 : index
    %121 = vector.load %arg6[%c0_77, %c0_78, %c0_79] : memref<9x1x256xf32, #tpu.memory_space<vmem>>, vector<1x1x256xf32>
    %122 = vector.shape_cast %121 : vector<1x1x256xf32> to vector<1x256xf32>
    %123 = vector.broadcast %122 : vector<1x256xf32> to vector<4x256xf32>
    %124 = arith.mulf %120, %123 : vector<4x256xf32>
    %c0_80 = arith.constant 0 : index
    %c0_81 = arith.constant 0 : index
    %c0_82 = arith.constant 0 : index
    %125 = vector.load %arg8[%c0_80, %c0_81, %c0_82] : memref<9x4x4xf32, #tpu.memory_space<vmem>>, vector<1x4x4xf32>
    %126 = vector.shape_cast %125 : vector<1x4x4xf32> to vector<4x4xf32>
    %cst_83 = arith.constant dense<0.000000e+00> : vector<4x256xf32>
    %127 = tpu.matmul %126, %124, %cst_83 {dimension_numbers = #tpu.dot_dimension_numbers<[1], [0], [0], [1], [0, 0, 1, 1], [], []>} : vector<4x4xf32>, vector<4x256xf32>, vector<4x256xf32> -> vector<4x256xf32>
    %128 = vector.extract_strided_slice %26 {offsets = [0, 240], sizes = [4, 16], strides = [1, 1]} : vector<4x256xf32> to vector<4x16xf32>
    %129 = vector.extract_strided_slice %26 {offsets = [0, 0], sizes = [4, 240], strides = [1, 1]} : vector<4x256xf32> to vector<4x240xf32>
    %130 = tpu.concatenate %128, %129 in 1 : vector<4x16xf32>, vector<4x240xf32> -> vector<4x256xf32>
    %c1_84 = arith.constant 1 : index
    %c0_85 = arith.constant 0 : index
    %c0_86 = arith.constant 0 : index
    %131 = vector.load %arg6[%c1_84, %c0_85, %c0_86] : memref<9x1x256xf32, #tpu.memory_space<vmem>>, vector<1x1x256xf32>
    %132 = vector.shape_cast %131 : vector<1x1x256xf32> to vector<1x256xf32>
    %133 = vector.broadcast %132 : vector<1x256xf32> to vector<4x256xf32>
    %134 = arith.mulf %130, %133 : vector<4x256xf32>
    %c1_87 = arith.constant 1 : index
    %c0_88 = arith.constant 0 : index
    %c0_89 = arith.constant 0 : index
    %135 = vector.load %arg8[%c1_87, %c0_88, %c0_89] : memref<9x4x4xf32, #tpu.memory_space<vmem>>, vector<1x4x4xf32>
    %136 = vector.shape_cast %135 : vector<1x4x4xf32> to vector<4x4xf32>
    %cst_90 = arith.constant dense<0.000000e+00> : vector<4x256xf32>
    %137 = tpu.matmul %136, %134, %cst_90 {dimension_numbers = #tpu.dot_dimension_numbers<[1], [0], [0], [1], [0, 0, 1, 1], [], []>} : vector<4x4xf32>, vector<4x256xf32>, vector<4x256xf32> -> vector<4x256xf32>
    %138 = arith.addf %127, %137 : vector<4x256xf32>
    %139 = vector.extract_strided_slice %26 {offsets = [0, 241], sizes = [4, 15], strides = [1, 1]} : vector<4x256xf32> to vector<4x15xf32>
    %140 = vector.extract_strided_slice %26 {offsets = [0, 0], sizes = [4, 241], strides = [1, 1]} : vector<4x256xf32> to vector<4x241xf32>
    %141 = tpu.concatenate %139, %140 in 1 : vector<4x15xf32>, vector<4x241xf32> -> vector<4x256xf32>
    %c2_91 = arith.constant 2 : index
    %c0_92 = arith.constant 0 : index
    %c0_93 = arith.constant 0 : index
    %142 = vector.load %arg6[%c2_91, %c0_92, %c0_93] : memref<9x1x256xf32, #tpu.memory_space<vmem>>, vector<1x1x256xf32>
    %143 = vector.shape_cast %142 : vector<1x1x256xf32> to vector<1x256xf32>
    %144 = vector.broadcast %143 : vector<1x256xf32> to vector<4x256xf32>
    %145 = arith.mulf %141, %144 : vector<4x256xf32>
    %c2_94 = arith.constant 2 : index
    %c0_95 = arith.constant 0 : index
    %c0_96 = arith.constant 0 : index
    %146 = vector.load %arg8[%c2_94, %c0_95, %c0_96] : memref<9x4x4xf32, #tpu.memory_space<vmem>>, vector<1x4x4xf32>
    %147 = vector.shape_cast %146 : vector<1x4x4xf32> to vector<4x4xf32>
    %cst_97 = arith.constant dense<0.000000e+00> : vector<4x256xf32>
    %148 = tpu.matmul %147, %145, %cst_97 {dimension_numbers = #tpu.dot_dimension_numbers<[1], [0], [0], [1], [0, 0, 1, 1], [], []>} : vector<4x4xf32>, vector<4x256xf32>, vector<4x256xf32> -> vector<4x256xf32>
    %149 = arith.addf %138, %148 : vector<4x256xf32>
    %150 = vector.extract_strided_slice %26 {offsets = [0, 255], sizes = [4, 1], strides = [1, 1]} : vector<4x256xf32> to vector<4x1xf32>
    %151 = vector.extract_strided_slice %26 {offsets = [0, 0], sizes = [4, 255], strides = [1, 1]} : vector<4x256xf32> to vector<4x255xf32>
    %152 = tpu.concatenate %150, %151 in 1 : vector<4x1xf32>, vector<4x255xf32> -> vector<4x256xf32>
    %c3_98 = arith.constant 3 : index
    %c0_99 = arith.constant 0 : index
    %c0_100 = arith.constant 0 : index
    %153 = vector.load %arg6[%c3_98, %c0_99, %c0_100] : memref<9x1x256xf32, #tpu.memory_space<vmem>>, vector<1x1x256xf32>
    %154 = vector.shape_cast %153 : vector<1x1x256xf32> to vector<1x256xf32>
    %155 = vector.broadcast %154 : vector<1x256xf32> to vector<4x256xf32>
    %156 = arith.mulf %152, %155 : vector<4x256xf32>
    %c3_101 = arith.constant 3 : index
    %c0_102 = arith.constant 0 : index
    %c0_103 = arith.constant 0 : index
    %157 = vector.load %arg8[%c3_101, %c0_102, %c0_103] : memref<9x4x4xf32, #tpu.memory_space<vmem>>, vector<1x4x4xf32>
    %158 = vector.shape_cast %157 : vector<1x4x4xf32> to vector<4x4xf32>
    %cst_104 = arith.constant dense<0.000000e+00> : vector<4x256xf32>
    %159 = tpu.matmul %158, %156, %cst_104 {dimension_numbers = #tpu.dot_dimension_numbers<[1], [0], [0], [1], [0, 0, 1, 1], [], []>} : vector<4x4xf32>, vector<4x256xf32>, vector<4x256xf32> -> vector<4x256xf32>
    %160 = arith.addf %149, %159 : vector<4x256xf32>
    %c4_105 = arith.constant 4 : index
    %c0_106 = arith.constant 0 : index
    %c0_107 = arith.constant 0 : index
    %161 = vector.load %arg8[%c4_105, %c0_106, %c0_107] : memref<9x4x4xf32, #tpu.memory_space<vmem>>, vector<1x4x4xf32>
    %162 = vector.shape_cast %161 : vector<1x4x4xf32> to vector<4x4xf32>
    %cst_108 = arith.constant dense<0.000000e+00> : vector<4x256xf32>
    %163 = tpu.matmul %162, %26, %cst_108 {dimension_numbers = #tpu.dot_dimension_numbers<[1], [0], [0], [1], [0, 0, 1, 1], [], []>} : vector<4x4xf32>, vector<4x256xf32>, vector<4x256xf32> -> vector<4x256xf32>
    %164 = arith.addf %160, %163 : vector<4x256xf32>
    %165 = vector.extract_strided_slice %26 {offsets = [0, 1], sizes = [4, 255], strides = [1, 1]} : vector<4x256xf32> to vector<4x255xf32>
    %166 = vector.extract_strided_slice %26 {offsets = [0, 0], sizes = [4, 1], strides = [1, 1]} : vector<4x256xf32> to vector<4x1xf32>
    %167 = tpu.concatenate %165, %166 in 1 : vector<4x255xf32>, vector<4x1xf32> -> vector<4x256xf32>
    %c5_109 = arith.constant 5 : index
    %c0_110 = arith.constant 0 : index
    %c0_111 = arith.constant 0 : index
    %168 = vector.load %arg6[%c5_109, %c0_110, %c0_111] : memref<9x1x256xf32, #tpu.memory_space<vmem>>, vector<1x1x256xf32>
    %169 = vector.shape_cast %168 : vector<1x1x256xf32> to vector<1x256xf32>
    %170 = vector.broadcast %169 : vector<1x256xf32> to vector<4x256xf32>
    %171 = arith.mulf %167, %170 : vector<4x256xf32>
    %c5_112 = arith.constant 5 : index
    %c0_113 = arith.constant 0 : index
    %c0_114 = arith.constant 0 : index
    %172 = vector.load %arg8[%c5_112, %c0_113, %c0_114] : memref<9x4x4xf32, #tpu.memory_space<vmem>>, vector<1x4x4xf32>
    %173 = vector.shape_cast %172 : vector<1x4x4xf32> to vector<4x4xf32>
    %cst_115 = arith.constant dense<0.000000e+00> : vector<4x256xf32>
    %174 = tpu.matmul %173, %171, %cst_115 {dimension_numbers = #tpu.dot_dimension_numbers<[1], [0], [0], [1], [0, 0, 1, 1], [], []>} : vector<4x4xf32>, vector<4x256xf32>, vector<4x256xf32> -> vector<4x256xf32>
    %175 = arith.addf %164, %174 : vector<4x256xf32>
    %176 = vector.extract_strided_slice %26 {offsets = [0, 15], sizes = [4, 241], strides = [1, 1]} : vector<4x256xf32> to vector<4x241xf32>
    %177 = vector.extract_strided_slice %26 {offsets = [0, 0], sizes = [4, 15], strides = [1, 1]} : vector<4x256xf32> to vector<4x15xf32>
    %178 = tpu.concatenate %176, %177 in 1 : vector<4x241xf32>, vector<4x15xf32> -> vector<4x256xf32>
    %c6_116 = arith.constant 6 : index
    %c0_117 = arith.constant 0 : index
    %c0_118 = arith.constant 0 : index
    %179 = vector.load %arg6[%c6_116, %c0_117, %c0_118] : memref<9x1x256xf32, #tpu.memory_space<vmem>>, vector<1x1x256xf32>
    %180 = vector.shape_cast %179 : vector<1x1x256xf32> to vector<1x256xf32>
    %181 = vector.broadcast %180 : vector<1x256xf32> to vector<4x256xf32>
    %182 = arith.mulf %178, %181 : vector<4x256xf32>
    %c6_119 = arith.constant 6 : index
    %c0_120 = arith.constant 0 : index
    %c0_121 = arith.constant 0 : index
    %183 = vector.load %arg8[%c6_119, %c0_120, %c0_121] : memref<9x4x4xf32, #tpu.memory_space<vmem>>, vector<1x4x4xf32>
    %184 = vector.shape_cast %183 : vector<1x4x4xf32> to vector<4x4xf32>
    %cst_122 = arith.constant dense<0.000000e+00> : vector<4x256xf32>
    %185 = tpu.matmul %184, %182, %cst_122 {dimension_numbers = #tpu.dot_dimension_numbers<[1], [0], [0], [1], [0, 0, 1, 1], [], []>} : vector<4x4xf32>, vector<4x256xf32>, vector<4x256xf32> -> vector<4x256xf32>
    %186 = arith.addf %175, %185 : vector<4x256xf32>
    %187 = vector.extract_strided_slice %26 {offsets = [0, 16], sizes = [4, 240], strides = [1, 1]} : vector<4x256xf32> to vector<4x240xf32>
    %188 = vector.extract_strided_slice %26 {offsets = [0, 0], sizes = [4, 16], strides = [1, 1]} : vector<4x256xf32> to vector<4x16xf32>
    %189 = tpu.concatenate %187, %188 in 1 : vector<4x240xf32>, vector<4x16xf32> -> vector<4x256xf32>
    %c7_123 = arith.constant 7 : index
    %c0_124 = arith.constant 0 : index
    %c0_125 = arith.constant 0 : index
    %190 = vector.load %arg6[%c7_123, %c0_124, %c0_125] : memref<9x1x256xf32, #tpu.memory_space<vmem>>, vector<1x1x256xf32>
    %191 = vector.shape_cast %190 : vector<1x1x256xf32> to vector<1x256xf32>
    %192 = vector.broadcast %191 : vector<1x256xf32> to vector<4x256xf32>
    %193 = arith.mulf %189, %192 : vector<4x256xf32>
    %c7_126 = arith.constant 7 : index
    %c0_127 = arith.constant 0 : index
    %c0_128 = arith.constant 0 : index
    %194 = vector.load %arg8[%c7_126, %c0_127, %c0_128] : memref<9x4x4xf32, #tpu.memory_space<vmem>>, vector<1x4x4xf32>
    %195 = vector.shape_cast %194 : vector<1x4x4xf32> to vector<4x4xf32>
    %cst_129 = arith.constant dense<0.000000e+00> : vector<4x256xf32>
    %196 = tpu.matmul %195, %193, %cst_129 {dimension_numbers = #tpu.dot_dimension_numbers<[1], [0], [0], [1], [0, 0, 1, 1], [], []>} : vector<4x4xf32>, vector<4x256xf32>, vector<4x256xf32> -> vector<4x256xf32>
    %197 = arith.addf %186, %196 : vector<4x256xf32>
    %198 = vector.extract_strided_slice %26 {offsets = [0, 17], sizes = [4, 239], strides = [1, 1]} : vector<4x256xf32> to vector<4x239xf32>
    %199 = vector.extract_strided_slice %26 {offsets = [0, 0], sizes = [4, 17], strides = [1, 1]} : vector<4x256xf32> to vector<4x17xf32>
    %200 = tpu.concatenate %198, %199 in 1 : vector<4x239xf32>, vector<4x17xf32> -> vector<4x256xf32>
    %c8_130 = arith.constant 8 : index
    %c0_131 = arith.constant 0 : index
    %c0_132 = arith.constant 0 : index
    %201 = vector.load %arg6[%c8_130, %c0_131, %c0_132] : memref<9x1x256xf32, #tpu.memory_space<vmem>>, vector<1x1x256xf32>
    %202 = vector.shape_cast %201 : vector<1x1x256xf32> to vector<1x256xf32>
    %203 = vector.broadcast %202 : vector<1x256xf32> to vector<4x256xf32>
    %204 = arith.mulf %200, %203 : vector<4x256xf32>
    %c8_133 = arith.constant 8 : index
    %c0_134 = arith.constant 0 : index
    %c0_135 = arith.constant 0 : index
    %205 = vector.load %arg8[%c8_133, %c0_134, %c0_135] : memref<9x4x4xf32, #tpu.memory_space<vmem>>, vector<1x4x4xf32>
    %206 = vector.shape_cast %205 : vector<1x4x4xf32> to vector<4x4xf32>
    %cst_136 = arith.constant dense<0.000000e+00> : vector<4x256xf32>
    %207 = tpu.matmul %206, %204, %cst_136 {dimension_numbers = #tpu.dot_dimension_numbers<[1], [0], [0], [1], [0, 0, 1, 1], [], []>} : vector<4x4xf32>, vector<4x256xf32>, vector<4x256xf32> -> vector<4x256xf32>
    %208 = arith.addf %197, %207 : vector<4x256xf32>
    %209 = arith.addf %117, %208 : vector<4x256xf32>
    %c0_137 = arith.constant 0 : index
    %c0_138 = arith.constant 0 : index
    %210 = vector.load %arg9[%c0_137, %c0_138] : memref<4x1xf32, #tpu.memory_space<vmem>>, vector<4x1xf32>
    %211 = vector.broadcast %210 : vector<4x1xf32> to vector<4x256xf32>
    %212 = arith.addf %209, %211 : vector<4x256xf32>
    %cst_139 = arith.constant 0.000000e+00 : f32
    %213 = vector.broadcast %cst_139 : f32 to vector<4x256xf32>
    %214 = arith.maximumf %212, %213 : vector<4x256xf32>
    %215 = vector.extract_strided_slice %214 {offsets = [0, 239], sizes = [4, 17], strides = [1, 1]} : vector<4x256xf32> to vector<4x17xf32>
    %216 = vector.extract_strided_slice %214 {offsets = [0, 0], sizes = [4, 239], strides = [1, 1]} : vector<4x256xf32> to vector<4x239xf32>
    %217 = tpu.concatenate %215, %216 in 1 : vector<4x17xf32>, vector<4x239xf32> -> vector<4x256xf32>
    %c0_140 = arith.constant 0 : index
    %c0_141 = arith.constant 0 : index
    %c0_142 = arith.constant 0 : index
    %218 = vector.load %arg6[%c0_140, %c0_141, %c0_142] : memref<9x1x256xf32, #tpu.memory_space<vmem>>, vector<1x1x256xf32>
    %219 = vector.shape_cast %218 : vector<1x1x256xf32> to vector<1x256xf32>
    %220 = vector.broadcast %219 : vector<1x256xf32> to vector<4x256xf32>
    %221 = arith.mulf %217, %220 : vector<4x256xf32>
    %c0_143 = arith.constant 0 : index
    %c0_144 = arith.constant 0 : index
    %c0_145 = arith.constant 0 : index
    %222 = vector.load %arg10[%c0_143, %c0_144, %c0_145] : memref<9x4x4xf32, #tpu.memory_space<vmem>>, vector<1x4x4xf32>
    %223 = vector.shape_cast %222 : vector<1x4x4xf32> to vector<4x4xf32>
    %cst_146 = arith.constant dense<0.000000e+00> : vector<4x256xf32>
    %224 = tpu.matmul %223, %221, %cst_146 {dimension_numbers = #tpu.dot_dimension_numbers<[1], [0], [0], [1], [0, 0, 1, 1], [], []>} : vector<4x4xf32>, vector<4x256xf32>, vector<4x256xf32> -> vector<4x256xf32>
    %225 = vector.extract_strided_slice %214 {offsets = [0, 240], sizes = [4, 16], strides = [1, 1]} : vector<4x256xf32> to vector<4x16xf32>
    %226 = vector.extract_strided_slice %214 {offsets = [0, 0], sizes = [4, 240], strides = [1, 1]} : vector<4x256xf32> to vector<4x240xf32>
    %227 = tpu.concatenate %225, %226 in 1 : vector<4x16xf32>, vector<4x240xf32> -> vector<4x256xf32>
    %c1_147 = arith.constant 1 : index
    %c0_148 = arith.constant 0 : index
    %c0_149 = arith.constant 0 : index
    %228 = vector.load %arg6[%c1_147, %c0_148, %c0_149] : memref<9x1x256xf32, #tpu.memory_space<vmem>>, vector<1x1x256xf32>
    %229 = vector.shape_cast %228 : vector<1x1x256xf32> to vector<1x256xf32>
    %230 = vector.broadcast %229 : vector<1x256xf32> to vector<4x256xf32>
    %231 = arith.mulf %227, %230 : vector<4x256xf32>
    %c1_150 = arith.constant 1 : index
    %c0_151 = arith.constant 0 : index
    %c0_152 = arith.constant 0 : index
    %232 = vector.load %arg10[%c1_150, %c0_151, %c0_152] : memref<9x4x4xf32, #tpu.memory_space<vmem>>, vector<1x4x4xf32>
    %233 = vector.shape_cast %232 : vector<1x4x4xf32> to vector<4x4xf32>
    %cst_153 = arith.constant dense<0.000000e+00> : vector<4x256xf32>
    %234 = tpu.matmul %233, %231, %cst_153 {dimension_numbers = #tpu.dot_dimension_numbers<[1], [0], [0], [1], [0, 0, 1, 1], [], []>} : vector<4x4xf32>, vector<4x256xf32>, vector<4x256xf32> -> vector<4x256xf32>
    %235 = arith.addf %224, %234 : vector<4x256xf32>
    %236 = vector.extract_strided_slice %214 {offsets = [0, 241], sizes = [4, 15], strides = [1, 1]} : vector<4x256xf32> to vector<4x15xf32>
    %237 = vector.extract_strided_slice %214 {offsets = [0, 0], sizes = [4, 241], strides = [1, 1]} : vector<4x256xf32> to vector<4x241xf32>
    %238 = tpu.concatenate %236, %237 in 1 : vector<4x15xf32>, vector<4x241xf32> -> vector<4x256xf32>
    %c2_154 = arith.constant 2 : index
    %c0_155 = arith.constant 0 : index
    %c0_156 = arith.constant 0 : index
    %239 = vector.load %arg6[%c2_154, %c0_155, %c0_156] : memref<9x1x256xf32, #tpu.memory_space<vmem>>, vector<1x1x256xf32>
    %240 = vector.shape_cast %239 : vector<1x1x256xf32> to vector<1x256xf32>
    %241 = vector.broadcast %240 : vector<1x256xf32> to vector<4x256xf32>
    %242 = arith.mulf %238, %241 : vector<4x256xf32>
    %c2_157 = arith.constant 2 : index
    %c0_158 = arith.constant 0 : index
    %c0_159 = arith.constant 0 : index
    %243 = vector.load %arg10[%c2_157, %c0_158, %c0_159] : memref<9x4x4xf32, #tpu.memory_space<vmem>>, vector<1x4x4xf32>
    %244 = vector.shape_cast %243 : vector<1x4x4xf32> to vector<4x4xf32>
    %cst_160 = arith.constant dense<0.000000e+00> : vector<4x256xf32>
    %245 = tpu.matmul %244, %242, %cst_160 {dimension_numbers = #tpu.dot_dimension_numbers<[1], [0], [0], [1], [0, 0, 1, 1], [], []>} : vector<4x4xf32>, vector<4x256xf32>, vector<4x256xf32> -> vector<4x256xf32>
    %246 = arith.addf %235, %245 : vector<4x256xf32>
    %247 = vector.extract_strided_slice %214 {offsets = [0, 255], sizes = [4, 1], strides = [1, 1]} : vector<4x256xf32> to vector<4x1xf32>
    %248 = vector.extract_strided_slice %214 {offsets = [0, 0], sizes = [4, 255], strides = [1, 1]} : vector<4x256xf32> to vector<4x255xf32>
    %249 = tpu.concatenate %247, %248 in 1 : vector<4x1xf32>, vector<4x255xf32> -> vector<4x256xf32>
    %c3_161 = arith.constant 3 : index
    %c0_162 = arith.constant 0 : index
    %c0_163 = arith.constant 0 : index
    %250 = vector.load %arg6[%c3_161, %c0_162, %c0_163] : memref<9x1x256xf32, #tpu.memory_space<vmem>>, vector<1x1x256xf32>
    %251 = vector.shape_cast %250 : vector<1x1x256xf32> to vector<1x256xf32>
    %252 = vector.broadcast %251 : vector<1x256xf32> to vector<4x256xf32>
    %253 = arith.mulf %249, %252 : vector<4x256xf32>
    %c3_164 = arith.constant 3 : index
    %c0_165 = arith.constant 0 : index
    %c0_166 = arith.constant 0 : index
    %254 = vector.load %arg10[%c3_164, %c0_165, %c0_166] : memref<9x4x4xf32, #tpu.memory_space<vmem>>, vector<1x4x4xf32>
    %255 = vector.shape_cast %254 : vector<1x4x4xf32> to vector<4x4xf32>
    %cst_167 = arith.constant dense<0.000000e+00> : vector<4x256xf32>
    %256 = tpu.matmul %255, %253, %cst_167 {dimension_numbers = #tpu.dot_dimension_numbers<[1], [0], [0], [1], [0, 0, 1, 1], [], []>} : vector<4x4xf32>, vector<4x256xf32>, vector<4x256xf32> -> vector<4x256xf32>
    %257 = arith.addf %246, %256 : vector<4x256xf32>
    %c4_168 = arith.constant 4 : index
    %c0_169 = arith.constant 0 : index
    %c0_170 = arith.constant 0 : index
    %258 = vector.load %arg10[%c4_168, %c0_169, %c0_170] : memref<9x4x4xf32, #tpu.memory_space<vmem>>, vector<1x4x4xf32>
    %259 = vector.shape_cast %258 : vector<1x4x4xf32> to vector<4x4xf32>
    %cst_171 = arith.constant dense<0.000000e+00> : vector<4x256xf32>
    %260 = tpu.matmul %259, %214, %cst_171 {dimension_numbers = #tpu.dot_dimension_numbers<[1], [0], [0], [1], [0, 0, 1, 1], [], []>} : vector<4x4xf32>, vector<4x256xf32>, vector<4x256xf32> -> vector<4x256xf32>
    %261 = arith.addf %257, %260 : vector<4x256xf32>
    %262 = vector.extract_strided_slice %214 {offsets = [0, 1], sizes = [4, 255], strides = [1, 1]} : vector<4x256xf32> to vector<4x255xf32>
    %263 = vector.extract_strided_slice %214 {offsets = [0, 0], sizes = [4, 1], strides = [1, 1]} : vector<4x256xf32> to vector<4x1xf32>
    %264 = tpu.concatenate %262, %263 in 1 : vector<4x255xf32>, vector<4x1xf32> -> vector<4x256xf32>
    %c5_172 = arith.constant 5 : index
    %c0_173 = arith.constant 0 : index
    %c0_174 = arith.constant 0 : index
    %265 = vector.load %arg6[%c5_172, %c0_173, %c0_174] : memref<9x1x256xf32, #tpu.memory_space<vmem>>, vector<1x1x256xf32>
    %266 = vector.shape_cast %265 : vector<1x1x256xf32> to vector<1x256xf32>
    %267 = vector.broadcast %266 : vector<1x256xf32> to vector<4x256xf32>
    %268 = arith.mulf %264, %267 : vector<4x256xf32>
    %c5_175 = arith.constant 5 : index
    %c0_176 = arith.constant 0 : index
    %c0_177 = arith.constant 0 : index
    %269 = vector.load %arg10[%c5_175, %c0_176, %c0_177] : memref<9x4x4xf32, #tpu.memory_space<vmem>>, vector<1x4x4xf32>
    %270 = vector.shape_cast %269 : vector<1x4x4xf32> to vector<4x4xf32>
    %cst_178 = arith.constant dense<0.000000e+00> : vector<4x256xf32>
    %271 = tpu.matmul %270, %268, %cst_178 {dimension_numbers = #tpu.dot_dimension_numbers<[1], [0], [0], [1], [0, 0, 1, 1], [], []>} : vector<4x4xf32>, vector<4x256xf32>, vector<4x256xf32> -> vector<4x256xf32>
    %272 = arith.addf %261, %271 : vector<4x256xf32>
    %273 = vector.extract_strided_slice %214 {offsets = [0, 15], sizes = [4, 241], strides = [1, 1]} : vector<4x256xf32> to vector<4x241xf32>
    %274 = vector.extract_strided_slice %214 {offsets = [0, 0], sizes = [4, 15], strides = [1, 1]} : vector<4x256xf32> to vector<4x15xf32>
    %275 = tpu.concatenate %273, %274 in 1 : vector<4x241xf32>, vector<4x15xf32> -> vector<4x256xf32>
    %c6_179 = arith.constant 6 : index
    %c0_180 = arith.constant 0 : index
    %c0_181 = arith.constant 0 : index
    %276 = vector.load %arg6[%c6_179, %c0_180, %c0_181] : memref<9x1x256xf32, #tpu.memory_space<vmem>>, vector<1x1x256xf32>
    %277 = vector.shape_cast %276 : vector<1x1x256xf32> to vector<1x256xf32>
    %278 = vector.broadcast %277 : vector<1x256xf32> to vector<4x256xf32>
    %279 = arith.mulf %275, %278 : vector<4x256xf32>
    %c6_182 = arith.constant 6 : index
    %c0_183 = arith.constant 0 : index
    %c0_184 = arith.constant 0 : index
    %280 = vector.load %arg10[%c6_182, %c0_183, %c0_184] : memref<9x4x4xf32, #tpu.memory_space<vmem>>, vector<1x4x4xf32>
    %281 = vector.shape_cast %280 : vector<1x4x4xf32> to vector<4x4xf32>
    %cst_185 = arith.constant dense<0.000000e+00> : vector<4x256xf32>
    %282 = tpu.matmul %281, %279, %cst_185 {dimension_numbers = #tpu.dot_dimension_numbers<[1], [0], [0], [1], [0, 0, 1, 1], [], []>} : vector<4x4xf32>, vector<4x256xf32>, vector<4x256xf32> -> vector<4x256xf32>
    %283 = arith.addf %272, %282 : vector<4x256xf32>
    %284 = vector.extract_strided_slice %214 {offsets = [0, 16], sizes = [4, 240], strides = [1, 1]} : vector<4x256xf32> to vector<4x240xf32>
    %285 = vector.extract_strided_slice %214 {offsets = [0, 0], sizes = [4, 16], strides = [1, 1]} : vector<4x256xf32> to vector<4x16xf32>
    %286 = tpu.concatenate %284, %285 in 1 : vector<4x240xf32>, vector<4x16xf32> -> vector<4x256xf32>
    %c7_186 = arith.constant 7 : index
    %c0_187 = arith.constant 0 : index
    %c0_188 = arith.constant 0 : index
    %287 = vector.load %arg6[%c7_186, %c0_187, %c0_188] : memref<9x1x256xf32, #tpu.memory_space<vmem>>, vector<1x1x256xf32>
    %288 = vector.shape_cast %287 : vector<1x1x256xf32> to vector<1x256xf32>
    %289 = vector.broadcast %288 : vector<1x256xf32> to vector<4x256xf32>
    %290 = arith.mulf %286, %289 : vector<4x256xf32>
    %c7_189 = arith.constant 7 : index
    %c0_190 = arith.constant 0 : index
    %c0_191 = arith.constant 0 : index
    %291 = vector.load %arg10[%c7_189, %c0_190, %c0_191] : memref<9x4x4xf32, #tpu.memory_space<vmem>>, vector<1x4x4xf32>
    %292 = vector.shape_cast %291 : vector<1x4x4xf32> to vector<4x4xf32>
    %cst_192 = arith.constant dense<0.000000e+00> : vector<4x256xf32>
    %293 = tpu.matmul %292, %290, %cst_192 {dimension_numbers = #tpu.dot_dimension_numbers<[1], [0], [0], [1], [0, 0, 1, 1], [], []>} : vector<4x4xf32>, vector<4x256xf32>, vector<4x256xf32> -> vector<4x256xf32>
    %294 = arith.addf %283, %293 : vector<4x256xf32>
    %295 = vector.extract_strided_slice %214 {offsets = [0, 17], sizes = [4, 239], strides = [1, 1]} : vector<4x256xf32> to vector<4x239xf32>
    %296 = vector.extract_strided_slice %214 {offsets = [0, 0], sizes = [4, 17], strides = [1, 1]} : vector<4x256xf32> to vector<4x17xf32>
    %297 = tpu.concatenate %295, %296 in 1 : vector<4x239xf32>, vector<4x17xf32> -> vector<4x256xf32>
    %c8_193 = arith.constant 8 : index
    %c0_194 = arith.constant 0 : index
    %c0_195 = arith.constant 0 : index
    %298 = vector.load %arg6[%c8_193, %c0_194, %c0_195] : memref<9x1x256xf32, #tpu.memory_space<vmem>>, vector<1x1x256xf32>
    %299 = vector.shape_cast %298 : vector<1x1x256xf32> to vector<1x256xf32>
    %300 = vector.broadcast %299 : vector<1x256xf32> to vector<4x256xf32>
    %301 = arith.mulf %297, %300 : vector<4x256xf32>
    %c8_196 = arith.constant 8 : index
    %c0_197 = arith.constant 0 : index
    %c0_198 = arith.constant 0 : index
    %302 = vector.load %arg10[%c8_196, %c0_197, %c0_198] : memref<9x4x4xf32, #tpu.memory_space<vmem>>, vector<1x4x4xf32>
    %303 = vector.shape_cast %302 : vector<1x4x4xf32> to vector<4x4xf32>
    %cst_199 = arith.constant dense<0.000000e+00> : vector<4x256xf32>
    %304 = tpu.matmul %303, %301, %cst_199 {dimension_numbers = #tpu.dot_dimension_numbers<[1], [0], [0], [1], [0, 0, 1, 1], [], []>} : vector<4x4xf32>, vector<4x256xf32>, vector<4x256xf32> -> vector<4x256xf32>
    %305 = arith.addf %294, %304 : vector<4x256xf32>
    %c0_200 = arith.constant 0 : index
    %c0_201 = arith.constant 0 : index
    %306 = vector.load %arg11[%c0_200, %c0_201] : memref<4x1xf32, #tpu.memory_space<vmem>>, vector<4x1xf32>
    %307 = vector.broadcast %306 : vector<4x1xf32> to vector<4x256xf32>
    %308 = arith.addf %305, %307 : vector<4x256xf32>
    %cst_202 = arith.constant 0.000000e+00 : f32
    %309 = vector.broadcast %cst_202 : f32 to vector<4x256xf32>
    %310 = arith.maximumf %308, %309 : vector<4x256xf32>
    %311 = vector.shape_cast %310 : vector<4x256xf32> to vector<1x4x256xf32>
    %c0_203 = arith.constant 0 : index
    %c0_204 = arith.constant 0 : index
    %c0_205 = arith.constant 0 : index
    %312 = vector.load %arg12[%c0_203, %c0_204, %c0_205] : memref<1x4x256xf32, #tpu.memory_space<vmem>>, vector<1x4x256xf32>
    tpu.vector_store %arg12[%c0_203, %c0_204, %c0_205], %311 {strides = array<i32>} : memref<1x4x256xf32, #tpu.memory_space<vmem>>, vector<1x4x256xf32>,
    return
  }
  func.func @transform_0(%arg0: i32) -> (i32, i32, i32) {
    %c0_i32 = arith.constant 0 : i32
    %c0_i32_0 = arith.constant 0 : i32
    %c0_i32_1 = arith.constant 0 : i32
    return %arg0, %c0_i32, %c0_i32_0 : i32, i32, i32
  }
  func.func @transform_1(%arg0: i32) -> (i32, i32, i32) {
    %c0_i32 = arith.constant 0 : i32
    %c0_i32_0 = arith.constant 0 : i32
    %c0_i32_1 = arith.constant 0 : i32
    return %arg0, %c0_i32, %c0_i32_0 : i32, i32, i32
  }
  func.func @transform_2(%arg0: i32) -> (i32, i32) {
    %c0_i32 = arith.constant 0 : i32
    %c0_i32_0 = arith.constant 0 : i32
    %c0_i32_1 = arith.constant 0 : i32
    return %c0_i32, %c0_i32_0 : i32, i32
  }
  func.func @transform_3(%arg0: i32) -> (i32, i32, i32) {
    %c0_i32 = arith.constant 0 : i32
    %c0_i32_0 = arith.constant 0 : i32
    %c0_i32_1 = arith.constant 0 : i32
    %c0_i32_2 = arith.constant 0 : i32
    return %c0_i32, %c0_i32_0, %c0_i32_1 : i32, i32, i32
  }
  func.func @transform_4(%arg0: i32) -> (i32, i32) {
    %c0_i32 = arith.constant 0 : i32
    %c0_i32_0 = arith.constant 0 : i32
    %c0_i32_1 = arith.constant 0 : i32
    return %c0_i32, %c0_i32_0 : i32, i32
  }
  func.func @transform_5(%arg0: i32) -> (i32, i32, i32) {
    %c0_i32 = arith.constant 0 : i32
    %c0_i32_0 = arith.constant 0 : i32
    %c0_i32_1 = arith.constant 0 : i32
    %c0_i32_2 = arith.constant 0 : i32
    return %c0_i32, %c0_i32_0, %c0_i32_1 : i32, i32, i32
  }
  func.func @transform_6(%arg0: i32) -> (i32, i32, i32) {
    %c0_i32 = arith.constant 0 : i32
    %c0_i32_0 = arith.constant 0 : i32
    %c0_i32_1 = arith.constant 0 : i32
    %c0_i32_2 = arith.constant 0 : i32
    return %c0_i32, %c0_i32_0, %c0_i32_1 : i32, i32, i32
  }
  func.func @transform_7(%arg0: i32) -> (i32, i32, i32) {
    %c0_i32 = arith.constant 0 : i32
    %c0_i32_0 = arith.constant 0 : i32
    %c0_i32_1 = arith.constant 0 : i32
    %c0_i32_2 = arith.constant 0 : i32
    return %c0_i32, %c0_i32_0, %c0_i32_1 : i32, i32, i32
  }
  func.func @transform_8(%arg0: i32) -> (i32, i32) {
    %c0_i32 = arith.constant 0 : i32
    %c0_i32_0 = arith.constant 0 : i32
    %c0_i32_1 = arith.constant 0 : i32
    return %c0_i32, %c0_i32_0 : i32, i32
  }
  func.func @transform_9(%arg0: i32) -> (i32, i32, i32) {
    %c0_i32 = arith.constant 0 : i32
    %c0_i32_0 = arith.constant 0 : i32
    %c0_i32_1 = arith.constant 0 : i32
    %c0_i32_2 = arith.constant 0 : i32
    return %c0_i32, %c0_i32_0, %c0_i32_1 : i32, i32, i32
  }
  func.func @transform_10(%arg0: i32) -> (i32, i32) {
    %c0_i32 = arith.constant 0 : i32
    %c0_i32_0 = arith.constant 0 : i32
    %c0_i32_1 = arith.constant 0 : i32
    return %c0_i32, %c0_i32_0 : i32, i32
  }
  func.func @transform_11(%arg0: i32) -> (i32, i32, i32) {
    %c0_i32 = arith.constant 0 : i32
    %c0_i32_0 = arith.constant 0 : i32
    %c0_i32_1 = arith.constant 0 : i32
    return %arg0, %c0_i32, %c0_i32_0 : i32, i32, i32
  }
}

</mosaic_0001>

<llo_original>
// kernel: tpu_custom_call.1
$region0: #{tpu_custom_call.1}
  #allocation0 [shape = 'u32[]', space=smem, size = 0x4, offset = 0x4, fixed_abs, tag = 'smem constant byte address 0x4 - core index']
  #allocation1 [shape = 'u32[72,128]{1,0:T(1,128)}', space=vmem, size = 0x9000, scoped, tag = 'internal scratch']
  %s0 = inlined_call_operand.vmem [shape: f32[2,8,64], index: 0, kind: input, shape index: {}]
  %s1 = inlined_call_operand.vmem [shape: f32[2,4,256], index: 1, kind: input, shape index: {}]
  %s2 = inlined_call_operand.vmem [shape: f32[16,8], index: 2, kind: input, shape index: {}]
  %s3 = inlined_call_operand.hbm [shape: f32[4,64,256], index: 3, kind: input, shape index: {}]
  %s4 = inlined_call_operand.vmem [shape: f32[4,256], index: 4, kind: input, shape index: {}]
  %s5 = inlined_call_operand.vmem [shape: f32[9,1,256], index: 5, kind: input, shape index: {}]
  %s6 = inlined_call_operand.vmem [shape: f32[9,4,4], index: 6, kind: input, shape index: {}]
  %s7 = inlined_call_operand.vmem [shape: f32[9,4,4], index: 7, kind: input, shape index: {}]
  %s8 = inlined_call_operand.vmem [shape: f32[4,1], index: 8, kind: input, shape index: {}]
  %s9 = inlined_call_operand.vmem [shape: f32[9,4,4], index: 9, kind: input, shape index: {}]
  %s10 = inlined_call_operand.vmem [shape: f32[4,1], index: 10, kind: input, shape index: {}]
  %s11 = inlined_call_operand.hbm [shape: f32[2,4,256], index: 11, kind: output, shape index: {}]
  %s12 = sld [smem:[#allocation0]]
  $region81: #{tpu_custom_call.1} parent=0
    _
  %s14 = ssub.s32 1, %s12
  %s15 = scalar_select 0, %s14, %s12
  $region1: #{tpu_custom_call.1} parent=0
    #allocation2 [shape = 'u8[262144]{0}', space=vmem, size = 0x40000, scoped, tag = 'input window, operand 3, single buffered']
    #allocation3 [shape = 's32[2]{0}', space=sflag, size = 0x8, scoped, tag = 'scoped memory for tpu_custom_call.1']
    #allocation4 [shape = 's32[2]{0}', space=sflag, size = 0x8, scoped, tag = 'scoped memory for tpu_custom_call.1']
    #allocation5 [shape = 'u8[8192]{0}', space=vmem, size = 0x2000, scoped, tag = 'output window, operand 0']
    %16 = vsyncpa [#allocation3], 0
    %17 = vsyncpa [#allocation4], 0
    %s18 = scalar_lea.sflag [#allocation4], 1
    %19 = vsyncpa %s18, 0
    loop: start=0, step=1, limit=4
    $region2: #{tpu_custom_call.1} parent=1 // loop_pre_header
      _
    $region3: #{tpu_custom_call.1} parent=1 // loop_header
      %s21 = sphi 0, %s25
      %p22 = scmp.ge.s32.totalorder %s21, 4
      %s31 = sphi 0, %s33
      %s34 = sphi 0, %s31
      %s35 = sphi 0, %s34
      %s51 = sphi 0, %s35
      %s57 = sphi 0, %s59
      %s60 = sphi 0, %s57
      %s61 = sphi 0, %s60
      %s77 = sphi 0, %s61
      %s81 = sphi 0, %s81
      %s83 = sphi 0, %s81
      %s84 = sphi 0, %s83
      %s98 = sphi 0, %s84
      %s102 = sphi 0, %s102
      %s104 = sphi 0, %s102
      %s105 = sphi 0, %s104
      %s119 = sphi 0, %s105
      %s123 = sphi 0, %s123
      %s125 = sphi 0, %s123
      %s126 = sphi 0, %s125
      %s140 = sphi 0, %s126
      %s144 = sphi 0, %s144
      %s146 = sphi 0, %s144
      %s147 = sphi 0, %s146
      %s161 = sphi 0, %s147
      %s165 = sphi 0, %s165
      %s167 = sphi 0, %s165
      %s168 = sphi 0, %s167
      %s182 = sphi 0, %s168
      %s186 = sphi 0, %s186
      %s188 = sphi 0, %s186
      %s189 = sphi 0, %s188
      %s203 = sphi 0, %s189
      %s207 = sphi 0, %s207
      %s209 = sphi 0, %s207
      %s210 = sphi 0, %s209
      %s224 = sphi 0, %s210
      %s228 = sphi 0, %s228
      %s230 = sphi 0, %s228
      %s231 = sphi 0, %s230
      %s245 = sphi 0, %s231
      %s249 = sphi 0, %s249
      %s251 = sphi 0, %s249
      %s252 = sphi 0, %s251
      %s266 = sphi 0, %s252
      %s272 = sphi 0, %s274
      %s275 = sphi 0, %s272
      %s276 = sphi 0, %s275
      %s292 = sphi 0, %s276
    $region4: #{tpu_custom_call.1} parent=1 // loop_header_branch
      %24 = sbr.rel (%p22) target = $region8
    $region5: #{tpu_custom_call.1} parent=1 // loop_body
      %s26 = ssub.s32 %s21, 1
      %s27 = ssub.s32 %s21, 2
      %s28 = sadd.s32 %s21, 1
      %s29 = ssub.s32 %s21, %s28
      %p30 = scmp.eq.s32.totalorder %s29, 0
      %s32 = sadd.s32 %s31, 1
      %s33 = scalar_select %p30, %s31, %s32
      %p36 = pneg %p30
      %p37 = scmp.eq.s32.totalorder %s21, 1
      %p38 = por %p36, %p37
      %p39 = scmp.ne.s32.totalorder %s31, %s34
      %p40 = scmp.eq.s32.totalorder %s21, 0
      %p41 = por %p39, %p40
      %p42 = scmp.ne.s32.totalorder %s31, %s34
      %p43 = scmp.eq.s32.totalorder %s26, 1
      %p44 = por %p42, %p43
      %p45 = scmp.ne.s32.totalorder %s34, %s35
      %p46 = scmp.eq.s32.totalorder %s26, 0
      %p47 = por %p45, %p46
      %p48 = scmp.ne.s32.totalorder %s34, %s35
      %p49 = scmp.eq.s32.totalorder %s27, 1
      %p50 = por %p48, %p49
      %p52 = scmp.ne.s32.totalorder %s35, %s51
      %p53 = scmp.eq.s32.totalorder %s27, 0
      %p54 = por %p52, %p53
      %s55 = ssub.s32 %s21, %s28
      %p56 = scmp.eq.s32.totalorder %s55, 0
      %s58 = sadd.s32 %s57, 1
      %s59 = scalar_select %p56, %s57, %s58
      %p62 = pneg %p56
      %p63 = scmp.eq.s32.totalorder %s21, 1
      %p64 = por %p62, %p63
      %p65 = scmp.ne.s32.totalorder %s57, %s60
      %p66 = scmp.eq.s32.totalorder %s21, 0
      %p67 = por %p65, %p66
      %p68 = scmp.ne.s32.totalorder %s57, %s60
      %p69 = scmp.eq.s32.totalorder %s26, 1
      %p70 = por %p68, %p69
      %p71 = scmp.ne.s32.totalorder %s60, %s61
      %p72 = scmp.eq.s32.totalorder %s26, 0
      %p73 = por %p71, %p72
      %p74 = scmp.ne.s32.totalorder %s60, %s61
      %p75 = scmp.eq.s32.totalorder %s27, 1
      %p76 = por %p74, %p75
      %p78 = scmp.ne.s32.totalorder %s61, %s77
      %p79 = scmp.eq.s32.totalorder %s27, 0
      %p80 = por %p78, %p79
      %s82 = sadd.s32 %s81, 1
      %p85 = scmp.eq.s32.totalorder %s21, 1
      %p86 = scmp.ne.s32.totalorder %s81, %s83
      %p87 = scmp.eq.s32.totalorder %s21, 0
      %p88 = por %p86, %p87
      %p89 = scmp.ne.s32.totalorder %s81, %s83
      %p90 = scmp.eq.s32.totalorder %s26, 1
      %p91 = por %p89, %p90
      %p92 = scmp.ne.s32.totalorder %s83, %s84
      %p93 = scmp.eq.s32.totalorder %s26, 0
      %p94 = por %p92, %p93
      %p95 = scmp.ne.s32.totalorder %s83, %s84
      %p96 = scmp.eq.s32.totalorder %s27, 1
      %p97 = por %p95, %p96
      %p99 = scmp.ne.s32.totalorder %s84, %s98
      %p100 = scmp.eq.s32.totalorder %s27, 0
      %p101 = por %p99, %p100
      %s103 = sadd.s32 %s102, 1
      %p106 = scmp.eq.s32.totalorder %s21, 1
      %p107 = scmp.ne.s32.totalorder %s102, %s104
      %p108 = scmp.eq.s32.totalorder %s21, 0
      %p109 = por %p107, %p108
      %p110 = scmp.ne.s32.totalorder %s102, %s104
      %p111 = scmp.eq.s32.totalorder %s26, 1
      %p112 = por %p110, %p111
      %p113 = scmp.ne.s32.totalorder %s104, %s105
      %p114 = scmp.eq.s32.totalorder %s26, 0
      %p115 = por %p113, %p114
      %p116 = scmp.ne.s32.totalorder %s104, %s105
      %p117 = scmp.eq.s32.totalorder %s27, 1
      %p118 = por %p116, %p117
      %p120 = scmp.ne.s32.totalorder %s105, %s119
      %p121 = scmp.eq.s32.totalorder %s27, 0
      %p122 = por %p120, %p121
      %s124 = sadd.s32 %s123, 1
      %p127 = scmp.eq.s32.totalorder %s21, 1
      %p128 = scmp.ne.s32.totalorder %s123, %s125
      %p129 = scmp.eq.s32.totalorder %s21, 0
      %p130 = por %p128, %p129
      %p131 = scmp.ne.s32.totalorder %s123, %s125
      %p132 = scmp.eq.s32.totalorder %s26, 1
      %p133 = por %p131, %p132
      %p134 = scmp.ne.s32.totalorder %s125, %s126
      %p135 = scmp.eq.s32.totalorder %s26, 0
      %p136 = por %p134, %p135
      %p137 = scmp.ne.s32.totalorder %s125, %s126
      %p138 = scmp.eq.s32.totalorder %s27, 1
      %p139 = por %p137, %p138
      %p141 = scmp.ne.s32.totalorder %s126, %s140
      %p142 = scmp.eq.s32.totalorder %s27, 0
      %p143 = por %p141, %p142
      %s145 = sadd.s32 %s144, 1
      %p148 = scmp.eq.s32.totalorder %s21, 1
      %p149 = scmp.ne.s32.totalorder %s144, %s146
      %p150 = scmp.eq.s32.totalorder %s21, 0
      %p151 = por %p149, %p150
      %p152 = scmp.ne.s32.totalorder %s144, %s146
      %p153 = scmp.eq.s32.totalorder %s26, 1
      %p154 = por %p152, %p153
      %p155 = scmp.ne.s32.totalorder %s146, %s147
      %p156 = scmp.eq.s32.totalorder %s26, 0
      %p157 = por %p155, %p156
      %p158 = scmp.ne.s32.totalorder %s146, %s147
      %p159 = scmp.eq.s32.totalorder %s27, 1
      %p160 = por %p158, %p159
      %p162 = scmp.ne.s32.totalorder %s147, %s161
      %p163 = scmp.eq.s32.totalorder %s27, 0
      %p164 = por %p162, %p163
      %s166 = sadd.s32 %s165, 1
      %p169 = scmp.eq.s32.totalorder %s21, 1
      %p170 = scmp.ne.s32.totalorder %s165, %s167
      %p171 = scmp.eq.s32.totalorder %s21, 0
      %p172 = por %p170, %p171
      %p173 = scmp.ne.s32.totalorder %s165, %s167
      %p174 = scmp.eq.s32.totalorder %s26, 1
      %p175 = por %p173, %p174
      %p176 = scmp.ne.s32.totalorder %s167, %s168
      %p177 = scmp.eq.s32.totalorder %s26, 0
      %p178 = por %p176, %p177
      %p179 = scmp.ne.s32.totalorder %s167, %s168
      %p180 = scmp.eq.s32.totalorder %s27, 1
      %p181 = por %p179, %p180
      %p183 = scmp.ne.s32.totalorder %s168, %s182
      %p184 = scmp.eq.s32.totalorder %s27, 0
      %p185 = por %p183, %p184
      %s187 = sadd.s32 %s186, 1
      %p190 = scmp.eq.s32.totalorder %s21, 1
      %p191 = scmp.ne.s32.totalorder %s186, %s188
      %p192 = scmp.eq.s32.totalorder %s21, 0
      %p193 = por %p191, %p192
      %p194 = scmp.ne.s32.totalorder %s186, %s188
      %p195 = scmp.eq.s32.totalorder %s26, 1
      %p196 = por %p194, %p195
      %p197 = scmp.ne.s32.totalorder %s188, %s189
      %p198 = scmp.eq.s32.totalorder %s26, 0
      %p199 = por %p197, %p198
      %p200 = scmp.ne.s32.totalorder %s188, %s189
      %p201 = scmp.eq.s32.totalorder %s27, 1
      %p202 = por %p200, %p201
      %p204 = scmp.ne.s32.totalorder %s189, %s203
      %p205 = scmp.eq.s32.totalorder %s27, 0
      %p206 = por %p204, %p205
      %s208 = sadd.s32 %s207, 1
      %p211 = scmp.eq.s32.totalorder %s21, 1
      %p212 = scmp.ne.s32.totalorder %s207, %s209
      %p213 = scmp.eq.s32.totalorder %s21, 0
      %p214 = por %p212, %p213
      %p215 = scmp.ne.s32.totalorder %s207, %s209
      %p216 = scmp.eq.s32.totalorder %s26, 1
      %p217 = por %p215, %p216
      %p218 = scmp.ne.s32.totalorder %s209, %s210
      %p219 = scmp.eq.s32.totalorder %s26, 0
      %p220 = por %p218, %p219
      %p221 = scmp.ne.s32.totalorder %s209, %s210
      %p222 = scmp.eq.s32.totalorder %s27, 1
      %p223 = por %p221, %p222
      %p225 = scmp.ne.s32.totalorder %s210, %s224
      %p226 = scmp.eq.s32.totalorder %s27, 0
      %p227 = por %p225, %p226
      %s229 = sadd.s32 %s228, 1
      %p232 = scmp.eq.s32.totalorder %s21, 1
      %p233 = scmp.ne.s32.totalorder %s228, %s230
      %p234 = scmp.eq.s32.totalorder %s21, 0
      %p235 = por %p233, %p234
      %p236 = scmp.ne.s32.totalorder %s228, %s230
      %p237 = scmp.eq.s32.totalorder %s26, 1
      %p238 = por %p236, %p237
      %p239 = scmp.ne.s32.totalorder %s230, %s231
      %p240 = scmp.eq.s32.totalorder %s26, 0
      %p241 = por %p239, %p240
      %p242 = scmp.ne.s32.totalorder %s230, %s231
      %p243 = scmp.eq.s32.totalorder %s27, 1
      %p244 = por %p242, %p243
      %p246 = scmp.ne.s32.totalorder %s231, %s245
      %p247 = scmp.eq.s32.totalorder %s27, 0
      %p248 = por %p246, %p247
      %s250 = sadd.s32 %s249, 1
      %p253 = scmp.eq.s32.totalorder %s21, 1
      %p254 = scmp.ne.s32.totalorder %s249, %s251
      %p255 = scmp.eq.s32.totalorder %s21, 0
      %p256 = por %p254, %p255
      %p257 = scmp.ne.s32.totalorder %s249, %s251
      %p258 = scmp.eq.s32.totalorder %s26, 1
      %p259 = por %p257, %p258
      %p260 = scmp.ne.s32.totalorder %s251, %s252
      %p261 = scmp.eq.s32.totalorder %s26, 0
      %p262 = por %p260, %p261
      %p263 = scmp.ne.s32.totalorder %s251, %s252
      %p264 = scmp.eq.s32.totalorder %s27, 1
      %p265 = por %p263, %p264
      %p267 = scmp.ne.s32.totalorder %s252, %s266
      %p268 = scmp.eq.s32.totalorder %s27, 0
      %p269 = por %p267, %p268
      %s270 = ssub.s32 %s21, %s28
      %p271 = scmp.eq.s32.totalorder %s270, 0
      %s273 = sadd.s32 %s272, 1
      %s274 = scalar_select %p271, %s272, %s273
      %p277 = pneg %p271
      %p278 = scmp.eq.s32.totalorder %s21, 1
      %p279 = por %p277, %p278
      %p280 = scmp.ne.s32.totalorder %s272, %s275
      %p281 = scmp.eq.s32.totalorder %s21, 0
      %p282 = por %p280, %p281
      %p283 = scmp.ne.s32.totalorder %s272, %s275
      %p284 = scmp.eq.s32.totalorder %s26, 1
      %p285 = por %p283, %p284
      %p286 = scmp.ne.s32.totalorder %s275, %s276
      %p287 = scmp.eq.s32.totalorder %s26, 0
      %p288 = por %p286, %p287
      %p289 = scmp.ne.s32.totalorder %s275, %s276
      %p290 = scmp.eq.s32.totalorder %s27, 1
      %p291 = por %p289, %p290
      %p293 = scmp.ne.s32.totalorder %s276, %s292
      %p294 = scmp.eq.s32.totalorder %s27, 0
      %p295 = por %p293, %p294
      %p296 = scmp.le.s32.totalorder 1, %s21
      %p297 = scmp.lt.s32.totalorder %s21, 3
      %p298 = pnand %p296, %p297
      %p299 = pneg %p298
      // Predicated region
      $region9: #{tpu_custom_call.1} parent=5 // pred_check
        _
      $region10: #{tpu_custom_call.1} parent=5 // pred_check_branch
        %301 = sbr.rel (%p298) target = $region12
      $region11: #{tpu_custom_call.1} parent=5 // pred_region
        %s302 = ssub.s32 %s21, 1
        // Predicated region
        $region13: #{tpu_custom_call.1} parent=11 // pred_check
          %p303 = pneg %p94
        $region14: #{tpu_custom_call.1} parent=11 // pred_check_branch
          %305 = sbr.rel (%p303) target = $region16
        $region15: #{tpu_custom_call.1} parent=11 // pred_region
          _
        $region16: #{tpu_custom_call.1} parent=11 // pred_fallthru
          _
        // Predicated region
        $region17: #{tpu_custom_call.1} parent=11 // pred_check
          %p306 = pneg %p115
        $region18: #{tpu_custom_call.1} parent=11 // pred_check_branch
          %308 = sbr.rel (%p306) target = $region20
        $region19: #{tpu_custom_call.1} parent=11 // pred_region
          %310 = vsyncadd [#allocation3], 0
          %s311 = sshll.u32 %s3, 4
          %s312 = int_to_ptr.hbm [resolvable:$true] %s311
          %s313 = sshll.u32 [#allocation2], 4
          %s314 = int_to_ptr.vmem [resolvable:$true] %s313
          %319 = dma.hbm_to_vmem [thread:$0]  %s312, 8192, %s314, [#allocation3], 256, 256, 16
        $region20: #{tpu_custom_call.1} parent=11 // pred_fallthru
          _
        // Predicated region
        $region21: #{tpu_custom_call.1} parent=11 // pred_check
          %p320 = pneg %p136
        $region22: #{tpu_custom_call.1} parent=11 // pred_check_branch
          %322 = sbr.rel (%p320) target = $region24
        $region23: #{tpu_custom_call.1} parent=11 // pred_region
          _
        $region24: #{tpu_custom_call.1} parent=11 // pred_fallthru
          _
        // Predicated region
        $region25: #{tpu_custom_call.1} parent=11 // pred_check
          %p323 = pneg %p157
        $region26: #{tpu_custom_call.1} parent=11 // pred_check_branch
          %325 = sbr.rel (%p323) target = $region28
        $region27: #{tpu_custom_call.1} parent=11 // pred_region
          _
        $region28: #{tpu_custom_call.1} parent=11 // pred_fallthru
          _
        // Predicated region
        $region29: #{tpu_custom_call.1} parent=11 // pred_check
          %p326 = pneg %p178
        $region30: #{tpu_custom_call.1} parent=11 // pred_check_branch
          %328 = sbr.rel (%p326) target = $region32
        $region31: #{tpu_custom_call.1} parent=11 // pred_region
          _
        $region32: #{tpu_custom_call.1} parent=11 // pred_fallthru
          _
        // Predicated region
        $region33: #{tpu_custom_call.1} parent=11 // pred_check
          %p329 = pneg %p199
        $region34: #{tpu_custom_call.1} parent=11 // pred_check_branch
          %331 = sbr.rel (%p329) target = $region36
        $region35: #{tpu_custom_call.1} parent=11 // pred_region
          _
        $region36: #{tpu_custom_call.1} parent=11 // pred_fallthru
          _
        // Predicated region
        $region37: #{tpu_custom_call.1} parent=11 // pred_check
          %p332 = pneg %p220
        $region38: #{tpu_custom_call.1} parent=11 // pred_check_branch
          %334 = sbr.rel (%p332) target = $region40
        $region39: #{tpu_custom_call.1} parent=11 // pred_region
          _
        $region40: #{tpu_custom_call.1} parent=11 // pred_fallthru
          _
        // Predicated region
        $region41: #{tpu_custom_call.1} parent=11 // pred_check
          %p335 = pneg %p241
        $region42: #{tpu_custom_call.1} parent=11 // pred_check_branch
          %337 = sbr.rel (%p335) target = $region44
        $region43: #{tpu_custom_call.1} parent=11 // pred_region
          _
        $region44: #{tpu_custom_call.1} parent=11 // pred_fallthru
          _
        // Predicated region
        $region45: #{tpu_custom_call.1} parent=11 // pred_check
          %p338 = pneg %p262
        $region46: #{tpu_custom_call.1} parent=11 // pred_check_branch
          %340 = sbr.rel (%p338) target = $region48
        $region47: #{tpu_custom_call.1} parent=11 // pred_region
          _
        $region48: #{tpu_custom_call.1} parent=11 // pred_fallthru
          _
      $region12: #{tpu_custom_call.1} parent=5 // pred_fallthru
        _
      %p341 = scmp.lt.s32.totalorder %s21, 2
      // Predicated region
      $region49: #{tpu_custom_call.1} parent=5 // pred_check
        %p342 = pneg %p341
      $region50: #{tpu_custom_call.1} parent=5 // pred_check_branch
        %344 = sbr.rel (%p342) target = $region52
      $region51: #{tpu_custom_call.1} parent=5 // pred_region
        // Predicated region
        $region53: #{tpu_custom_call.1} parent=51 // pred_check
          %p345 = pneg %p41
        $region54: #{tpu_custom_call.1} parent=51 // pred_check_branch
          %347 = sbr.rel (%p345) target = $region56
        $region55: #{tpu_custom_call.1} parent=51 // pred_region
          %p348 = scmp.lt.s32.totalorder %s21, 1
          %s349 = scalar_select %p348, %s21, 1
          %s350 = smul.addr %s349, 8
          %s351 = scalar_lea.vmem %s0, %s350
        $region56: #{tpu_custom_call.1} parent=51 // pred_fallthru
          _
        // Predicated region
        $region57: #{tpu_custom_call.1} parent=51 // pred_check
          %p352 = pneg %p67
        $region58: #{tpu_custom_call.1} parent=51 // pred_check_branch
          %354 = sbr.rel (%p352) target = $region60
        $region59: #{tpu_custom_call.1} parent=51 // pred_region
          %p355 = scmp.lt.s32.totalorder %s21, 1
          %s356 = scalar_select %p355, %s21, 1
          %s357 = smul.addr %s356, 2
          %s358 = smul.addr %s357, 4
          %s359 = scalar_lea.vmem %s1, %s358
        $region60: #{tpu_custom_call.1} parent=51 // pred_fallthru
          _
      $region52: #{tpu_custom_call.1} parent=5 // pred_fallthru
        _
      %p360 = scmp.le.s32.totalorder 1, %s21
      %p361 = scmp.lt.s32.totalorder %s21, 3
      %p362 = pnand %p360, %p361
      %p363 = pneg %p362
      // Predicated region
      $region61: #{tpu_custom_call.1} parent=5 // pred_check
        _
      $region62: #{tpu_custom_call.1} parent=5 // pred_check_branch
        %365 = sbr.rel (%p362) target = $region64
      $region63: #{tpu_custom_call.1} parent=5 // pred_region
        %s366 = ssub.s32 %s21, 1
        // Predicated region
        $region65: #{tpu_custom_call.1} parent=63 // pred_check
          %p367 = pneg %p115
        $region66: #{tpu_custom_call.1} parent=63 // pred_check_branch
          %369 = sbr.rel (%p367) target = $region68
        $region67: #{tpu_custom_call.1} parent=63 // pred_region
          %371 = dma.done [#allocation3], 8192
        $region68: #{tpu_custom_call.1} parent=63 // pred_fallthru
          _
        %p372 = scmp.lt.s32.totalorder %s26, 1
        %s373 = scalar_select %p372, %s26, 1
        %s374 = smul.addr %s373, 8
        %s375 = scalar_lea.vmem %s0, %s374
        %p376 = pneg %p47
        %p377 = pneg %p44
        %p378 = scmp.lt.s32.totalorder %s26, 1
        %s379 = scalar_select %p378, %s26, 1
        %s380 = smul.addr %s379, 2
        %s381 = smul.addr %s380, 4
        %s382 = scalar_lea.vmem %s1, %s381
        %p383 = pneg %p73
        %p384 = pneg %p70
        %p385 = pneg %p94
        %p386 = pneg %p91
        %p387 = pneg %p115
        %p388 = pneg %p112
        %p389 = pneg %p136
        %p390 = pneg %p133
        %p391 = pneg %p157
        %p392 = pneg %p154
        %p393 = pneg %p178
        %p394 = pneg %p175
        %p395 = pneg %p199
        %p396 = pneg %p196
        %p397 = pneg %p220
        %p398 = pneg %p217
        %p399 = pneg %p241
        %p400 = pneg %p238
        %p401 = pneg %p262
        %p402 = pneg %p259
        %p403 = pneg %p288
        %p404 = pneg %p285
        %s405 = sand.u32 %s275, 1
        %s406 = scalar_lea.sflag [#allocation4], %s405
        %s407 = sand.u32 %s275, 1
        %s408 = smul.addr %s407, 8
        %s409 = scalar_lea.vmem [#allocation5], %s408
        %p410 = scmp.lt.s32.totalorder %s26, 1
        %s411 = scalar_select %p410, %s26, 1
        %s412 = smul.addr %s411, 8
        %s413 = scalar_lea.vmem %s0, %s412
        %p414 = scmp.lt.s32.totalorder %s26, 1
        %s415 = scalar_select %p414, %s26, 1
        %s416 = smul.addr %s415, 2
        %s417 = smul.addr %s416, 4
        %s418 = scalar_lea.vmem %s1, %s417
        %v419 = vld [vmem:[%s413] sm:$0xff]
        %v420 = vld [vmem:[%s418] sm:$0xff]
        %v421 = vld [vmem:[%s2] sm:$0xff]
        %v422 = vld [vmem:[%s2 + $0x8] sm:$0xff]
        %vm423 = vcmask 64512
        %v425 = vsel %vm423, %v421, 0
        %v428 = vsel %vm423, %v422, 0
        %430 = vmatpush.msra.mxu0 0.0
        %431 = vmatpush.msra.mxu0 0.0
        %432 = vmatpush.msra.mxu0 0.0
        %433 = vmatpush.msra.mxu0 0.0
        %434 = vmatpush.msra.mxu0 0.0
        %435 = vmatpush.msra.mxu0 0.0
        %436 = vmatpush.msra.mxu0 0.0
        %437 = vmatpush.msra.mxu0 0.0
        %438 = vmatpush.msra.mxu0 0.0
        %439 = vmatpush.msra.mxu0 0.0
        %440 = vmatpush.msra.mxu0 0.0
        %441 = vmatpush.msra.mxu0 0.0
        %442 = vmatpush.msra.mxu0 0.0
        %443 = vmatpush.msra.mxu0 0.0
        %444 = vmatpush.msra.mxu0 0.0
        %445 = vmatpush.msra.mxu0 %v419
        %446 = vmatmul.f32.gmra.mxu0 %v425
        %v447 = vpop.f32.mrf.mxu0
        %v448 = vadd.f32 0.0, %v447
        %449 = vmatmul.f32.gmra.mxu0 %v428
        %v450 = vpop.f32.mrf.mxu0
        %v451 = vadd.f32 0.0, %v450
        %452 = vdwg.mxu0
        %v453 = vld [vmem:[%s4] sm:$0xff]
        %v454 = vld [vmem:[#allocation2] sm:$0xff]
        %v455 = vld [vmem:[#allocation2 + $0x8] sm:$0xff]
        %v456 = vld [vmem:[#allocation2 + $0x10] sm:$0xff]
        %v457 = vld [vmem:[#allocation2 + $0x18] sm:$0xff]
        %v458 = vld [vmem:[#allocation2 + $0x20] sm:$0xff]
        %v459 = vld [vmem:[#allocation2 + $0x28] sm:$0xff]
        %v460 = vld [vmem:[#allocation2 + $0x30] sm:$0xff]
        %v461 = vld [vmem:[#allocation2 + $0x38] sm:$0xff]
        %v462 = vld [vmem:[#allocation2 + $0x40] sm:$0xff]
        %v463 = vld [vmem:[#allocation2 + $0x48] sm:$0xff]
        %v464 = vld [vmem:[#allocation2 + $0x50] sm:$0xff]
        %v465 = vld [vmem:[#allocation2 + $0x58] sm:$0xff]
        %v466 = vld [vmem:[#allocation2 + $0x60] sm:$0xff]
        %v467 = vld [vmem:[#allocation2 + $0x68] sm:$0xff]
        %v468 = vld [vmem:[#allocation2 + $0x70] sm:$0xff]
        %v469 = vld [vmem:[#allocation2 + $0x78] sm:$0xff]
        %vm470 = vcmask 523264
        %v472 = vsel %vm470, %v448, 0
        %474 = vmatpush.msra.mxu0 0.0
        %475 = vmatpush.msra.mxu0 0.0
        %476 = vmatpush.msra.mxu0 0.0
        %477 = vmatpush.msra.mxu0 0.0
        %478 = vmatpush.msra.mxu0 0.0
        %479 = vmatpush.msra.mxu0 0.0
        %480 = vmatpush.msra.mxu0 0.0
        %481 = vmatpush.msra.mxu0 0.0
        %482 = vmatpush.msra.mxu0 %v468
        %483 = vmatpush.msra.mxu0 %v466
        %484 = vmatpush.msra.mxu0 %v464
        %485 = vmatpush.msra.mxu0 %v462
        %486 = vmatpush.msra.mxu0 %v460
        %487 = vmatpush.msra.mxu0 %v458
        %488 = vmatpush.msra.mxu0 %v456
        %489 = vmatpush.msra.mxu0 %v454
        %490 = vmatmul.f32.gmra.mxu0 %v472
        %v491 = vpop.f32.mrf.mxu0
        %v492 = vadd.f32 0.0, %v491
        %493 = vdwg.mxu0
        %494 = vmatpush.msra.mxu0 0.0
        %495 = vmatpush.msra.mxu0 0.0
        %496 = vmatpush.msra.mxu0 0.0
        %497 = vmatpush.msra.mxu0 0.0
        %498 = vmatpush.msra.mxu0 0.0
        %499 = vmatpush.msra.mxu0 0.0
        %500 = vmatpush.msra.mxu0 0.0
        %501 = vmatpush.msra.mxu0 0.0
        %502 = vmatpush.msra.mxu0 %v469
        %503 = vmatpush.msra.mxu0 %v467
        %504 = vmatpush.msra.mxu0 %v465
        %505 = vmatpush.msra.mxu0 %v463
        %506 = vmatpush.msra.mxu0 %v461
        %507 = vmatpush.msra.mxu0 %v459
        %508 = vmatpush.msra.mxu0 %v457
        %509 = vmatpush.msra.mxu0 %v455
        %510 = vmatmul.f32.gmra.mxu0 %v472
        %v511 = vpop.f32.mrf.mxu0
        %v512 = vadd.f32 0.0, %v511
        %513 = vdwg.mxu0
        %v516 = vrot.slane %v512, 4
        %vm517 = vcmask 1043456
        %v518 = vsel %vm517, %v492, %v516
        %v520 = vadd.f32 %v453, %v518
        %s521 = scalar_lea.vmem [#allocation2], 128
        %v522 = vld [vmem:[%s521] sm:$0xff]
        %v523 = vld [vmem:[%s521 + $0x8] sm:$0xff]
        %v524 = vld [vmem:[%s521 + $0x10] sm:$0xff]
        %v525 = vld [vmem:[%s521 + $0x18] sm:$0xff]
        %v526 = vld [vmem:[%s521 + $0x20] sm:$0xff]
        %v527 = vld [vmem:[%s521 + $0x28] sm:$0xff]
        %v528 = vld [vmem:[%s521 + $0x30] sm:$0xff]
        %v529 = vld [vmem:[%s521 + $0x38] sm:$0xff]
        %v530 = vld [vmem:[%s521 + $0x40] sm:$0xff]
        %v531 = vld [vmem:[%s521 + $0x48] sm:$0xff]
        %v532 = vld [vmem:[%s521 + $0x50] sm:$0xff]
        %v533 = vld [vmem:[%s521 + $0x58] sm:$0xff]
        %v534 = vld [vmem:[%s521 + $0x60] sm:$0xff]
        %v535 = vld [vmem:[%s521 + $0x68] sm:$0xff]
        %v536 = vld [vmem:[%s521 + $0x70] sm:$0xff]
        %v537 = vld [vmem:[%s521 + $0x78] sm:$0xff]
        %v538 = vrot.slane %v448, 4
        %v539 = vsel %vm470, %v538, 0
        %541 = vmatpush.msra.mxu0 0.0
        %542 = vmatpush.msra.mxu0 0.0
        %543 = vmatpush.msra.mxu0 0.0
        %544 = vmatpush.msra.mxu0 0.0
        %545 = vmatpush.msra.mxu0 0.0
        %546 = vmatpush.msra.mxu0 0.0
        %547 = vmatpush.msra.mxu0 0.0
        %548 = vmatpush.msra.mxu0 0.0
        %549 = vmatpush.msra.mxu0 %v536
        %550 = vmatpush.msra.mxu0 %v534
        %551 = vmatpush.msra.mxu0 %v532
        %552 = vmatpush.msra.mxu0 %v530
        %553 = vmatpush.msra.mxu0 %v528
        %554 = vmatpush.msra.mxu0 %v526
        %555 = vmatpush.msra.mxu0 %v524
        %556 = vmatpush.msra.mxu0 %v522
        %557 = vmatmul.f32.gmra.mxu0 %v539
        %v558 = vpop.f32.mrf.mxu0
        %v559 = vadd.f32 0.0, %v558
        %560 = vdwg.mxu0
        %561 = vmatpush.msra.mxu0 0.0
        %562 = vmatpush.msra.mxu0 0.0
        %563 = vmatpush.msra.mxu0 0.0
        %564 = vmatpush.msra.mxu0 0.0
        %565 = vmatpush.msra.mxu0 0.0
        %566 = vmatpush.msra.mxu0 0.0
        %567 = vmatpush.msra.mxu0 0.0
        %568 = vmatpush.msra.mxu0 0.0
        %569 = vmatpush.msra.mxu0 %v537
        %570 = vmatpush.msra.mxu0 %v535
        %571 = vmatpush.msra.mxu0 %v533
        %572 = vmatpush.msra.mxu0 %v531
        %573 = vmatpush.msra.mxu0 %v529
        %574 = vmatpush.msra.mxu0 %v527
        %575 = vmatpush.msra.mxu0 %v525
        %576 = vmatpush.msra.mxu0 %v523
        %577 = vmatmul.f32.gmra.mxu0 %v539
        %v578 = vpop.f32.mrf.mxu0
        %v579 = vadd.f32 0.0, %v578
        %580 = vdwg.mxu0
        %v583 = vrot.slane %v579, 4
        %v584 = vsel %vm517, %v559, %v583
        %v586 = vadd.f32 %v520, %v584
        %s587 = scalar_lea.vmem [#allocation2], 256
        %v588 = vld [vmem:[%s587] sm:$0xff]
        %v589 = vld [vmem:[%s587 + $0x8] sm:$0xff]
        %v590 = vld [vmem:[%s587 + $0x10] sm:$0xff]
        %v591 = vld [vmem:[%s587 + $0x18] sm:$0xff]
        %v592 = vld [vmem:[%s587 + $0x20] sm:$0xff]
        %v593 = vld [vmem:[%s587 + $0x28] sm:$0xff]
        %v594 = vld [vmem:[%s587 + $0x30] sm:$0xff]
        %v595 = vld [vmem:[%s587 + $0x38] sm:$0xff]
        %v596 = vld [vmem:[%s587 + $0x40] sm:$0xff]
        %v597 = vld [vmem:[%s587 + $0x48] sm:$0xff]
        %v598 = vld [vmem:[%s587 + $0x50] sm:$0xff]
        %v599 = vld [vmem:[%s587 + $0x58] sm:$0xff]
        %v600 = vld [vmem:[%s587 + $0x60] sm:$0xff]
        %v601 = vld [vmem:[%s587 + $0x68] sm:$0xff]
        %v602 = vld [vmem:[%s587 + $0x70] sm:$0xff]
        %v603 = vld [vmem:[%s587 + $0x78] sm:$0xff]
        %v605 = vsel %vm470, %v451, 0
        %607 = vmatpush.msra.mxu0 0.0
        %608 = vmatpush.msra.mxu0 0.0
        %609 = vmatpush.msra.mxu0 0.0
        %610 = vmatpush.msra.mxu0 0.0
        %611 = vmatpush.msra.mxu0 0.0
        %612 = vmatpush.msra.mxu0 0.0
        %613 = vmatpush.msra.mxu0 0.0
        %614 = vmatpush.msra.mxu0 0.0
        %615 = vmatpush.msra.mxu0 %v602
        %616 = vmatpush.msra.mxu0 %v600
        %617 = vmatpush.msra.mxu0 %v598
        %618 = vmatpush.msra.mxu0 %v596
        %619 = vmatpush.msra.mxu0 %v594
        %620 = vmatpush.msra.mxu0 %v592
        %621 = vmatpush.msra.mxu0 %v590
        %622 = vmatpush.msra.mxu0 %v588
        %623 = vmatmul.f32.gmra.mxu0 %v605
        %v624 = vpop.f32.mrf.mxu0
        %v625 = vadd.f32 0.0, %v624
        %626 = vdwg.mxu0
        %627 = vmatpush.msra.mxu0 0.0
        %628 = vmatpush.msra.mxu0 0.0
        %629 = vmatpush.msra.mxu0 0.0
        %630 = vmatpush.msra.mxu0 0.0
        %631 = vmatpush.msra.mxu0 0.0
        %632 = vmatpush.msra.mxu0 0.0
        %633 = vmatpush.msra.mxu0 0.0
        %634 = vmatpush.msra.mxu0 0.0
        %635 = vmatpush.msra.mxu0 %v603
        %636 = vmatpush.msra.mxu0 %v601
        %637 = vmatpush.msra.mxu0 %v599
        %638 = vmatpush.msra.mxu0 %v597
        %639 = vmatpush.msra.mxu0 %v595
        %640 = vmatpush.msra.mxu0 %v593
        %641 = vmatpush.msra.mxu0 %v591
        %642 = vmatpush.msra.mxu0 %v589
        %643 = vmatmul.f32.gmra.mxu0 %v605
        %v644 = vpop.f32.mrf.mxu0
        %v645 = vadd.f32 0.0, %v644
        %646 = vdwg.mxu0
        %v649 = vrot.slane %v645, 4
        %v650 = vsel %vm517, %v625, %v649
        %v652 = vadd.f32 %v586, %v650
        %s653 = scalar_lea.vmem [#allocation2], 384
        %v654 = vld [vmem:[%s653] sm:$0xff]
        %v655 = vld [vmem:[%s653 + $0x8] sm:$0xff]
        %v656 = vld [vmem:[%s653 + $0x10] sm:$0xff]
        %v657 = vld [vmem:[%s653 + $0x18] sm:$0xff]
        %v658 = vld [vmem:[%s653 + $0x20] sm:$0xff]
        %v659 = vld [vmem:[%s653 + $0x28] sm:$0xff]
        %v660 = vld [vmem:[%s653 + $0x30] sm:$0xff]
        %v661 = vld [vmem:[%s653 + $0x38] sm:$0xff]
        %v662 = vld [vmem:[%s653 + $0x40] sm:$0xff]
        %v663 = vld [vmem:[%s653 + $0x48] sm:$0xff]
        %v664 = vld [vmem:[%s653 + $0x50] sm:$0xff]
        %v665 = vld [vmem:[%s653 + $0x58] sm:$0xff]
        %v666 = vld [vmem:[%s653 + $0x60] sm:$0xff]
        %v667 = vld [vmem:[%s653 + $0x68] sm:$0xff]
        %v668 = vld [vmem:[%s653 + $0x70] sm:$0xff]
        %v669 = vld [vmem:[%s653 + $0x78] sm:$0xff]
        %v670 = vrot.slane %v451, 4
        %v671 = vsel %vm470, %v670, 0
        %673 = vmatpush.msra.mxu0 0.0
        %674 = vmatpush.msra.mxu0 0.0
        %675 = vmatpush.msra.mxu0 0.0
        %676 = vmatpush.msra.mxu0 0.0
        %677 = vmatpush.msra.mxu0 0.0
        %678 = vmatpush.msra.mxu0 0.0
        %679 = vmatpush.msra.mxu0 0.0
        %680 = vmatpush.msra.mxu0 0.0
        %681 = vmatpush.msra.mxu0 %v668
        %682 = vmatpush.msra.mxu0 %v666
        %683 = vmatpush.msra.mxu0 %v664
        %684 = vmatpush.msra.mxu0 %v662
        %685 = vmatpush.msra.mxu0 %v660
        %686 = vmatpush.msra.mxu0 %v658
        %687 = vmatpush.msra.mxu0 %v656
        %688 = vmatpush.msra.mxu0 %v654
        %689 = vmatmul.f32.gmra.mxu0 %v671
        %v690 = vpop.f32.mrf.mxu0
        %v691 = vadd.f32 0.0, %v690
        %692 = vdwg.mxu0
        %693 = vmatpush.msra.mxu0 0.0
        %694 = vmatpush.msra.mxu0 0.0
        %695 = vmatpush.msra.mxu0 0.0
        %696 = vmatpush.msra.mxu0 0.0
        %697 = vmatpush.msra.mxu0 0.0
        %698 = vmatpush.msra.mxu0 0.0
        %699 = vmatpush.msra.mxu0 0.0
        %700 = vmatpush.msra.mxu0 0.0
        %701 = vmatpush.msra.mxu0 %v669
        %702 = vmatpush.msra.mxu0 %v667
        %703 = vmatpush.msra.mxu0 %v665
        %704 = vmatpush.msra.mxu0 %v663
        %705 = vmatpush.msra.mxu0 %v661
        %706 = vmatpush.msra.mxu0 %v659
        %707 = vmatpush.msra.mxu0 %v657
        %708 = vmatpush.msra.mxu0 %v655
        %709 = vmatmul.f32.gmra.mxu0 %v671
        %v710 = vpop.f32.mrf.mxu0
        %v711 = vadd.f32 0.0, %v710
        %712 = vdwg.mxu0
        %v715 = vrot.slane %v711, 4
        %v716 = vsel %vm517, %v691, %v715
        %v718 = vadd.f32 %v652, %v716
        %720 = vst [vmem:[#allocation1] ss:$2 sm:$0xff] %v420
        %v721 = vld.sshfl [vmem:[#allocation1 + $0x8] sm:$0xff pattern:$0x75316420]
        %722 = vrot.lane.b32.xlu0 %v721, 17
        %v723 = vpop.permute.xlu0 %722
        %725 = vst [vmem:[#allocation1] ss:$2 sm:$0xff] %v420
        %v726 = vld.sshfl [vmem:[#allocation1] sm:$0xff pattern:$0x75316420]
        %v727 = vld.sshfl [vmem:[#allocation1 + $0x8] sm:$0xff pattern:$0x75316420]
        %728 = vrot.lane.b32.xlu0 %v726, 17
        %v729 = vpop.permute.xlu0 %728
        %730 = vrot.lane.b32.xlu0 %v727, 17
        %v731 = vpop.permute.xlu0 %730
        %vm732 = vcmask 138240
        %v733 = vsel %vm732, %v729, %v731
        %v736 = vsel %vm732, %v723, %v729
        %v737 = vld [vmem:[%s5] sm:$0x3]
        %v739 = vperm.slane %v737, 0
        %v740 = vperm.slane %v737, 1
        %v743 = vmul.f32 %v736, %v739
        %v744 = vmul.f32 %v733, %v740
        %v745 = vld [vmem:[%s6] sm:$0xf]
        %746 = vst [vmem:[#allocation1] ss:$2 sm:$0xff] %v420
        %v747 = vld.sshfl [vmem:[#allocation1 + $0x8] sm:$0xff pattern:$0x75316420]
        %748 = vrot.lane.b32.xlu0 %v747, 16
        %v749 = vpop.permute.xlu0 %748
        %751 = vst [vmem:[#allocation1] ss:$2 sm:$0xff] %v420
        %v752 = vld.sshfl [vmem:[#allocation1] sm:$0xff pattern:$0x75316420]
        %v753 = vld.sshfl [vmem:[#allocation1 + $0x8] sm:$0xff pattern:$0x75316420]
        %754 = vrot.lane.b32.xlu0 %v752, 16
        %v755 = vpop.permute.xlu0 %754
        %756 = vrot.lane.b32.xlu0 %v753, 16
        %v757 = vpop.permute.xlu0 %756
        %vm758 = vcmask 130048
        %v759 = vsel %vm758, %v755, %v757
        %v762 = vsel %vm758, %v749, %v755
        %s763 = scalar_lea.vmem %s5, 2
        %v764 = vld [vmem:[%s763] sm:$0x3]
        %v766 = vperm.slane %v764, 0
        %v767 = vperm.slane %v764, 1
        %v770 = vmul.f32 %v762, %v766
        %v771 = vmul.f32 %v759, %v767
        %s772 = scalar_lea.vmem %s6, 4
        %v773 = vld [vmem:[%s772] sm:$0xf]
        %vm774 = vcmask 31744
        %v776 = vsel %vm774, %v773, 0
        %v779 = vsel %vm517, %v770, 0
        %v782 = vsel %vm517, %v771, 0
        %784 = vmatpush.msra.mxu0 0.0
        %785 = vmatpush.msra.mxu0 0.0
        %786 = vmatpush.msra.mxu0 0.0
        %787 = vmatpush.msra.mxu0 0.0
        %788 = vmatpush.msra.mxu0 0.0
        %789 = vmatpush.msra.mxu0 0.0
        %790 = vmatpush.msra.mxu0 0.0
        %791 = vmatpush.msra.mxu0 0.0
        %792 = vmatpush.msra.mxu0 0.0
        %793 = vmatpush.msra.mxu0 0.0
        %794 = vmatpush.msra.mxu0 0.0
        %795 = vmatpush.msra.mxu0 0.0
        %796 = vmatpush.msra.mxu0 0.0
        %797 = vmatpush.msra.mxu0 0.0
        %798 = vmatpush.msra.mxu0 0.0
        %799 = vmatpush.msra.mxu0 %v779
        %800 = vmatmul.f32.gmra.mxu0 %v776
        %v801 = vpop.f32.mrf.mxu0
        %v802 = vadd.f32 0.0, %v801
        %803 = vdwg.mxu0
        %804 = vmatpush.msra.mxu0 0.0
        %805 = vmatpush.msra.mxu0 0.0
        %806 = vmatpush.msra.mxu0 0.0
        %807 = vmatpush.msra.mxu0 0.0
        %808 = vmatpush.msra.mxu0 0.0
        %809 = vmatpush.msra.mxu0 0.0
        %810 = vmatpush.msra.mxu0 0.0
        %811 = vmatpush.msra.mxu0 0.0
        %812 = vmatpush.msra.mxu0 0.0
        %813 = vmatpush.msra.mxu0 0.0
        %814 = vmatpush.msra.mxu0 0.0
        %815 = vmatpush.msra.mxu0 0.0
        %816 = vmatpush.msra.mxu0 0.0
        %817 = vmatpush.msra.mxu0 0.0
        %818 = vmatpush.msra.mxu0 0.0
        %819 = vmatpush.msra.mxu0 %v782
        %820 = vmatmul.f32.gmra.mxu0 %v776
        %v821 = vpop.f32.mrf.mxu0
        %v822 = vadd.f32 0.0, %v821
        %823 = vdwg.mxu0
        %v825 = vsel %vm774, %v745, 0
        %v828 = vsel %vm517, %v743, 0
        %v831 = vsel %vm517, %v744, 0
        %833 = vmatpush.msra.mxu0 0.0
        %834 = vmatpush.msra.mxu0 0.0
        %835 = vmatpush.msra.mxu0 0.0
        %836 = vmatpush.msra.mxu0 0.0
        %837 = vmatpush.msra.mxu0 0.0
        %838 = vmatpush.msra.mxu0 0.0
        %839 = vmatpush.msra.mxu0 0.0
        %840 = vmatpush.msra.mxu0 0.0
        %841 = vmatpush.msra.mxu0 0.0
        %842 = vmatpush.msra.mxu0 0.0
        %843 = vmatpush.msra.mxu0 0.0
        %844 = vmatpush.msra.mxu0 0.0
        %845 = vmatpush.msra.mxu0 0.0
        %846 = vmatpush.msra.mxu0 0.0
        %847 = vmatpush.msra.mxu0 0.0
        %848 = vmatpush.msra.mxu0 %v828
        %849 = vmatmul.f32.gmra.mxu0 %v825
        %v850 = vpop.f32.mrf.mxu0
        %v851 = vadd.f32 %v802, %v850
        %852 = vdwg.mxu0
        %853 = vmatpush.msra.mxu0 0.0
        %854 = vmatpush.msra.mxu0 0.0
        %855 = vmatpush.msra.mxu0 0.0
        %856 = vmatpush.msra.mxu0 0.0
        %857 = vmatpush.msra.mxu0 0.0
        %858 = vmatpush.msra.mxu0 0.0
        %859 = vmatpush.msra.mxu0 0.0
        %860 = vmatpush.msra.mxu0 0.0
        %861 = vmatpush.msra.mxu0 0.0
        %862 = vmatpush.msra.mxu0 0.0
        %863 = vmatpush.msra.mxu0 0.0
        %864 = vmatpush.msra.mxu0 0.0
        %865 = vmatpush.msra.mxu0 0.0
        %866 = vmatpush.msra.mxu0 0.0
        %867 = vmatpush.msra.mxu0 0.0
        %868 = vmatpush.msra.mxu0 %v831
        %869 = vmatmul.f32.gmra.mxu0 %v825
        %v870 = vpop.f32.mrf.mxu0
        %v871 = vadd.f32 %v822, %v870
        %872 = vdwg.mxu0
        %873 = vst [vmem:[#allocation1] ss:$2 sm:$0xff] %v420
        %v874 = vld.sshfl [vmem:[#allocation1 + $0x8] sm:$0xff pattern:$0x75316420]
        %875 = vrot.lane.b32.xlu0 %v874, 15
        %v876 = vpop.permute.xlu0 %875
        %878 = vst [vmem:[#allocation1] ss:$2 sm:$0xff] %v420
        %v879 = vld.sshfl [vmem:[#allocation1] sm:$0xff pattern:$0x75316420]
        %v880 = vld.sshfl [vmem:[#allocation1 + $0x8] sm:$0xff pattern:$0x75316420]
        %881 = vrot.lane.b32.xlu0 %v879, 15
        %v882 = vpop.permute.xlu0 %881
        %883 = vrot.lane.b32.xlu0 %v880, 15
        %v884 = vpop.permute.xlu0 %883
        %vm885 = vcmask 121856
        %v886 = vsel %vm885, %v882, %v884
        %v889 = vsel %vm885, %v876, %v882
        %s890 = scalar_lea.vmem %s5, 4
        %v891 = vld [vmem:[%s890] sm:$0x3]
        %v893 = vperm.slane %v891, 0
        %v894 = vperm.slane %v891, 1
        %v897 = vmul.f32 %v889, %v893
        %v898 = vmul.f32 %v886, %v894
        %s899 = scalar_lea.vmem %s6, 8
        %v900 = vld [vmem:[%s899] sm:$0xf]
        %v902 = vsel %vm774, %v900, 0
        %v905 = vsel %vm517, %v897, 0
        %v908 = vsel %vm517, %v898, 0
        %910 = vmatpush.msra.mxu0 0.0
        %911 = vmatpush.msra.mxu0 0.0
        %912 = vmatpush.msra.mxu0 0.0
        %913 = vmatpush.msra.mxu0 0.0
        %914 = vmatpush.msra.mxu0 0.0
        %915 = vmatpush.msra.mxu0 0.0
        %916 = vmatpush.msra.mxu0 0.0
        %917 = vmatpush.msra.mxu0 0.0
        %918 = vmatpush.msra.mxu0 0.0
        %919 = vmatpush.msra.mxu0 0.0
        %920 = vmatpush.msra.mxu0 0.0
        %921 = vmatpush.msra.mxu0 0.0
        %922 = vmatpush.msra.mxu0 0.0
        %923 = vmatpush.msra.mxu0 0.0
        %924 = vmatpush.msra.mxu0 0.0
        %925 = vmatpush.msra.mxu0 %v905
        %926 = vmatmul.f32.gmra.mxu0 %v902
        %v927 = vpop.f32.mrf.mxu0
        %v928 = vadd.f32 0.0, %v927
        %929 = vdwg.mxu0
        %930 = vmatpush.msra.mxu0 0.0
        %931 = vmatpush.msra.mxu0 0.0
        %932 = vmatpush.msra.mxu0 0.0
        %933 = vmatpush.msra.mxu0 0.0
        %934 = vmatpush.msra.mxu0 0.0
        %935 = vmatpush.msra.mxu0 0.0
        %936 = vmatpush.msra.mxu0 0.0
        %937 = vmatpush.msra.mxu0 0.0
        %938 = vmatpush.msra.mxu0 0.0
        %939 = vmatpush.msra.mxu0 0.0
        %940 = vmatpush.msra.mxu0 0.0
        %941 = vmatpush.msra.mxu0 0.0
        %942 = vmatpush.msra.mxu0 0.0
        %943 = vmatpush.msra.mxu0 0.0
        %944 = vmatpush.msra.mxu0 0.0
        %945 = vmatpush.msra.mxu0 %v908
        %946 = vmatmul.f32.gmra.mxu0 %v902
        %v947 = vpop.f32.mrf.mxu0
        %v948 = vadd.f32 0.0, %v947
        %949 = vdwg.mxu0
        %v950 = vadd.f32 %v851, %v928
        %v951 = vadd.f32 %v871, %v948
        %952 = vst [vmem:[#allocation1] ss:$2 sm:$0xff] %v420
        %v953 = vld.sshfl [vmem:[#allocation1 + $0x8] sm:$0xff pattern:$0x75316420]
        %954 = vrot.lane.b32.xlu0 %v953, 1
        %v955 = vpop.permute.xlu0 %954
        %957 = vst [vmem:[#allocation1] ss:$2 sm:$0xff] %v420
        %v958 = vld.sshfl [vmem:[#allocation1] sm:$0xff pattern:$0x75316420]
        %v959 = vld.sshfl [vmem:[#allocation1 + $0x8] sm:$0xff pattern:$0x75316420]
        %960 = vrot.lane.b32.xlu0 %v958, 1
        %v961 = vpop.permute.xlu0 %960
        %962 = vrot.lane.b32.xlu0 %v959, 1
        %v963 = vpop.permute.xlu0 %962
        %vm964 = vcmask 7168
        %v965 = vsel %vm964, %v961, %v963
        %v968 = vsel %vm964, %v955, %v961
        %s969 = scalar_lea.vmem %s5, 6
        %v970 = vld [vmem:[%s969] sm:$0x3]
        %v972 = vperm.slane %v970, 0
        %v973 = vperm.slane %v970, 1
        %v976 = vmul.f32 %v968, %v972
        %v977 = vmul.f32 %v965, %v973
        %s978 = scalar_lea.vmem %s6, 12
        %v979 = vld [vmem:[%s978] sm:$0xf]
        %v981 = vsel %vm774, %v979, 0
        %v984 = vsel %vm517, %v976, 0
        %v987 = vsel %vm517, %v977, 0
        %989 = vmatpush.msra.mxu0 0.0
        %990 = vmatpush.msra.mxu0 0.0
        %991 = vmatpush.msra.mxu0 0.0
        %992 = vmatpush.msra.mxu0 0.0
        %993 = vmatpush.msra.mxu0 0.0
        %994 = vmatpush.msra.mxu0 0.0
        %995 = vmatpush.msra.mxu0 0.0
        %996 = vmatpush.msra.mxu0 0.0
        %997 = vmatpush.msra.mxu0 0.0
        %998 = vmatpush.msra.mxu0 0.0
        %999 = vmatpush.msra.mxu0 0.0
        %1000 = vmatpush.msra.mxu0 0.0
        %1001 = vmatpush.msra.mxu0 0.0
        %1002 = vmatpush.msra.mxu0 0.0
        %1003 = vmatpush.msra.mxu0 0.0
        %1004 = vmatpush.msra.mxu0 %v984
        %1005 = vmatmul.f32.gmra.mxu0 %v981
        %v1006 = vpop.f32.mrf.mxu0
        %v1007 = vadd.f32 0.0, %v1006
        %1008 = vdwg.mxu0
        %1009 = vmatpush.msra.mxu0 0.0
        %1010 = vmatpush.msra.mxu0 0.0
        %1011 = vmatpush.msra.mxu0 0.0
        %1012 = vmatpush.msra.mxu0 0.0
        %1013 = vmatpush.msra.mxu0 0.0
        %1014 = vmatpush.msra.mxu0 0.0
        %1015 = vmatpush.msra.mxu0 0.0
        %1016 = vmatpush.msra.mxu0 0.0
        %1017 = vmatpush.msra.mxu0 0.0
        %1018 = vmatpush.msra.mxu0 0.0
        %1019 = vmatpush.msra.mxu0 0.0
        %1020 = vmatpush.msra.mxu0 0.0
        %1021 = vmatpush.msra.mxu0 0.0
        %1022 = vmatpush.msra.mxu0 0.0
        %1023 = vmatpush.msra.mxu0 0.0
        %1024 = vmatpush.msra.mxu0 %v987
        %1025 = vmatmul.f32.gmra.mxu0 %v981
        %v1026 = vpop.f32.mrf.mxu0
        %v1027 = vadd.f32 0.0, %v1026
        %1028 = vdwg.mxu0
        %v1029 = vadd.f32 %v950, %v1007
        %v1030 = vadd.f32 %v951, %v1027
        %s1031 = scalar_lea.vmem %s6, 16
        %v1032 = vld [vmem:[%s1031] sm:$0xf]
        %1033 = vst [vmem:[#allocation1] ss:$2 sm:$0xff] %v420
        %v1034 = vld.sshfl [vmem:[#allocation1] sm:$0xff pattern:$0x75316420]
        %v1035 = vld.sshfl [vmem:[#allocation1 + $0x8] sm:$0xff pattern:$0x75316420]
        %v1037 = vsel %vm774, %v1032, 0
        %v1039 = vsel %vm517, %v1034, 0
        %v1041 = vsel %vm517, %v1035, 0
        %1043 = vmatpush.msra.mxu0 0.0
        %1044 = vmatpush.msra.mxu0 0.0
        %1045 = vmatpush.msra.mxu0 0.0
        %1046 = vmatpush.msra.mxu0 0.0
        %1047 = vmatpush.msra.mxu0 0.0
        %1048 = vmatpush.msra.mxu0 0.0
        %1049 = vmatpush.msra.mxu0 0.0
        %1050 = vmatpush.msra.mxu0 0.0
        %1051 = vmatpush.msra.mxu0 0.0
        %1052 = vmatpush.msra.mxu0 0.0
        %1053 = vmatpush.msra.mxu0 0.0
        %1054 = vmatpush.msra.mxu0 0.0
        %1055 = vmatpush.msra.mxu0 0.0
        %1056 = vmatpush.msra.mxu0 0.0
        %1057 = vmatpush.msra.mxu0 0.0
        %1058 = vmatpush.msra.mxu0 %v1039
        %1059 = vmatmul.f32.gmra.mxu0 %v1037
        %v1060 = vpop.f32.mrf.mxu0
        %v1061 = vadd.f32 0.0, %v1060
        %1062 = vdwg.mxu0
        %1063 = vmatpush.msra.mxu0 0.0
        %1064 = vmatpush.msra.mxu0 0.0
        %1065 = vmatpush.msra.mxu0 0.0
        %1066 = vmatpush.msra.mxu0 0.0
        %1067 = vmatpush.msra.mxu0 0.0
        %1068 = vmatpush.msra.mxu0 0.0
        %1069 = vmatpush.msra.mxu0 0.0
        %1070 = vmatpush.msra.mxu0 0.0
        %1071 = vmatpush.msra.mxu0 0.0
        %1072 = vmatpush.msra.mxu0 0.0
        %1073 = vmatpush.msra.mxu0 0.0
        %1074 = vmatpush.msra.mxu0 0.0
        %1075 = vmatpush.msra.mxu0 0.0
        %1076 = vmatpush.msra.mxu0 0.0
        %1077 = vmatpush.msra.mxu0 0.0
        %1078 = vmatpush.msra.mxu0 %v1041
        %1079 = vmatmul.f32.gmra.mxu0 %v1037
        %v1080 = vpop.f32.mrf.mxu0
        %v1081 = vadd.f32 0.0, %v1080
        %1082 = vdwg.mxu0
        %v1083 = vadd.f32 %v1029, %v1061
        %v1084 = vadd.f32 %v1030, %v1081
        %1085 = vst [vmem:[#allocation1] ss:$2 sm:$0xff] %v420
        %v1086 = vld.sshfl [vmem:[#allocation1] sm:$0xff pattern:$0x75316420]
        %v1087 = vld.sshfl [vmem:[#allocation1 + $0x8] sm:$0xff pattern:$0x75316420]
        %1088 = vrot.lane.b32.xlu0 %v1086, 127
        %v1089 = vpop.permute.xlu0 %1088
        %1090 = vrot.lane.b32.xlu0 %v1087, 127
        %v1091 = vpop.permute.xlu0 %1090
        %vm1092 = vcmask 1039360
        %v1093 = vsel %vm1092, %v1089, %v1091
        %1096 = vst [vmem:[#allocation1] ss:$2 sm:$0xff] %v420
        %v1097 = vld.sshfl [vmem:[#allocation1] sm:$0xff pattern:$0x75316420]
        %1098 = vrot.lane.b32.xlu0 %v1097, 127
        %v1099 = vpop.permute.xlu0 %1098
        %v1101 = vsel %vm1092, %v1091, %v1099
        %s1102 = scalar_lea.vmem %s5, 10
        %v1103 = vld [vmem:[%s1102] sm:$0x3]
        %v1105 = vperm.slane %v1103, 0
        %v1106 = vperm.slane %v1103, 1
        %v1109 = vmul.f32 %v1093, %v1105
        %v1110 = vmul.f32 %v1101, %v1106
        %s1111 = scalar_lea.vmem %s6, 20
        %v1112 = vld [vmem:[%s1111] sm:$0xf]
        %v1114 = vsel %vm774, %v1112, 0
        %v1117 = vsel %vm517, %v1109, 0
        %v1120 = vsel %vm517, %v1110, 0
        %1122 = vmatpush.msra.mxu0 0.0
        %1123 = vmatpush.msra.mxu0 0.0
        %1124 = vmatpush.msra.mxu0 0.0
        %1125 = vmatpush.msra.mxu0 0.0
        %1126 = vmatpush.msra.mxu0 0.0
        %1127 = vmatpush.msra.mxu0 0.0
        %1128 = vmatpush.msra.mxu0 0.0
        %1129 = vmatpush.msra.mxu0 0.0
        %1130 = vmatpush.msra.mxu0 0.0
        %1131 = vmatpush.msra.mxu0 0.0
        %1132 = vmatpush.msra.mxu0 0.0
        %1133 = vmatpush.msra.mxu0 0.0
        %1134 = vmatpush.msra.mxu0 0.0
        %1135 = vmatpush.msra.mxu0 0.0
        %1136 = vmatpush.msra.mxu0 0.0
        %1137 = vmatpush.msra.mxu0 %v1117
        %1138 = vmatmul.f32.gmra.mxu0 %v1114
        %v1139 = vpop.f32.mrf.mxu0
        %v1140 = vadd.f32 0.0, %v1139
        %1141 = vdwg.mxu0
        %1142 = vmatpush.msra.mxu0 0.0
        %1143 = vmatpush.msra.mxu0 0.0
        %1144 = vmatpush.msra.mxu0 0.0
        %1145 = vmatpush.msra.mxu0 0.0
        %1146 = vmatpush.msra.mxu0 0.0
        %1147 = vmatpush.msra.mxu0 0.0
        %1148 = vmatpush.msra.mxu0 0.0
        %1149 = vmatpush.msra.mxu0 0.0
        %1150 = vmatpush.msra.mxu0 0.0
        %1151 = vmatpush.msra.mxu0 0.0
        %1152 = vmatpush.msra.mxu0 0.0
        %1153 = vmatpush.msra.mxu0 0.0
        %1154 = vmatpush.msra.mxu0 0.0
        %1155 = vmatpush.msra.mxu0 0.0
        %1156 = vmatpush.msra.mxu0 0.0
        %1157 = vmatpush.msra.mxu0 %v1120
        %1158 = vmatmul.f32.gmra.mxu0 %v1114
        %v1159 = vpop.f32.mrf.mxu0
        %v1160 = vadd.f32 0.0, %v1159
        %1161 = vdwg.mxu0
        %v1162 = vadd.f32 %v1083, %v1140
        %v1163 = vadd.f32 %v1084, %v1160
        %1164 = vst [vmem:[#allocation1] ss:$2 sm:$0xff] %v420
        %v1165 = vld.sshfl [vmem:[#allocation1] sm:$0xff pattern:$0x75316420]
        %v1166 = vld.sshfl [vmem:[#allocation1 + $0x8] sm:$0xff pattern:$0x75316420]
        %1167 = vrot.lane.b32.xlu0 %v1165, 113
        %v1168 = vpop.permute.xlu0 %1167
        %1169 = vrot.lane.b32.xlu0 %v1166, 113
        %v1170 = vpop.permute.xlu0 %1169
        %vm1171 = vcmask 924672
        %v1172 = vsel %vm1171, %v1168, %v1170
        %1175 = vst [vmem:[#allocation1] ss:$2 sm:$0xff] %v420
        %v1176 = vld.sshfl [vmem:[#allocation1] sm:$0xff pattern:$0x75316420]
        %1177 = vrot.lane.b32.xlu0 %v1176, 113
        %v1178 = vpop.permute.xlu0 %1177
        %v1180 = vsel %vm1171, %v1170, %v1178
        %s1181 = scalar_lea.vmem %s5, 12
        %v1182 = vld [vmem:[%s1181] sm:$0x3]
        %v1184 = vperm.slane %v1182, 0
        %v1185 = vperm.slane %v1182, 1
        %v1188 = vmul.f32 %v1172, %v1184
        %v1189 = vmul.f32 %v1180, %v1185
        %s1190 = scalar_lea.vmem %s6, 24
        %v1191 = vld [vmem:[%s1190] sm:$0xf]
        %v1193 = vsel %vm774, %v1191, 0
        %v1196 = vsel %vm517, %v1188, 0
        %v1199 = vsel %vm517, %v1189, 0
        %1201 = vmatpush.msra.mxu0 0.0
        %1202 = vmatpush.msra.mxu0 0.0
        %1203 = vmatpush.msra.mxu0 0.0
        %1204 = vmatpush.msra.mxu0 0.0
        %1205 = vmatpush.msra.mxu0 0.0
        %1206 = vmatpush.msra.mxu0 0.0
        %1207 = vmatpush.msra.mxu0 0.0
        %1208 = vmatpush.msra.mxu0 0.0
        %1209 = vmatpush.msra.mxu0 0.0
        %1210 = vmatpush.msra.mxu0 0.0
        %1211 = vmatpush.msra.mxu0 0.0
        %1212 = vmatpush.msra.mxu0 0.0
        %1213 = vmatpush.msra.mxu0 0.0
        %1214 = vmatpush.msra.mxu0 0.0
        %1215 = vmatpush.msra.mxu0 0.0
        %1216 = vmatpush.msra.mxu0 %v1196
        %1217 = vmatmul.f32.gmra.mxu0 %v1193
        %v1218 = vpop.f32.mrf.mxu0
        %v1219 = vadd.f32 0.0, %v1218
        %1220 = vdwg.mxu0
        %1221 = vmatpush.msra.mxu0 0.0
        %1222 = vmatpush.msra.mxu0 0.0
        %1223 = vmatpush.msra.mxu0 0.0
        %1224 = vmatpush.msra.mxu0 0.0
        %1225 = vmatpush.msra.mxu0 0.0
        %1226 = vmatpush.msra.mxu0 0.0
        %1227 = vmatpush.msra.mxu0 0.0
        %1228 = vmatpush.msra.mxu0 0.0
        %1229 = vmatpush.msra.mxu0 0.0
        %1230 = vmatpush.msra.mxu0 0.0
        %1231 = vmatpush.msra.mxu0 0.0
        %1232 = vmatpush.msra.mxu0 0.0
        %1233 = vmatpush.msra.mxu0 0.0
        %1234 = vmatpush.msra.mxu0 0.0
        %1235 = vmatpush.msra.mxu0 0.0
        %1236 = vmatpush.msra.mxu0 %v1199
        %1237 = vmatmul.f32.gmra.mxu0 %v1193
        %v1238 = vpop.f32.mrf.mxu0
        %v1239 = vadd.f32 0.0, %v1238
        %1240 = vdwg.mxu0
        %v1241 = vadd.f32 %v1162, %v1219
        %v1242 = vadd.f32 %v1163, %v1239
        %1243 = vst [vmem:[#allocation1] ss:$2 sm:$0xff] %v420
        %v1244 = vld.sshfl [vmem:[#allocation1] sm:$0xff pattern:$0x75316420]
        %v1245 = vld.sshfl [vmem:[#allocation1 + $0x8] sm:$0xff pattern:$0x75316420]
        %1246 = vrot.lane.b32.xlu0 %v1244, 112
        %v1247 = vpop.permute.xlu0 %1246
        %1248 = vrot.lane.b32.xlu0 %v1245, 112
        %v1249 = vpop.permute.xlu0 %1248
        %vm1250 = vcmask 916480
        %v1251 = vsel %vm1250, %v1247, %v1249
        %1254 = vst [vmem:[#allocation1] ss:$2 sm:$0xff] %v420
        %v1255 = vld.sshfl [vmem:[#allocation1] sm:$0xff pattern:$0x75316420]
        %1256 = vrot.lane.b32.xlu0 %v1255, 112
        %v1257 = vpop.permute.xlu0 %1256
        %v1259 = vsel %vm1250, %v1249, %v1257
        %s1260 = scalar_lea.vmem %s5, 14
        %v1261 = vld [vmem:[%s1260] sm:$0x3]
        %v1263 = vperm.slane %v1261, 0
        %v1264 = vperm.slane %v1261, 1
        %v1267 = vmul.f32 %v1251, %v1263
        %v1268 = vmul.f32 %v1259, %v1264
        %s1269 = scalar_lea.vmem %s6, 28
        %v1270 = vld [vmem:[%s1269] sm:$0xf]
        %v1272 = vsel %vm774, %v1270, 0
        %v1275 = vsel %vm517, %v1267, 0
        %v1278 = vsel %vm517, %v1268, 0
        %1280 = vmatpush.msra.mxu0 0.0
        %1281 = vmatpush.msra.mxu0 0.0
        %1282 = vmatpush.msra.mxu0 0.0
        %1283 = vmatpush.msra.mxu0 0.0
        %1284 = vmatpush.msra.mxu0 0.0
        %1285 = vmatpush.msra.mxu0 0.0
        %1286 = vmatpush.msra.mxu0 0.0
        %1287 = vmatpush.msra.mxu0 0.0
        %1288 = vmatpush.msra.mxu0 0.0
        %1289 = vmatpush.msra.mxu0 0.0
        %1290 = vmatpush.msra.mxu0 0.0
        %1291 = vmatpush.msra.mxu0 0.0
        %1292 = vmatpush.msra.mxu0 0.0
        %1293 = vmatpush.msra.mxu0 0.0
        %1294 = vmatpush.msra.mxu0 0.0
        %1295 = vmatpush.msra.mxu0 %v1275
        %1296 = vmatmul.f32.gmra.mxu0 %v1272
        %v1297 = vpop.f32.mrf.mxu0
        %v1298 = vadd.f32 0.0, %v1297
        %1299 = vdwg.mxu0
        %1300 = vmatpush.msra.mxu0 0.0
        %1301 = vmatpush.msra.mxu0 0.0
        %1302 = vmatpush.msra.mxu0 0.0
        %1303 = vmatpush.msra.mxu0 0.0
        %1304 = vmatpush.msra.mxu0 0.0
        %1305 = vmatpush.msra.mxu0 0.0
        %1306 = vmatpush.msra.mxu0 0.0
        %1307 = vmatpush.msra.mxu0 0.0
        %1308 = vmatpush.msra.mxu0 0.0
        %1309 = vmatpush.msra.mxu0 0.0
        %1310 = vmatpush.msra.mxu0 0.0
        %1311 = vmatpush.msra.mxu0 0.0
        %1312 = vmatpush.msra.mxu0 0.0
        %1313 = vmatpush.msra.mxu0 0.0
        %1314 = vmatpush.msra.mxu0 0.0
        %1315 = vmatpush.msra.mxu0 %v1278
        %1316 = vmatmul.f32.gmra.mxu0 %v1272
        %v1317 = vpop.f32.mrf.mxu0
        %v1318 = vadd.f32 0.0, %v1317
        %1319 = vdwg.mxu0
        %v1320 = vadd.f32 %v1241, %v1298
        %v1321 = vadd.f32 %v1242, %v1318
        %1322 = vst [vmem:[#allocation1] ss:$2 sm:$0xff] %v420
        %v1323 = vld.sshfl [vmem:[#allocation1] sm:$0xff pattern:$0x75316420]
        %v1324 = vld.sshfl [vmem:[#allocation1 + $0x8] sm:$0xff pattern:$0x75316420]
        %1325 = vrot.lane.b32.xlu0 %v1323, 111
        %v1326 = vpop.permute.xlu0 %1325
        %1327 = vrot.lane.b32.xlu0 %v1324, 111
        %v1328 = vpop.permute.xlu0 %1327
        %vm1329 = vcmask 908288
        %v1330 = vsel %vm1329, %v1326, %v1328
        %1333 = vst [vmem:[#allocation1] ss:$2 sm:$0xff] %v420
        %v1334 = vld.sshfl [vmem:[#allocation1] sm:$0xff pattern:$0x75316420]
        %1335 = vrot.lane.b32.xlu0 %v1334, 111
        %v1336 = vpop.permute.xlu0 %1335
        %v1338 = vsel %vm1329, %v1328, %v1336
        %s1339 = scalar_lea.vmem %s5, 16
        %v1340 = vld [vmem:[%s1339] sm:$0x3]
        %v1342 = vperm.slane %v1340, 0
        %v1343 = vperm.slane %v1340, 1
        %v1346 = vmul.f32 %v1330, %v1342
        %v1347 = vmul.f32 %v1338, %v1343
        %s1348 = scalar_lea.vmem %s6, 32
        %v1349 = vld [vmem:[%s1348] sm:$0xf]
        %v1351 = vsel %vm774, %v1349, 0
        %v1354 = vsel %vm517, %v1346, 0
        %v1357 = vsel %vm517, %v1347, 0
        %1359 = vmatpush.msra.mxu0 0.0
        %1360 = vmatpush.msra.mxu0 0.0
        %1361 = vmatpush.msra.mxu0 0.0
        %1362 = vmatpush.msra.mxu0 0.0
        %1363 = vmatpush.msra.mxu0 0.0
        %1364 = vmatpush.msra.mxu0 0.0
        %1365 = vmatpush.msra.mxu0 0.0
        %1366 = vmatpush.msra.mxu0 0.0
        %1367 = vmatpush.msra.mxu0 0.0
        %1368 = vmatpush.msra.mxu0 0.0
        %1369 = vmatpush.msra.mxu0 0.0
        %1370 = vmatpush.msra.mxu0 0.0
        %1371 = vmatpush.msra.mxu0 0.0
        %1372 = vmatpush.msra.mxu0 0.0
        %1373 = vmatpush.msra.mxu0 0.0
        %1374 = vmatpush.msra.mxu0 %v1354
        %1375 = vmatmul.f32.gmra.mxu0 %v1351
        %v1376 = vpop.f32.mrf.mxu0
        %v1377 = vadd.f32 0.0, %v1376
        %1378 = vdwg.mxu0
        %1379 = vmatpush.msra.mxu0 0.0
        %1380 = vmatpush.msra.mxu0 0.0
        %1381 = vmatpush.msra.mxu0 0.0
        %1382 = vmatpush.msra.mxu0 0.0
        %1383 = vmatpush.msra.mxu0 0.0
        %1384 = vmatpush.msra.mxu0 0.0
        %1385 = vmatpush.msra.mxu0 0.0
        %1386 = vmatpush.msra.mxu0 0.0
        %1387 = vmatpush.msra.mxu0 0.0
        %1388 = vmatpush.msra.mxu0 0.0
        %1389 = vmatpush.msra.mxu0 0.0
        %1390 = vmatpush.msra.mxu0 0.0
        %1391 = vmatpush.msra.mxu0 0.0
        %1392 = vmatpush.msra.mxu0 0.0
        %1393 = vmatpush.msra.mxu0 0.0
        %1394 = vmatpush.msra.mxu0 %v1357
        %1395 = vmatmul.f32.gmra.mxu0 %v1351
        %v1396 = vpop.f32.mrf.mxu0
        %v1397 = vadd.f32 0.0, %v1396
        %1398 = vdwg.mxu0
        %v1399 = vadd.f32 %v1320, %v1377
        %v1400 = vadd.f32 %v1321, %v1397
        %1402 = vst [vmem:[#allocation1] ss:$2 sm:$0xff] %v718
        %v1403 = vld.sshfl [vmem:[#allocation1 + $0x8] sm:$0xff pattern:$0x75316420]
        %1404 = vrot.lane.b32.xlu0 %v1403, 17
        %v1405 = vpop.permute.xlu0 %1404
        %1407 = vst [vmem:[#allocation1] ss:$2 sm:$0xff] %v718
        %v1408 = vld.sshfl [vmem:[#allocation1] sm:$0xff pattern:$0x75316420]
        %v1409 = vld.sshfl [vmem:[#allocation1 + $0x8] sm:$0xff pattern:$0x75316420]
        %1410 = vrot.lane.b32.xlu0 %v1408, 17
        %v1411 = vpop.permute.xlu0 %1410
        %1412 = vrot.lane.b32.xlu0 %v1409, 17
        %v1413 = vpop.permute.xlu0 %1412
        %v1414 = vsel %vm732, %v1411, %v1413
        %v1417 = vsel %vm732, %v1405, %v1411
        %v1418 = vmul.f32 %v1417, %v739
        %v1419 = vmul.f32 %v1414, %v740
        %v1420 = vld [vmem:[%s7] sm:$0xf]
        %1421 = vst [vmem:[#allocation1] ss:$2 sm:$0xff] %v718
        %v1422 = vld.sshfl [vmem:[#allocation1 + $0x8] sm:$0xff pattern:$0x75316420]
        %1423 = vrot.lane.b32.xlu0 %v1422, 16
        %v1424 = vpop.permute.xlu0 %1423
        %1426 = vst [vmem:[#allocation1] ss:$2 sm:$0xff] %v718
        %v1427 = vld.sshfl [vmem:[#allocation1] sm:$0xff pattern:$0x75316420]
        %v1428 = vld.sshfl [vmem:[#allocation1 + $0x8] sm:$0xff pattern:$0x75316420]
        %1429 = vrot.lane.b32.xlu0 %v1427, 16
        %v1430 = vpop.permute.xlu0 %1429
        %1431 = vrot.lane.b32.xlu0 %v1428, 16
        %v1432 = vpop.permute.xlu0 %1431
        %v1433 = vsel %vm758, %v1430, %v1432
        %v1436 = vsel %vm758, %v1424, %v1430
        %v1437 = vmul.f32 %v1436, %v766
        %v1438 = vmul.f32 %v1433, %v767
        %s1439 = scalar_lea.vmem %s7, 4
        %v1440 = vld [vmem:[%s1439] sm:$0xf]
        %v1442 = vsel %vm774, %v1440, 0
        %v1445 = vsel %vm517, %v1437, 0
        %v1448 = vsel %vm517, %v1438, 0
        %1450 = vmatpush.msra.mxu0 0.0
        %1451 = vmatpush.msra.mxu0 0.0
        %1452 = vmatpush.msra.mxu0 0.0
        %1453 = vmatpush.msra.mxu0 0.0
        %1454 = vmatpush.msra.mxu0 0.0
        %1455 = vmatpush.msra.mxu0 0.0
        %1456 = vmatpush.msra.mxu0 0.0
        %1457 = vmatpush.msra.mxu0 0.0
        %1458 = vmatpush.msra.mxu0 0.0
        %1459 = vmatpush.msra.mxu0 0.0
        %1460 = vmatpush.msra.mxu0 0.0
        %1461 = vmatpush.msra.mxu0 0.0
        %1462 = vmatpush.msra.mxu0 0.0
        %1463 = vmatpush.msra.mxu0 0.0
        %1464 = vmatpush.msra.mxu0 0.0
        %1465 = vmatpush.msra.mxu0 %v1445
        %1466 = vmatmul.f32.gmra.mxu0 %v1442
        %v1467 = vpop.f32.mrf.mxu0
        %v1468 = vadd.f32 0.0, %v1467
        %1469 = vdwg.mxu0
        %1470 = vmatpush.msra.mxu0 0.0
        %1471 = vmatpush.msra.mxu0 0.0
        %1472 = vmatpush.msra.mxu0 0.0
        %1473 = vmatpush.msra.mxu0 0.0
        %1474 = vmatpush.msra.mxu0 0.0
        %1475 = vmatpush.msra.mxu0 0.0
        %1476 = vmatpush.msra.mxu0 0.0
        %1477 = vmatpush.msra.mxu0 0.0
        %1478 = vmatpush.msra.mxu0 0.0
        %1479 = vmatpush.msra.mxu0 0.0
        %1480 = vmatpush.msra.mxu0 0.0
        %1481 = vmatpush.msra.mxu0 0.0
        %1482 = vmatpush.msra.mxu0 0.0
        %1483 = vmatpush.msra.mxu0 0.0
        %1484 = vmatpush.msra.mxu0 0.0
        %1485 = vmatpush.msra.mxu0 %v1448
        %1486 = vmatmul.f32.gmra.mxu0 %v1442
        %v1487 = vpop.f32.mrf.mxu0
        %v1488 = vadd.f32 0.0, %v1487
        %1489 = vdwg.mxu0
        %v1491 = vsel %vm774, %v1420, 0
        %v1494 = vsel %vm517, %v1418, 0
        %v1497 = vsel %vm517, %v1419, 0
        %1499 = vmatpush.msra.mxu0 0.0
        %1500 = vmatpush.msra.mxu0 0.0
        %1501 = vmatpush.msra.mxu0 0.0
        %1502 = vmatpush.msra.mxu0 0.0
        %1503 = vmatpush.msra.mxu0 0.0
        %1504 = vmatpush.msra.mxu0 0.0
        %1505 = vmatpush.msra.mxu0 0.0
        %1506 = vmatpush.msra.mxu0 0.0
        %1507 = vmatpush.msra.mxu0 0.0
        %1508 = vmatpush.msra.mxu0 0.0
        %1509 = vmatpush.msra.mxu0 0.0
        %1510 = vmatpush.msra.mxu0 0.0
        %1511 = vmatpush.msra.mxu0 0.0
        %1512 = vmatpush.msra.mxu0 0.0
        %1513 = vmatpush.msra.mxu0 0.0
        %1514 = vmatpush.msra.mxu0 %v1494
        %1515 = vmatmul.f32.gmra.mxu0 %v1491
        %v1516 = vpop.f32.mrf.mxu0
        %v1517 = vadd.f32 %v1468, %v1516
        %1518 = vdwg.mxu0
        %1519 = vmatpush.msra.mxu0 0.0
        %1520 = vmatpush.msra.mxu0 0.0
        %1521 = vmatpush.msra.mxu0 0.0
        %1522 = vmatpush.msra.mxu0 0.0
        %1523 = vmatpush.msra.mxu0 0.0
        %1524 = vmatpush.msra.mxu0 0.0
        %1525 = vmatpush.msra.mxu0 0.0
        %1526 = vmatpush.msra.mxu0 0.0
        %1527 = vmatpush.msra.mxu0 0.0
        %1528 = vmatpush.msra.mxu0 0.0
        %1529 = vmatpush.msra.mxu0 0.0
        %1530 = vmatpush.msra.mxu0 0.0
        %1531 = vmatpush.msra.mxu0 0.0
        %1532 = vmatpush.msra.mxu0 0.0
        %1533 = vmatpush.msra.mxu0 0.0
        %1534 = vmatpush.msra.mxu0 %v1497
        %1535 = vmatmul.f32.gmra.mxu0 %v1491
        %v1536 = vpop.f32.mrf.mxu0
        %v1537 = vadd.f32 %v1488, %v1536
        %1538 = vdwg.mxu0
        %1539 = vst [vmem:[#allocation1] ss:$2 sm:$0xff] %v718
        %v1540 = vld.sshfl [vmem:[#allocation1 + $0x8] sm:$0xff pattern:$0x75316420]
        %1541 = vrot.lane.b32.xlu0 %v1540, 15
        %v1542 = vpop.permute.xlu0 %1541
        %1544 = vst [vmem:[#allocation1] ss:$2 sm:$0xff] %v718
        %v1545 = vld.sshfl [vmem:[#allocation1] sm:$0xff pattern:$0x75316420]
        %v1546 = vld.sshfl [vmem:[#allocation1 + $0x8] sm:$0xff pattern:$0x75316420]
        %1547 = vrot.lane.b32.xlu0 %v1545, 15
        %v1548 = vpop.permute.xlu0 %1547
        %1549 = vrot.lane.b32.xlu0 %v1546, 15
        %v1550 = vpop.permute.xlu0 %1549
        %v1551 = vsel %vm885, %v1548, %v1550
        %v1554 = vsel %vm885, %v1542, %v1548
        %v1555 = vmul.f32 %v1554, %v893
        %v1556 = vmul.f32 %v1551, %v894
        %s1557 = scalar_lea.vmem %s7, 8
        %v1558 = vld [vmem:[%s1557] sm:$0xf]
        %v1560 = vsel %vm774, %v1558, 0
        %v1563 = vsel %vm517, %v1555, 0
        %v1566 = vsel %vm517, %v1556, 0
        %1568 = vmatpush.msra.mxu0 0.0
        %1569 = vmatpush.msra.mxu0 0.0
        %1570 = vmatpush.msra.mxu0 0.0
        %1571 = vmatpush.msra.mxu0 0.0
        %1572 = vmatpush.msra.mxu0 0.0
        %1573 = vmatpush.msra.mxu0 0.0
        %1574 = vmatpush.msra.mxu0 0.0
        %1575 = vmatpush.msra.mxu0 0.0
        %1576 = vmatpush.msra.mxu0 0.0
        %1577 = vmatpush.msra.mxu0 0.0
        %1578 = vmatpush.msra.mxu0 0.0
        %1579 = vmatpush.msra.mxu0 0.0
        %1580 = vmatpush.msra.mxu0 0.0
        %1581 = vmatpush.msra.mxu0 0.0
        %1582 = vmatpush.msra.mxu0 0.0
        %1583 = vmatpush.msra.mxu0 %v1563
        %1584 = vmatmul.f32.gmra.mxu0 %v1560
        %v1585 = vpop.f32.mrf.mxu0
        %v1586 = vadd.f32 0.0, %v1585
        %1587 = vdwg.mxu0
        %1588 = vmatpush.msra.mxu0 0.0
        %1589 = vmatpush.msra.mxu0 0.0
        %1590 = vmatpush.msra.mxu0 0.0
        %1591 = vmatpush.msra.mxu0 0.0
        %1592 = vmatpush.msra.mxu0 0.0
        %1593 = vmatpush.msra.mxu0 0.0
        %1594 = vmatpush.msra.mxu0 0.0
        %1595 = vmatpush.msra.mxu0 0.0
        %1596 = vmatpush.msra.mxu0 0.0
        %1597 = vmatpush.msra.mxu0 0.0
        %1598 = vmatpush.msra.mxu0 0.0
        %1599 = vmatpush.msra.mxu0 0.0
        %1600 = vmatpush.msra.mxu0 0.0
        %1601 = vmatpush.msra.mxu0 0.0
        %1602 = vmatpush.msra.mxu0 0.0
        %1603 = vmatpush.msra.mxu0 %v1566
        %1604 = vmatmul.f32.gmra.mxu0 %v1560
        %v1605 = vpop.f32.mrf.mxu0
        %v1606 = vadd.f32 0.0, %v1605
        %1607 = vdwg.mxu0
        %v1608 = vadd.f32 %v1517, %v1586
        %v1609 = vadd.f32 %v1537, %v1606
        %1610 = vst [vmem:[#allocation1] ss:$2 sm:$0xff] %v718
        %v1611 = vld.sshfl [vmem:[#allocation1 + $0x8] sm:$0xff pattern:$0x75316420]
        %1612 = vrot.lane.b32.xlu0 %v1611, 1
        %v1613 = vpop.permute.xlu0 %1612
        %1615 = vst [vmem:[#allocation1] ss:$2 sm:$0xff] %v718
        %v1616 = vld.sshfl [vmem:[#allocation1] sm:$0xff pattern:$0x75316420]
        %v1617 = vld.sshfl [vmem:[#allocation1 + $0x8] sm:$0xff pattern:$0x75316420]
        %1618 = vrot.lane.b32.xlu0 %v1616, 1
        %v1619 = vpop.permute.xlu0 %1618
        %1620 = vrot.lane.b32.xlu0 %v1617, 1
        %v1621 = vpop.permute.xlu0 %1620
        %v1622 = vsel %vm964, %v1619, %v1621
        %v1625 = vsel %vm964, %v1613, %v1619
        %v1626 = vmul.f32 %v1625, %v972
        %v1627 = vmul.f32 %v1622, %v973
        %s1628 = scalar_lea.vmem %s7, 12
        %v1629 = vld [vmem:[%s1628] sm:$0xf]
        %v1631 = vsel %vm774, %v1629, 0
        %v1634 = vsel %vm517, %v1626, 0
        %v1637 = vsel %vm517, %v1627, 0
        %1639 = vmatpush.msra.mxu0 0.0
        %1640 = vmatpush.msra.mxu0 0.0
        %1641 = vmatpush.msra.mxu0 0.0
        %1642 = vmatpush.msra.mxu0 0.0
        %1643 = vmatpush.msra.mxu0 0.0
        %1644 = vmatpush.msra.mxu0 0.0
        %1645 = vmatpush.msra.mxu0 0.0
        %1646 = vmatpush.msra.mxu0 0.0
        %1647 = vmatpush.msra.mxu0 0.0
        %1648 = vmatpush.msra.mxu0 0.0
        %1649 = vmatpush.msra.mxu0 0.0
        %1650 = vmatpush.msra.mxu0 0.0
        %1651 = vmatpush.msra.mxu0 0.0
        %1652 = vmatpush.msra.mxu0 0.0
        %1653 = vmatpush.msra.mxu0 0.0
        %1654 = vmatpush.msra.mxu0 %v1634
        %1655 = vmatmul.f32.gmra.mxu0 %v1631
        %v1656 = vpop.f32.mrf.mxu0
        %v1657 = vadd.f32 0.0, %v1656
        %1658 = vdwg.mxu0
        %1659 = vmatpush.msra.mxu0 0.0
        %1660 = vmatpush.msra.mxu0 0.0
        %1661 = vmatpush.msra.mxu0 0.0
        %1662 = vmatpush.msra.mxu0 0.0
        %1663 = vmatpush.msra.mxu0 0.0
        %1664 = vmatpush.msra.mxu0 0.0
        %1665 = vmatpush.msra.mxu0 0.0
        %1666 = vmatpush.msra.mxu0 0.0
        %1667 = vmatpush.msra.mxu0 0.0
        %1668 = vmatpush.msra.mxu0 0.0
        %1669 = vmatpush.msra.mxu0 0.0
        %1670 = vmatpush.msra.mxu0 0.0
        %1671 = vmatpush.msra.mxu0 0.0
        %1672 = vmatpush.msra.mxu0 0.0
        %1673 = vmatpush.msra.mxu0 0.0
        %1674 = vmatpush.msra.mxu0 %v1637
        %1675 = vmatmul.f32.gmra.mxu0 %v1631
        %v1676 = vpop.f32.mrf.mxu0
        %v1677 = vadd.f32 0.0, %v1676
        %1678 = vdwg.mxu0
        %v1679 = vadd.f32 %v1608, %v1657
        %v1680 = vadd.f32 %v1609, %v1677
        %s1681 = scalar_lea.vmem %s7, 16
        %v1682 = vld [vmem:[%s1681] sm:$0xf]
        %1683 = vst [vmem:[#allocation1] ss:$2 sm:$0xff] %v718
        %v1684 = vld.sshfl [vmem:[#allocation1] sm:$0xff pattern:$0x75316420]
        %v1685 = vld.sshfl [vmem:[#allocation1 + $0x8] sm:$0xff pattern:$0x75316420]
        %v1687 = vsel %vm774, %v1682, 0
        %v1689 = vsel %vm517, %v1684, 0
        %v1691 = vsel %vm517, %v1685, 0
        %1693 = vmatpush.msra.mxu0 0.0
        %1694 = vmatpush.msra.mxu0 0.0
        %1695 = vmatpush.msra.mxu0 0.0
        %1696 = vmatpush.msra.mxu0 0.0
        %1697 = vmatpush.msra.mxu0 0.0
        %1698 = vmatpush.msra.mxu0 0.0
        %1699 = vmatpush.msra.mxu0 0.0
        %1700 = vmatpush.msra.mxu0 0.0
        %1701 = vmatpush.msra.mxu0 0.0
        %1702 = vmatpush.msra.mxu0 0.0
        %1703 = vmatpush.msra.mxu0 0.0
        %1704 = vmatpush.msra.mxu0 0.0
        %1705 = vmatpush.msra.mxu0 0.0
        %1706 = vmatpush.msra.mxu0 0.0
        %1707 = vmatpush.msra.mxu0 0.0
        %1708 = vmatpush.msra.mxu0 %v1689
        %1709 = vmatmul.f32.gmra.mxu0 %v1687
        %v1710 = vpop.f32.mrf.mxu0
        %v1711 = vadd.f32 0.0, %v1710
        %1712 = vdwg.mxu0
        %1713 = vmatpush.msra.mxu0 0.0
        %1714 = vmatpush.msra.mxu0 0.0
        %1715 = vmatpush.msra.mxu0 0.0
        %1716 = vmatpush.msra.mxu0 0.0
        %1717 = vmatpush.msra.mxu0 0.0
        %1718 = vmatpush.msra.mxu0 0.0
        %1719 = vmatpush.msra.mxu0 0.0
        %1720 = vmatpush.msra.mxu0 0.0
        %1721 = vmatpush.msra.mxu0 0.0
        %1722 = vmatpush.msra.mxu0 0.0
        %1723 = vmatpush.msra.mxu0 0.0
        %1724 = vmatpush.msra.mxu0 0.0
        %1725 = vmatpush.msra.mxu0 0.0
        %1726 = vmatpush.msra.mxu0 0.0
        %1727 = vmatpush.msra.mxu0 0.0
        %1728 = vmatpush.msra.mxu0 %v1691
        %1729 = vmatmul.f32.gmra.mxu0 %v1687
        %v1730 = vpop.f32.mrf.mxu0
        %v1731 = vadd.f32 0.0, %v1730
        %1732 = vdwg.mxu0
        %v1733 = vadd.f32 %v1679, %v1711
        %v1734 = vadd.f32 %v1680, %v1731
        %1735 = vst [vmem:[#allocation1] ss:$2 sm:$0xff] %v718
        %v1736 = vld.sshfl [vmem:[#allocation1] sm:$0xff pattern:$0x75316420]
        %v1737 = vld.sshfl [vmem:[#allocation1 + $0x8] sm:$0xff pattern:$0x75316420]
        %1738 = vrot.lane.b32.xlu0 %v1736, 127
        %v1739 = vpop.permute.xlu0 %1738
        %1740 = vrot.lane.b32.xlu0 %v1737, 127
        %v1741 = vpop.permute.xlu0 %1740
        %v1742 = vsel %vm1092, %v1739, %v1741
        %1745 = vst [vmem:[#allocation1] ss:$2 sm:$0xff] %v718
        %v1746 = vld.sshfl [vmem:[#allocation1] sm:$0xff pattern:$0x75316420]
        %1747 = vrot.lane.b32.xlu0 %v1746, 127
        %v1748 = vpop.permute.xlu0 %1747
        %v1750 = vsel %vm1092, %v1741, %v1748
        %v1751 = vmul.f32 %v1742, %v1105
        %v1752 = vmul.f32 %v1750, %v1106
        %s1753 = scalar_lea.vmem %s7, 20
        %v1754 = vld [vmem:[%s1753] sm:$0xf]
        %v1756 = vsel %vm774, %v1754, 0
        %v1759 = vsel %vm517, %v1751, 0
        %v1762 = vsel %vm517, %v1752, 0
        %1764 = vmatpush.msra.mxu0 0.0
        %1765 = vmatpush.msra.mxu0 0.0
        %1766 = vmatpush.msra.mxu0 0.0
        %1767 = vmatpush.msra.mxu0 0.0
        %1768 = vmatpush.msra.mxu0 0.0
        %1769 = vmatpush.msra.mxu0 0.0
        %1770 = vmatpush.msra.mxu0 0.0
        %1771 = vmatpush.msra.mxu0 0.0
        %1772 = vmatpush.msra.mxu0 0.0
        %1773 = vmatpush.msra.mxu0 0.0
        %1774 = vmatpush.msra.mxu0 0.0
        %1775 = vmatpush.msra.mxu0 0.0
        %1776 = vmatpush.msra.mxu0 0.0
        %1777 = vmatpush.msra.mxu0 0.0
        %1778 = vmatpush.msra.mxu0 0.0
        %1779 = vmatpush.msra.mxu0 %v1759
        %1780 = vmatmul.f32.gmra.mxu0 %v1756
        %v1781 = vpop.f32.mrf.mxu0
        %v1782 = vadd.f32 0.0, %v1781
        %1783 = vdwg.mxu0
        %1784 = vmatpush.msra.mxu0 0.0
        %1785 = vmatpush.msra.mxu0 0.0
        %1786 = vmatpush.msra.mxu0 0.0
        %1787 = vmatpush.msra.mxu0 0.0
        %1788 = vmatpush.msra.mxu0 0.0
        %1789 = vmatpush.msra.mxu0 0.0
        %1790 = vmatpush.msra.mxu0 0.0
        %1791 = vmatpush.msra.mxu0 0.0
        %1792 = vmatpush.msra.mxu0 0.0
        %1793 = vmatpush.msra.mxu0 0.0
        %1794 = vmatpush.msra.mxu0 0.0
        %1795 = vmatpush.msra.mxu0 0.0
        %1796 = vmatpush.msra.mxu0 0.0
        %1797 = vmatpush.msra.mxu0 0.0
        %1798 = vmatpush.msra.mxu0 0.0
        %1799 = vmatpush.msra.mxu0 %v1762
        %1800 = vmatmul.f32.gmra.mxu0 %v1756
        %v1801 = vpop.f32.mrf.mxu0
        %v1802 = vadd.f32 0.0, %v1801
        %1803 = vdwg.mxu0
        %v1804 = vadd.f32 %v1733, %v1782
        %v1805 = vadd.f32 %v1734, %v1802
        %1806 = vst [vmem:[#allocation1] ss:$2 sm:$0xff] %v718
        %v1807 = vld.sshfl [vmem:[#allocation1] sm:$0xff pattern:$0x75316420]
        %v1808 = vld.sshfl [vmem:[#allocation1 + $0x8] sm:$0xff pattern:$0x75316420]
        %1809 = vrot.lane.b32.xlu0 %v1807, 113
        %v1810 = vpop.permute.xlu0 %1809
        %1811 = vrot.lane.b32.xlu0 %v1808, 113
        %v1812 = vpop.permute.xlu0 %1811
        %v1813 = vsel %vm1171, %v1810, %v1812
        %1816 = vst [vmem:[#allocation1] ss:$2 sm:$0xff] %v718
        %v1817 = vld.sshfl [vmem:[#allocation1] sm:$0xff pattern:$0x75316420]
        %1818 = vrot.lane.b32.xlu0 %v1817, 113
        %v1819 = vpop.permute.xlu0 %1818
        %v1821 = vsel %vm1171, %v1812, %v1819
        %v1822 = vmul.f32 %v1813, %v1184
        %v1823 = vmul.f32 %v1821, %v1185
        %s1824 = scalar_lea.vmem %s7, 24
        %v1825 = vld [vmem:[%s1824] sm:$0xf]
        %v1827 = vsel %vm774, %v1825, 0
        %v1830 = vsel %vm517, %v1822, 0
        %v1833 = vsel %vm517, %v1823, 0
        %1835 = vmatpush.msra.mxu0 0.0
        %1836 = vmatpush.msra.mxu0 0.0
        %1837 = vmatpush.msra.mxu0 0.0
        %1838 = vmatpush.msra.mxu0 0.0
        %1839 = vmatpush.msra.mxu0 0.0
        %1840 = vmatpush.msra.mxu0 0.0
        %1841 = vmatpush.msra.mxu0 0.0
        %1842 = vmatpush.msra.mxu0 0.0
        %1843 = vmatpush.msra.mxu0 0.0
        %1844 = vmatpush.msra.mxu0 0.0
        %1845 = vmatpush.msra.mxu0 0.0
        %1846 = vmatpush.msra.mxu0 0.0
        %1847 = vmatpush.msra.mxu0 0.0
        %1848 = vmatpush.msra.mxu0 0.0
        %1849 = vmatpush.msra.mxu0 0.0
        %1850 = vmatpush.msra.mxu0 %v1830
        %1851 = vmatmul.f32.gmra.mxu0 %v1827
        %v1852 = vpop.f32.mrf.mxu0
        %v1853 = vadd.f32 0.0, %v1852
        %1854 = vdwg.mxu0
        %1855 = vmatpush.msra.mxu0 0.0
        %1856 = vmatpush.msra.mxu0 0.0
        %1857 = vmatpush.msra.mxu0 0.0
        %1858 = vmatpush.msra.mxu0 0.0
        %1859 = vmatpush.msra.mxu0 0.0
        %1860 = vmatpush.msra.mxu0 0.0
        %1861 = vmatpush.msra.mxu0 0.0
        %1862 = vmatpush.msra.mxu0 0.0
        %1863 = vmatpush.msra.mxu0 0.0
        %1864 = vmatpush.msra.mxu0 0.0
        %1865 = vmatpush.msra.mxu0 0.0
        %1866 = vmatpush.msra.mxu0 0.0
        %1867 = vmatpush.msra.mxu0 0.0
        %1868 = vmatpush.msra.mxu0 0.0
        %1869 = vmatpush.msra.mxu0 0.0
        %1870 = vmatpush.msra.mxu0 %v1833
        %1871 = vmatmul.f32.gmra.mxu0 %v1827
        %v1872 = vpop.f32.mrf.mxu0
        %v1873 = vadd.f32 0.0, %v1872
        %1874 = vdwg.mxu0
        %v1875 = vadd.f32 %v1804, %v1853
        %v1876 = vadd.f32 %v1805, %v1873
        %1877 = vst [vmem:[#allocation1] ss:$2 sm:$0xff] %v718
        %v1878 = vld.sshfl [vmem:[#allocation1] sm:$0xff pattern:$0x75316420]
        %v1879 = vld.sshfl [vmem:[#allocation1 + $0x8] sm:$0xff pattern:$0x75316420]
        %1880 = vrot.lane.b32.xlu0 %v1878, 112
        %v1881 = vpop.permute.xlu0 %1880
        %1882 = vrot.lane.b32.xlu0 %v1879, 112
        %v1883 = vpop.permute.xlu0 %1882
        %v1884 = vsel %vm1250, %v1881, %v1883
        %1887 = vst [vmem:[#allocation1] ss:$2 sm:$0xff] %v718
        %v1888 = vld.sshfl [vmem:[#allocation1] sm:$0xff pattern:$0x75316420]
        %1889 = vrot.lane.b32.xlu0 %v1888, 112
        %v1890 = vpop.permute.xlu0 %1889
        %v1892 = vsel %vm1250, %v1883, %v1890
        %v1893 = vmul.f32 %v1884, %v1263
        %v1894 = vmul.f32 %v1892, %v1264
        %s1895 = scalar_lea.vmem %s7, 28
        %v1896 = vld [vmem:[%s1895] sm:$0xf]
        %v1898 = vsel %vm774, %v1896, 0
        %v1901 = vsel %vm517, %v1893, 0
        %v1904 = vsel %vm517, %v1894, 0
        %1906 = vmatpush.msra.mxu0 0.0
        %1907 = vmatpush.msra.mxu0 0.0
        %1908 = vmatpush.msra.mxu0 0.0
        %1909 = vmatpush.msra.mxu0 0.0
        %1910 = vmatpush.msra.mxu0 0.0
        %1911 = vmatpush.msra.mxu0 0.0
        %1912 = vmatpush.msra.mxu0 0.0
        %1913 = vmatpush.msra.mxu0 0.0
        %1914 = vmatpush.msra.mxu0 0.0
        %1915 = vmatpush.msra.mxu0 0.0
        %1916 = vmatpush.msra.mxu0 0.0
        %1917 = vmatpush.msra.mxu0 0.0
        %1918 = vmatpush.msra.mxu0 0.0
        %1919 = vmatpush.msra.mxu0 0.0
        %1920 = vmatpush.msra.mxu0 0.0
        %1921 = vmatpush.msra.mxu0 %v1901
        %1922 = vmatmul.f32.gmra.mxu0 %v1898
        %v1923 = vpop.f32.mrf.mxu0
        %v1924 = vadd.f32 0.0, %v1923
        %1925 = vdwg.mxu0
        %1926 = vmatpush.msra.mxu0 0.0
        %1927 = vmatpush.msra.mxu0 0.0
        %1928 = vmatpush.msra.mxu0 0.0
        %1929 = vmatpush.msra.mxu0 0.0
        %1930 = vmatpush.msra.mxu0 0.0
        %1931 = vmatpush.msra.mxu0 0.0
        %1932 = vmatpush.msra.mxu0 0.0
        %1933 = vmatpush.msra.mxu0 0.0
        %1934 = vmatpush.msra.mxu0 0.0
        %1935 = vmatpush.msra.mxu0 0.0
        %1936 = vmatpush.msra.mxu0 0.0
        %1937 = vmatpush.msra.mxu0 0.0
        %1938 = vmatpush.msra.mxu0 0.0
        %1939 = vmatpush.msra.mxu0 0.0
        %1940 = vmatpush.msra.mxu0 0.0
        %1941 = vmatpush.msra.mxu0 %v1904
        %1942 = vmatmul.f32.gmra.mxu0 %v1898
        %v1943 = vpop.f32.mrf.mxu0
        %v1944 = vadd.f32 0.0, %v1943
        %1945 = vdwg.mxu0
        %v1946 = vadd.f32 %v1875, %v1924
        %v1947 = vadd.f32 %v1876, %v1944
        %1948 = vst [vmem:[#allocation1] ss:$2 sm:$0xff] %v718
        %v1949 = vld.sshfl [vmem:[#allocation1] sm:$0xff pattern:$0x75316420]
        %v1950 = vld.sshfl [vmem:[#allocation1 + $0x8] sm:$0xff pattern:$0x75316420]
        %1951 = vrot.lane.b32.xlu0 %v1949, 111
        %v1952 = vpop.permute.xlu0 %1951
        %1953 = vrot.lane.b32.xlu0 %v1950, 111
        %v1954 = vpop.permute.xlu0 %1953
        %v1955 = vsel %vm1329, %v1952, %v1954
        %1958 = vst [vmem:[#allocation1] ss:$2 sm:$0xff] %v718
        %v1959 = vld.sshfl [vmem:[#allocation1] sm:$0xff pattern:$0x75316420]
        %1960 = vrot.lane.b32.xlu0 %v1959, 111
        %v1961 = vpop.permute.xlu0 %1960
        %v1963 = vsel %vm1329, %v1954, %v1961
        %v1964 = vmul.f32 %v1955, %v1342
        %v1965 = vmul.f32 %v1963, %v1343
        %s1966 = scalar_lea.vmem %s7, 32
        %v1967 = vld [vmem:[%s1966] sm:$0xf]
        %v1969 = vsel %vm774, %v1967, 0
        %v1972 = vsel %vm517, %v1964, 0
        %v1975 = vsel %vm517, %v1965, 0
        %1977 = vmatpush.msra.mxu0 0.0
        %1978 = vmatpush.msra.mxu0 0.0
        %1979 = vmatpush.msra.mxu0 0.0
        %1980 = vmatpush.msra.mxu0 0.0
        %1981 = vmatpush.msra.mxu0 0.0
        %1982 = vmatpush.msra.mxu0 0.0
        %1983 = vmatpush.msra.mxu0 0.0
        %1984 = vmatpush.msra.mxu0 0.0
        %1985 = vmatpush.msra.mxu0 0.0
        %1986 = vmatpush.msra.mxu0 0.0
        %1987 = vmatpush.msra.mxu0 0.0
        %1988 = vmatpush.msra.mxu0 0.0
        %1989 = vmatpush.msra.mxu0 0.0
        %1990 = vmatpush.msra.mxu0 0.0
        %1991 = vmatpush.msra.mxu0 0.0
        %1992 = vmatpush.msra.mxu0 %v1972
        %1993 = vmatmul.f32.gmra.mxu0 %v1969
        %v1994 = vpop.f32.mrf.mxu0
        %v1995 = vadd.f32 0.0, %v1994
        %1996 = vdwg.mxu0
        %1997 = vmatpush.msra.mxu0 0.0
        %1998 = vmatpush.msra.mxu0 0.0
        %1999 = vmatpush.msra.mxu0 0.0
        %2000 = vmatpush.msra.mxu0 0.0
        %2001 = vmatpush.msra.mxu0 0.0
        %2002 = vmatpush.msra.mxu0 0.0
        %2003 = vmatpush.msra.mxu0 0.0
        %2004 = vmatpush.msra.mxu0 0.0
        %2005 = vmatpush.msra.mxu0 0.0
        %2006 = vmatpush.msra.mxu0 0.0
        %2007 = vmatpush.msra.mxu0 0.0
        %2008 = vmatpush.msra.mxu0 0.0
        %2009 = vmatpush.msra.mxu0 0.0
        %2010 = vmatpush.msra.mxu0 0.0
        %2011 = vmatpush.msra.mxu0 0.0
        %2012 = vmatpush.msra.mxu0 %v1975
        %2013 = vmatmul.f32.gmra.mxu0 %v1969
        %v2014 = vpop.f32.mrf.mxu0
        %v2015 = vadd.f32 0.0, %v2014
        %2016 = vdwg.mxu0
        %v2017 = vadd.f32 %v1946, %v1995
        %v2018 = vadd.f32 %v1947, %v2015
        %v2019 = vadd.f32 %v1399, %v2017
        %v2020 = vadd.f32 %v1400, %v2018
        %v2021 = vld [vmem:[%s8] sm:$0xf]
        %2023 = vset.pattern.permute.xlu0 0
        %2024 = vperm.xlu0 %2023, %v2021
        %v2025 = vpop.permute.xlu0 %2024
        %v2027 = vadd.f32 %v2019, %v2025
        %v2028 = vadd.f32 %v2020, %v2025
        %v2029 = vmax.f32 %v2027, 0.0
        %v2030 = vmax.f32 %v2028, 0.0
        %2032 = vrot.lane.b32.xlu0 %v2030, 17
        %v2033 = vpop.permute.xlu0 %2032
        %2036 = vrot.lane.b32.xlu0 %v2029, 17
        %v2037 = vpop.permute.xlu0 %2036
        %v2038 = vsel %vm732, %v2037, %v2033
        %v2041 = vsel %vm732, %v2033, %v2037
        %v2042 = vmul.f32 %v2041, %v739
        %v2043 = vmul.f32 %v2038, %v740
        %v2044 = vld [vmem:[%s9] sm:$0xf]
        %2045 = vrot.lane.b32.xlu0 %v2030, 16
        %v2046 = vpop.permute.xlu0 %2045
        %2048 = vrot.lane.b32.xlu0 %v2029, 16
        %v2049 = vpop.permute.xlu0 %2048
        %v2050 = vsel %vm758, %v2049, %v2046
        %v2053 = vsel %vm758, %v2046, %v2049
        %v2054 = vmul.f32 %v2053, %v766
        %v2055 = vmul.f32 %v2050, %v767
        %s2056 = scalar_lea.vmem %s9, 4
        %v2057 = vld [vmem:[%s2056] sm:$0xf]
        %v2059 = vsel %vm774, %v2057, 0
        %v2062 = vsel %vm517, %v2054, 0
        %v2065 = vsel %vm517, %v2055, 0
        %2067 = vmatpush.msra.mxu0 0.0
        %2068 = vmatpush.msra.mxu0 0.0
        %2069 = vmatpush.msra.mxu0 0.0
        %2070 = vmatpush.msra.mxu0 0.0
        %2071 = vmatpush.msra.mxu0 0.0
        %2072 = vmatpush.msra.mxu0 0.0
        %2073 = vmatpush.msra.mxu0 0.0
        %2074 = vmatpush.msra.mxu0 0.0
        %2075 = vmatpush.msra.mxu0 0.0
        %2076 = vmatpush.msra.mxu0 0.0
        %2077 = vmatpush.msra.mxu0 0.0
        %2078 = vmatpush.msra.mxu0 0.0
        %2079 = vmatpush.msra.mxu0 0.0
        %2080 = vmatpush.msra.mxu0 0.0
        %2081 = vmatpush.msra.mxu0 0.0
        %2082 = vmatpush.msra.mxu0 %v2062
        %2083 = vmatmul.f32.gmra.mxu0 %v2059
        %v2084 = vpop.f32.mrf.mxu0
        %v2085 = vadd.f32 0.0, %v2084
        %2086 = vdwg.mxu0
        %2087 = vmatpush.msra.mxu0 0.0
        %2088 = vmatpush.msra.mxu0 0.0
        %2089 = vmatpush.msra.mxu0 0.0
        %2090 = vmatpush.msra.mxu0 0.0
        %2091 = vmatpush.msra.mxu0 0.0
        %2092 = vmatpush.msra.mxu0 0.0
        %2093 = vmatpush.msra.mxu0 0.0
        %2094 = vmatpush.msra.mxu0 0.0
        %2095 = vmatpush.msra.mxu0 0.0
        %2096 = vmatpush.msra.mxu0 0.0
        %2097 = vmatpush.msra.mxu0 0.0
        %2098 = vmatpush.msra.mxu0 0.0
        %2099 = vmatpush.msra.mxu0 0.0
        %2100 = vmatpush.msra.mxu0 0.0
        %2101 = vmatpush.msra.mxu0 0.0
        %2102 = vmatpush.msra.mxu0 %v2065
        %2103 = vmatmul.f32.gmra.mxu0 %v2059
        %v2104 = vpop.f32.mrf.mxu0
        %v2105 = vadd.f32 0.0, %v2104
        %2106 = vdwg.mxu0
        %v2108 = vsel %vm774, %v2044, 0
        %v2111 = vsel %vm517, %v2042, 0
        %v2114 = vsel %vm517, %v2043, 0
        %2116 = vmatpush.msra.mxu0 0.0
        %2117 = vmatpush.msra.mxu0 0.0
        %2118 = vmatpush.msra.mxu0 0.0
        %2119 = vmatpush.msra.mxu0 0.0
        %2120 = vmatpush.msra.mxu0 0.0
        %2121 = vmatpush.msra.mxu0 0.0
        %2122 = vmatpush.msra.mxu0 0.0
        %2123 = vmatpush.msra.mxu0 0.0
        %2124 = vmatpush.msra.mxu0 0.0
        %2125 = vmatpush.msra.mxu0 0.0
        %2126 = vmatpush.msra.mxu0 0.0
        %2127 = vmatpush.msra.mxu0 0.0
        %2128 = vmatpush.msra.mxu0 0.0
        %2129 = vmatpush.msra.mxu0 0.0
        %2130 = vmatpush.msra.mxu0 0.0
        %2131 = vmatpush.msra.mxu0 %v2111
        %2132 = vmatmul.f32.gmra.mxu0 %v2108
        %v2133 = vpop.f32.mrf.mxu0
        %v2134 = vadd.f32 %v2085, %v2133
        %2135 = vdwg.mxu0
        %2136 = vmatpush.msra.mxu0 0.0
        %2137 = vmatpush.msra.mxu0 0.0
        %2138 = vmatpush.msra.mxu0 0.0
        %2139 = vmatpush.msra.mxu0 0.0
        %2140 = vmatpush.msra.mxu0 0.0
        %2141 = vmatpush.msra.mxu0 0.0
        %2142 = vmatpush.msra.mxu0 0.0
        %2143 = vmatpush.msra.mxu0 0.0
        %2144 = vmatpush.msra.mxu0 0.0
        %2145 = vmatpush.msra.mxu0 0.0
        %2146 = vmatpush.msra.mxu0 0.0
        %2147 = vmatpush.msra.mxu0 0.0
        %2148 = vmatpush.msra.mxu0 0.0
        %2149 = vmatpush.msra.mxu0 0.0
        %2150 = vmatpush.msra.mxu0 0.0
        %2151 = vmatpush.msra.mxu0 %v2114
        %2152 = vmatmul.f32.gmra.mxu0 %v2108
        %v2153 = vpop.f32.mrf.mxu0
        %v2154 = vadd.f32 %v2105, %v2153
        %2155 = vdwg.mxu0
        %2156 = vrot.lane.b32.xlu0 %v2030, 15
        %v2157 = vpop.permute.xlu0 %2156
        %2159 = vrot.lane.b32.xlu0 %v2029, 15
        %v2160 = vpop.permute.xlu0 %2159
        %v2161 = vsel %vm885, %v2160, %v2157
        %v2164 = vsel %vm885, %v2157, %v2160
        %v2165 = vmul.f32 %v2164, %v893
        %v2166 = vmul.f32 %v2161, %v894
        %s2167 = scalar_lea.vmem %s9, 8
        %v2168 = vld [vmem:[%s2167] sm:$0xf]
        %v2170 = vsel %vm774, %v2168, 0
        %v2173 = vsel %vm517, %v2165, 0
        %v2176 = vsel %vm517, %v2166, 0
        %2178 = vmatpush.msra.mxu0 0.0
        %2179 = vmatpush.msra.mxu0 0.0
        %2180 = vmatpush.msra.mxu0 0.0
        %2181 = vmatpush.msra.mxu0 0.0
        %2182 = vmatpush.msra.mxu0 0.0
        %2183 = vmatpush.msra.mxu0 0.0
        %2184 = vmatpush.msra.mxu0 0.0
        %2185 = vmatpush.msra.mxu0 0.0
        %2186 = vmatpush.msra.mxu0 0.0
        %2187 = vmatpush.msra.mxu0 0.0
        %2188 = vmatpush.msra.mxu0 0.0
        %2189 = vmatpush.msra.mxu0 0.0
        %2190 = vmatpush.msra.mxu0 0.0
        %2191 = vmatpush.msra.mxu0 0.0
        %2192 = vmatpush.msra.mxu0 0.0
        %2193 = vmatpush.msra.mxu0 %v2173
        %2194 = vmatmul.f32.gmra.mxu0 %v2170
        %v2195 = vpop.f32.mrf.mxu0
        %v2196 = vadd.f32 0.0, %v2195
        %2197 = vdwg.mxu0
        %2198 = vmatpush.msra.mxu0 0.0
        %2199 = vmatpush.msra.mxu0 0.0
        %2200 = vmatpush.msra.mxu0 0.0
        %2201 = vmatpush.msra.mxu0 0.0
        %2202 = vmatpush.msra.mxu0 0.0
        %2203 = vmatpush.msra.mxu0 0.0
        %2204 = vmatpush.msra.mxu0 0.0
        %2205 = vmatpush.msra.mxu0 0.0
        %2206 = vmatpush.msra.mxu0 0.0
        %2207 = vmatpush.msra.mxu0 0.0
        %2208 = vmatpush.msra.mxu0 0.0
        %2209 = vmatpush.msra.mxu0 0.0
        %2210 = vmatpush.msra.mxu0 0.0
        %2211 = vmatpush.msra.mxu0 0.0
        %2212 = vmatpush.msra.mxu0 0.0
        %2213 = vmatpush.msra.mxu0 %v2176
        %2214 = vmatmul.f32.gmra.mxu0 %v2170
        %v2215 = vpop.f32.mrf.mxu0
        %v2216 = vadd.f32 0.0, %v2215
        %2217 = vdwg.mxu0
        %v2218 = vadd.f32 %v2134, %v2196
        %v2219 = vadd.f32 %v2154, %v2216
        %2220 = vrot.lane.b32.xlu0 %v2030, 1
        %v2221 = vpop.permute.xlu0 %2220
        %2223 = vrot.lane.b32.xlu0 %v2029, 1
        %v2224 = vpop.permute.xlu0 %2223
        %v2225 = vsel %vm964, %v2224, %v2221
        %v2228 = vsel %vm964, %v2221, %v2224
        %v2229 = vmul.f32 %v2228, %v972
        %v2230 = vmul.f32 %v2225, %v973
        %s2231 = scalar_lea.vmem %s9, 12
        %v2232 = vld [vmem:[%s2231] sm:$0xf]
        %v2234 = vsel %vm774, %v2232, 0
        %v2237 = vsel %vm517, %v2229, 0
        %v2240 = vsel %vm517, %v2230, 0
        %2242 = vmatpush.msra.mxu0 0.0
        %2243 = vmatpush.msra.mxu0 0.0
        %2244 = vmatpush.msra.mxu0 0.0
        %2245 = vmatpush.msra.mxu0 0.0
        %2246 = vmatpush.msra.mxu0 0.0
        %2247 = vmatpush.msra.mxu0 0.0
        %2248 = vmatpush.msra.mxu0 0.0
        %2249 = vmatpush.msra.mxu0 0.0
        %2250 = vmatpush.msra.mxu0 0.0
        %2251 = vmatpush.msra.mxu0 0.0
        %2252 = vmatpush.msra.mxu0 0.0
        %2253 = vmatpush.msra.mxu0 0.0
        %2254 = vmatpush.msra.mxu0 0.0
        %2255 = vmatpush.msra.mxu0 0.0
        %2256 = vmatpush.msra.mxu0 0.0
        %2257 = vmatpush.msra.mxu0 %v2237
        %2258 = vmatmul.f32.gmra.mxu0 %v2234
        %v2259 = vpop.f32.mrf.mxu0
        %v2260 = vadd.f32 0.0, %v2259
        %2261 = vdwg.mxu0
        %2262 = vmatpush.msra.mxu0 0.0
        %2263 = vmatpush.msra.mxu0 0.0
        %2264 = vmatpush.msra.mxu0 0.0
        %2265 = vmatpush.msra.mxu0 0.0
        %2266 = vmatpush.msra.mxu0 0.0
        %2267 = vmatpush.msra.mxu0 0.0
        %2268 = vmatpush.msra.mxu0 0.0
        %2269 = vmatpush.msra.mxu0 0.0
        %2270 = vmatpush.msra.mxu0 0.0
        %2271 = vmatpush.msra.mxu0 0.0
        %2272 = vmatpush.msra.mxu0 0.0
        %2273 = vmatpush.msra.mxu0 0.0
        %2274 = vmatpush.msra.mxu0 0.0
        %2275 = vmatpush.msra.mxu0 0.0
        %2276 = vmatpush.msra.mxu0 0.0
        %2277 = vmatpush.msra.mxu0 %v2240
        %2278 = vmatmul.f32.gmra.mxu0 %v2234
        %v2279 = vpop.f32.mrf.mxu0
        %v2280 = vadd.f32 0.0, %v2279
        %2281 = vdwg.mxu0
        %v2282 = vadd.f32 %v2218, %v2260
        %v2283 = vadd.f32 %v2219, %v2280
        %s2284 = scalar_lea.vmem %s9, 16
        %v2285 = vld [vmem:[%s2284] sm:$0xf]
        %v2287 = vsel %vm774, %v2285, 0
        %v2289 = vsel %vm517, %v2029, 0
        %v2291 = vsel %vm517, %v2030, 0
        %2293 = vmatpush.msra.mxu0 0.0
        %2294 = vmatpush.msra.mxu0 0.0
        %2295 = vmatpush.msra.mxu0 0.0
        %2296 = vmatpush.msra.mxu0 0.0
        %2297 = vmatpush.msra.mxu0 0.0
        %2298 = vmatpush.msra.mxu0 0.0
        %2299 = vmatpush.msra.mxu0 0.0
        %2300 = vmatpush.msra.mxu0 0.0
        %2301 = vmatpush.msra.mxu0 0.0
        %2302 = vmatpush.msra.mxu0 0.0
        %2303 = vmatpush.msra.mxu0 0.0
        %2304 = vmatpush.msra.mxu0 0.0
        %2305 = vmatpush.msra.mxu0 0.0
        %2306 = vmatpush.msra.mxu0 0.0
        %2307 = vmatpush.msra.mxu0 0.0
        %2308 = vmatpush.msra.mxu0 %v2289
        %2309 = vmatmul.f32.gmra.mxu0 %v2287
        %v2310 = vpop.f32.mrf.mxu0
        %v2311 = vadd.f32 0.0, %v2310
        %2312 = vdwg.mxu0
        %2313 = vmatpush.msra.mxu0 0.0
        %2314 = vmatpush.msra.mxu0 0.0
        %2315 = vmatpush.msra.mxu0 0.0
        %2316 = vmatpush.msra.mxu0 0.0
        %2317 = vmatpush.msra.mxu0 0.0
        %2318 = vmatpush.msra.mxu0 0.0
        %2319 = vmatpush.msra.mxu0 0.0
        %2320 = vmatpush.msra.mxu0 0.0
        %2321 = vmatpush.msra.mxu0 0.0
        %2322 = vmatpush.msra.mxu0 0.0
        %2323 = vmatpush.msra.mxu0 0.0
        %2324 = vmatpush.msra.mxu0 0.0
        %2325 = vmatpush.msra.mxu0 0.0
        %2326 = vmatpush.msra.mxu0 0.0
        %2327 = vmatpush.msra.mxu0 0.0
        %2328 = vmatpush.msra.mxu0 %v2291
        %2329 = vmatmul.f32.gmra.mxu0 %v2287
        %v2330 = vpop.f32.mrf.mxu0
        %v2331 = vadd.f32 0.0, %v2330
        %2332 = vdwg.mxu0
        %v2333 = vadd.f32 %v2282, %v2311
        %v2334 = vadd.f32 %v2283, %v2331
        %2335 = vrot.lane.b32.xlu0 %v2029, 127
        %v2336 = vpop.permute.xlu0 %2335
        %2337 = vrot.lane.b32.xlu0 %v2030, 127
        %v2338 = vpop.permute.xlu0 %2337
        %v2339 = vsel %vm1092, %v2336, %v2338
        %v2343 = vsel %vm1092, %v2338, %v2336
        %v2344 = vmul.f32 %v2339, %v1105
        %v2345 = vmul.f32 %v2343, %v1106
        %s2346 = scalar_lea.vmem %s9, 20
        %v2347 = vld [vmem:[%s2346] sm:$0xf]
        %v2349 = vsel %vm774, %v2347, 0
        %v2352 = vsel %vm517, %v2344, 0
        %v2355 = vsel %vm517, %v2345, 0
        %2357 = vmatpush.msra.mxu0 0.0
        %2358 = vmatpush.msra.mxu0 0.0
        %2359 = vmatpush.msra.mxu0 0.0
        %2360 = vmatpush.msra.mxu0 0.0
        %2361 = vmatpush.msra.mxu0 0.0
        %2362 = vmatpush.msra.mxu0 0.0
        %2363 = vmatpush.msra.mxu0 0.0
        %2364 = vmatpush.msra.mxu0 0.0
        %2365 = vmatpush.msra.mxu0 0.0
        %2366 = vmatpush.msra.mxu0 0.0
        %2367 = vmatpush.msra.mxu0 0.0
        %2368 = vmatpush.msra.mxu0 0.0
        %2369 = vmatpush.msra.mxu0 0.0
        %2370 = vmatpush.msra.mxu0 0.0
        %2371 = vmatpush.msra.mxu0 0.0
        %2372 = vmatpush.msra.mxu0 %v2352
        %2373 = vmatmul.f32.gmra.mxu0 %v2349
        %v2374 = vpop.f32.mrf.mxu0
        %v2375 = vadd.f32 0.0, %v2374
        %2376 = vdwg.mxu0
        %2377 = vmatpush.msra.mxu0 0.0
        %2378 = vmatpush.msra.mxu0 0.0
        %2379 = vmatpush.msra.mxu0 0.0
        %2380 = vmatpush.msra.mxu0 0.0
        %2381 = vmatpush.msra.mxu0 0.0
        %2382 = vmatpush.msra.mxu0 0.0
        %2383 = vmatpush.msra.mxu0 0.0
        %2384 = vmatpush.msra.mxu0 0.0
        %2385 = vmatpush.msra.mxu0 0.0
        %2386 = vmatpush.msra.mxu0 0.0
        %2387 = vmatpush.msra.mxu0 0.0
        %2388 = vmatpush.msra.mxu0 0.0
        %2389 = vmatpush.msra.mxu0 0.0
        %2390 = vmatpush.msra.mxu0 0.0
        %2391 = vmatpush.msra.mxu0 0.0
        %2392 = vmatpush.msra.mxu0 %v2355
        %2393 = vmatmul.f32.gmra.mxu0 %v2349
        %v2394 = vpop.f32.mrf.mxu0
        %v2395 = vadd.f32 0.0, %v2394
        %2396 = vdwg.mxu0
        %v2397 = vadd.f32 %v2333, %v2375
        %v2398 = vadd.f32 %v2334, %v2395
        %2399 = vrot.lane.b32.xlu0 %v2029, 113
        %v2400 = vpop.permute.xlu0 %2399
        %2401 = vrot.lane.b32.xlu0 %v2030, 113
        %v2402 = vpop.permute.xlu0 %2401
        %v2403 = vsel %vm1171, %v2400, %v2402
        %v2407 = vsel %vm1171, %v2402, %v2400
        %v2408 = vmul.f32 %v2403, %v1184
        %v2409 = vmul.f32 %v2407, %v1185
        %s2410 = scalar_lea.vmem %s9, 24
        %v2411 = vld [vmem:[%s2410] sm:$0xf]
        %v2413 = vsel %vm774, %v2411, 0
        %v2416 = vsel %vm517, %v2408, 0
        %v2419 = vsel %vm517, %v2409, 0
        %2421 = vmatpush.msra.mxu0 0.0
        %2422 = vmatpush.msra.mxu0 0.0
        %2423 = vmatpush.msra.mxu0 0.0
        %2424 = vmatpush.msra.mxu0 0.0
        %2425 = vmatpush.msra.mxu0 0.0
        %2426 = vmatpush.msra.mxu0 0.0
        %2427 = vmatpush.msra.mxu0 0.0
        %2428 = vmatpush.msra.mxu0 0.0
        %2429 = vmatpush.msra.mxu0 0.0
        %2430 = vmatpush.msra.mxu0 0.0
        %2431 = vmatpush.msra.mxu0 0.0
        %2432 = vmatpush.msra.mxu0 0.0
        %2433 = vmatpush.msra.mxu0 0.0
        %2434 = vmatpush.msra.mxu0 0.0
        %2435 = vmatpush.msra.mxu0 0.0
        %2436 = vmatpush.msra.mxu0 %v2416
        %2437 = vmatmul.f32.gmra.mxu0 %v2413
        %v2438 = vpop.f32.mrf.mxu0
        %v2439 = vadd.f32 0.0, %v2438
        %2440 = vdwg.mxu0
        %2441 = vmatpush.msra.mxu0 0.0
        %2442 = vmatpush.msra.mxu0 0.0
        %2443 = vmatpush.msra.mxu0 0.0
        %2444 = vmatpush.msra.mxu0 0.0
        %2445 = vmatpush.msra.mxu0 0.0
        %2446 = vmatpush.msra.mxu0 0.0
        %2447 = vmatpush.msra.mxu0 0.0
        %2448 = vmatpush.msra.mxu0 0.0
        %2449 = vmatpush.msra.mxu0 0.0
        %2450 = vmatpush.msra.mxu0 0.0
        %2451 = vmatpush.msra.mxu0 0.0
        %2452 = vmatpush.msra.mxu0 0.0
        %2453 = vmatpush.msra.mxu0 0.0
        %2454 = vmatpush.msra.mxu0 0.0
        %2455 = vmatpush.msra.mxu0 0.0
        %2456 = vmatpush.msra.mxu0 %v2419
        %2457 = vmatmul.f32.gmra.mxu0 %v2413
        %v2458 = vpop.f32.mrf.mxu0
        %v2459 = vadd.f32 0.0, %v2458
        %2460 = vdwg.mxu0
        %v2461 = vadd.f32 %v2397, %v2439
        %v2462 = vadd.f32 %v2398, %v2459
        %2463 = vrot.lane.b32.xlu0 %v2029, 112
        %v2464 = vpop.permute.xlu0 %2463
        %2465 = vrot.lane.b32.xlu0 %v2030, 112
        %v2466 = vpop.permute.xlu0 %2465
        %v2467 = vsel %vm1250, %v2464, %v2466
        %v2471 = vsel %vm1250, %v2466, %v2464
        %v2472 = vmul.f32 %v2467, %v1263
        %v2473 = vmul.f32 %v2471, %v1264
        %s2474 = scalar_lea.vmem %s9, 28
        %v2475 = vld [vmem:[%s2474] sm:$0xf]
        %v2477 = vsel %vm774, %v2475, 0
        %v2480 = vsel %vm517, %v2472, 0
        %v2483 = vsel %vm517, %v2473, 0
        %2485 = vmatpush.msra.mxu0 0.0
        %2486 = vmatpush.msra.mxu0 0.0
        %2487 = vmatpush.msra.mxu0 0.0
        %2488 = vmatpush.msra.mxu0 0.0
        %2489 = vmatpush.msra.mxu0 0.0
        %2490 = vmatpush.msra.mxu0 0.0
        %2491 = vmatpush.msra.mxu0 0.0
        %2492 = vmatpush.msra.mxu0 0.0
        %2493 = vmatpush.msra.mxu0 0.0
        %2494 = vmatpush.msra.mxu0 0.0
        %2495 = vmatpush.msra.mxu0 0.0
        %2496 = vmatpush.msra.mxu0 0.0
        %2497 = vmatpush.msra.mxu0 0.0
        %2498 = vmatpush.msra.mxu0 0.0
        %2499 = vmatpush.msra.mxu0 0.0
        %2500 = vmatpush.msra.mxu0 %v2480
        %2501 = vmatmul.f32.gmra.mxu0 %v2477
        %v2502 = vpop.f32.mrf.mxu0
        %v2503 = vadd.f32 0.0, %v2502
        %2504 = vdwg.mxu0
        %2505 = vmatpush.msra.mxu0 0.0
        %2506 = vmatpush.msra.mxu0 0.0
        %2507 = vmatpush.msra.mxu0 0.0
        %2508 = vmatpush.msra.mxu0 0.0
        %2509 = vmatpush.msra.mxu0 0.0
        %2510 = vmatpush.msra.mxu0 0.0
        %2511 = vmatpush.msra.mxu0 0.0
        %2512 = vmatpush.msra.mxu0 0.0
        %2513 = vmatpush.msra.mxu0 0.0
        %2514 = vmatpush.msra.mxu0 0.0
        %2515 = vmatpush.msra.mxu0 0.0
        %2516 = vmatpush.msra.mxu0 0.0
        %2517 = vmatpush.msra.mxu0 0.0
        %2518 = vmatpush.msra.mxu0 0.0
        %2519 = vmatpush.msra.mxu0 0.0
        %2520 = vmatpush.msra.mxu0 %v2483
        %2521 = vmatmul.f32.gmra.mxu0 %v2477
        %v2522 = vpop.f32.mrf.mxu0
        %v2523 = vadd.f32 0.0, %v2522
        %2524 = vdwg.mxu0
        %v2525 = vadd.f32 %v2461, %v2503
        %v2526 = vadd.f32 %v2462, %v2523
        %2527 = vrot.lane.b32.xlu0 %v2029, 111
        %v2528 = vpop.permute.xlu0 %2527
        %2529 = vrot.lane.b32.xlu0 %v2030, 111
        %v2530 = vpop.permute.xlu0 %2529
        %v2531 = vsel %vm1329, %v2528, %v2530
        %v2535 = vsel %vm1329, %v2530, %v2528
        %v2536 = vmul.f32 %v2531, %v1342
        %v2537 = vmul.f32 %v2535, %v1343
        %s2538 = scalar_lea.vmem %s9, 32
        %v2539 = vld [vmem:[%s2538] sm:$0xf]
        %v2541 = vsel %vm774, %v2539, 0
        %v2544 = vsel %vm517, %v2536, 0
        %v2547 = vsel %vm517, %v2537, 0
        %2549 = vmatpush.msra.mxu0 0.0
        %2550 = vmatpush.msra.mxu0 0.0
        %2551 = vmatpush.msra.mxu0 0.0
        %2552 = vmatpush.msra.mxu0 0.0
        %2553 = vmatpush.msra.mxu0 0.0
        %2554 = vmatpush.msra.mxu0 0.0
        %2555 = vmatpush.msra.mxu0 0.0
        %2556 = vmatpush.msra.mxu0 0.0
        %2557 = vmatpush.msra.mxu0 0.0
        %2558 = vmatpush.msra.mxu0 0.0
        %2559 = vmatpush.msra.mxu0 0.0
        %2560 = vmatpush.msra.mxu0 0.0
        %2561 = vmatpush.msra.mxu0 0.0
        %2562 = vmatpush.msra.mxu0 0.0
        %2563 = vmatpush.msra.mxu0 0.0
        %2564 = vmatpush.msra.mxu0 %v2544
        %2565 = vmatmul.f32.gmra.mxu0 %v2541
        %v2566 = vpop.f32.mrf.mxu0
        %v2567 = vadd.f32 0.0, %v2566
        %2568 = vdwg.mxu0
        %2569 = vmatpush.msra.mxu0 0.0
        %2570 = vmatpush.msra.mxu0 0.0
        %2571 = vmatpush.msra.mxu0 0.0
        %2572 = vmatpush.msra.mxu0 0.0
        %2573 = vmatpush.msra.mxu0 0.0
        %2574 = vmatpush.msra.mxu0 0.0
        %2575 = vmatpush.msra.mxu0 0.0
        %2576 = vmatpush.msra.mxu0 0.0
        %2577 = vmatpush.msra.mxu0 0.0
        %2578 = vmatpush.msra.mxu0 0.0
        %2579 = vmatpush.msra.mxu0 0.0
        %2580 = vmatpush.msra.mxu0 0.0
        %2581 = vmatpush.msra.mxu0 0.0
        %2582 = vmatpush.msra.mxu0 0.0
        %2583 = vmatpush.msra.mxu0 0.0
        %2584 = vmatpush.msra.mxu0 %v2547
        %2585 = vmatmul.f32.gmra.mxu0 %v2541
        %v2586 = vpop.f32.mrf.mxu0
        %v2587 = vadd.f32 0.0, %v2586
        %2588 = vdwg.mxu0
        %v2589 = vadd.f32 %v2525, %v2567
        %v2590 = vadd.f32 %v2526, %v2587
        %v2591 = vld [vmem:[%s10] sm:$0xf]
        %2593 = vset.pattern.permute.xlu0 0
        %2594 = vperm.xlu0 %2593, %v2591
        %v2595 = vpop.permute.xlu0 %2594
        %v2597 = vadd.f32 %v2589, %v2595
        %v2598 = vadd.f32 %v2590, %v2595
        %v2599 = vmax.f32 %v2597, 0.0
        %v2600 = vmax.f32 %v2598, 0.0
        %v2603 = vrot.slane %v2600, 4
        %v2604 = vsel %vm517, %v2599, %v2603
        %2606 = vst [vmem:[%s409] sm:$0xff] %v2604
        %s2607 = sand.u32 %s275, 1
        %s2608 = scalar_lea.sflag [#allocation4], %s2607
        %s2609 = sand.u32 %s275, 1
        %s2610 = smul.addr %s2609, 8
        %s2611 = scalar_lea.vmem [#allocation5], %s2610
        // Predicated region
        $region69: #{tpu_custom_call.1} parent=63 // pred_check
          %p2612 = pneg %p285
        $region70: #{tpu_custom_call.1} parent=63 // pred_check_branch
          %2614 = sbr.rel (%p2612) target = $region72
        $region71: #{tpu_custom_call.1} parent=63 // pred_region
          %2616 = vsyncadd %s2608, 0
          %s2617 = smul.addr %s26, 2
          %s2618 = smul.addr %s2617, 4
          %s2619 = scalar_lea.hbm %s11, %s2618
          %s2621 = sshll.u32 %s2611, 4
          %s2622 = int_to_ptr.vmem [resolvable:$true] %s2621
          %s2623 = sshll.u32 %s2619, 4
          %s2624 = int_to_ptr.hbm [resolvable:$true] %s2623
          %2626 = dma.vmem_to_hbm [thread:$0]  %s2622, 128, %s2624, %s2608
        $region72: #{tpu_custom_call.1} parent=63 // pred_fallthru
          _
      $region64: #{tpu_custom_call.1} parent=5 // pred_fallthru
        _
      %p2627 = scmp.le.s32.totalorder 2, %s21
      // Predicated region
      $region73: #{tpu_custom_call.1} parent=5 // pred_check
        %p2628 = pneg %p2627
      $region74: #{tpu_custom_call.1} parent=5 // pred_check_branch
        %2630 = sbr.rel (%p2628) target = $region76
      $region75: #{tpu_custom_call.1} parent=5 // pred_region
        %s2631 = ssub.s32 %s21, 2
        // Predicated region
        $region77: #{tpu_custom_call.1} parent=75 // pred_check
          %p2632 = pneg %p291
        $region78: #{tpu_custom_call.1} parent=75 // pred_check_branch
          %2634 = sbr.rel (%p2632) target = $region80
        $region79: #{tpu_custom_call.1} parent=75 // pred_region
          %s2635 = sand.u32 %s276, 1
          %s2636 = scalar_lea.sflag [#allocation4], %s2635
          %s2637 = sand.u32 %s276, 1
          %s2638 = smul.addr %s2637, 8
          %s2639 = scalar_lea.vmem [#allocation5], %s2638
          %2641 = dma.done %s2636, 128
        $region80: #{tpu_custom_call.1} parent=75 // pred_fallthru
          _
      $region76: #{tpu_custom_call.1} parent=5 // pred_fallthru
        _
    $region6: #{tpu_custom_call.1} parent=1 // loop_footer
      %s25 = sadd.s32 1, %s21
    $region7: #{tpu_custom_call.1} parent=1 // loop_footer_branch
      %20 = sbr.rel target = $region3
    $region8: #{tpu_custom_call.1} parent=1 // loop_exit
      _
    %2642 = vsyncpa [#allocation3], 1
    %s2643 = scalar_lea.sflag [#allocation3], 1
    %2644 = vsyncpa %s2643, 1
    %2645 = vsyncpa [#allocation4], 1
    %s2646 = scalar_lea.sflag [#allocation4], 1
    %2647 = vsyncpa %s2646, 1

</llo_original>
